<compile_context>
chip_gen: v7x
topology: tpu7x:2x2x1
jax: 0.10.0
libtpu: 0.0.40
codegen_flags: <defaults>
</compile_context>

<pallas_src>
import math

import jax
import jax.numpy as jnp
from jax import lax
from jax.experimental import pallas as pl
from jax.experimental.pallas import tpu as pltpu


# --------------------------- linear (matmul + bias) -------------------------

def _linear_kernel(x_ref, w_ref, b_ref, o_ref, acc_ref):
    """One (tm, tn) output tile; K is the innermost ('arbitrary') grid axis."""
    k = pl.program_id(2)

    @pl.when(k == 0)
    def _():
        acc_ref[...] = jnp.zeros_like(acc_ref)

    acc_ref[...] += jnp.dot(x_ref[...], w_ref[...],
                            preferred_element_type=jnp.float32)

    @pl.when(k == pl.num_programs(2) - 1)
    def _():
        o_ref[...] = (acc_ref[...] + b_ref[...]).astype(o_ref.dtype)


def _pick_tile(dim, target):
    # Use the target tile when it divides the dim, otherwise fall back to the
    # full dim (block == full array dim always satisfies the (8,128) rule).
    return target if dim % target == 0 else dim


def linear_pallas(x2d, w, b, out_dtype, tm=256, tn=256, tk=512):
    """(M,K) @ (K,N) + (N,), bf16 inputs, fp32 accumulation, tiled+pipelined."""
    M, K = x2d.shape
    K2, N = w.shape
    assert K == K2
    tm = _pick_tile(M, tm)
    tn = _pick_tile(N, tn)
    tk = _pick_tile(K, tk)
    grid = (M // tm, N // tn, K // tk)
    return pl.pallas_call(
        _linear_kernel,
        out_shape=jax.ShapeDtypeStruct((M, N), out_dtype),
        grid=grid,
        in_specs=[
            pl.BlockSpec((tm, tk), lambda i, j, k: (i, k)),
            pl.BlockSpec((tk, tn), lambda i, j, k: (k, j)),
            pl.BlockSpec((1, tn), lambda i, j, k: (0, j)),
        ],
        out_specs=pl.BlockSpec((tm, tn), lambda i, j, k: (i, j)),
        scratch_shapes=[pltpu.VMEM((tm, tn), jnp.float32)],
        compiler_params=pltpu.CompilerParams(
            dimension_semantics=("parallel", "parallel", "arbitrary"),
            vmem_limit_bytes=32 * 1024 * 1024),
    )(x2d, w, b.reshape(1, N).astype(jnp.float32))


# --------------------- fused RoPE + flash self-attention --------------------

def _attn_kernel(cosq_ref, sinq_ref, cosk_ref, sink_ref, rot_ref,
                 q_ref, k_ref, v_ref, o_ref, m_sc, l_sc, acc_sc):
    """Online-softmax attention over KV tiles for one batch element.

    Blocks: q (1,S,1,H,Dh), k/v (1,Tkv,1,H,Dh), out (1,S,H*Dh).
    Scratch: m/l (S,H) f32, acc (S,H*Dh) f32 (persist across the KV grid axis).
    """
    kv = pl.program_id(1)
    H = q_ref.shape[3]
    Dh = q_ref.shape[4]
    scale = 1.0 / math.sqrt(Dh)

    @pl.when(kv == 0)
    def _init():
        m_sc[...] = jnp.full(m_sc.shape, -jnp.inf, m_sc.dtype)
        l_sc[...] = jnp.zeros(l_sc.shape, l_sc.dtype)
        acc_sc[...] = jnp.zeros(acc_sc.shape, acc_sc.dtype)

    cos_q = cosq_ref[...]          # (S, Dh)   f32
    sin_q = sinq_ref[...]
    cos_k = cosk_ref[...]          # (Tkv, Dh) f32
    sin_k = sink_ref[...]
    rot = rot_ref[...]             # (Dh, Dh)  bf16 sign-permutation matrix

    def rope(x_bf16, cos, sin):
        # x*cos + rotate_half(x)*sin, computed in f32 (matches the reference).
        # rotate_half(x) = x @ rot is exact (rot entries are 0 / +-1).
        xf = x_bf16.astype(jnp.float32)
        xr = jnp.dot(x_bf16, rot, preferred_element_type=jnp.float32)
        return xf * cos + xr * sin

    for h in range(H):                               # static unroll over heads
        q_h = q_ref[0, :, 0, h, :]                   # (S, Dh)   bf16
        k_h = k_ref[0, :, 0, h, :]                   # (Tkv, Dh) bf16
        v_h = v_ref[0, :, 0, h, :]                   # (Tkv, Dh) bf16

        qr = (rope(q_h, cos_q, sin_q) * scale).astype(jnp.bfloat16)
        kr = rope(k_h, cos_k, sin_k).astype(jnp.bfloat16)

        s = lax.dot_general(qr, kr, (((1,), (1,)), ((), ())),
                            preferred_element_type=jnp.float32)   # (S, Tkv)

        m_prev = m_sc[:, h:h + 1]
        l_prev = l_sc[:, h:h + 1]
        m_new = jnp.maximum(m_prev, jnp.max(s, axis=-1, keepdims=True))
        alpha = jnp.exp(m_prev - m_new)
        p = jnp.exp(s - m_new)
        l_sc[:, h:h + 1] = alpha * l_prev + jnp.sum(p, axis=-1, keepdims=True)
        pv = jnp.dot(p.astype(jnp.bfloat16), v_h,
                     preferred_element_type=jnp.float32)          # (S, Dh)
        acc_sc[:, h * Dh:(h + 1) * Dh] = (
            alpha * acc_sc[:, h * Dh:(h + 1) * Dh] + pv)
        m_sc[:, h:h + 1] = m_new

    @pl.when(kv == pl.num_programs(1) - 1)
    def _finalize():
        parts = []
        for h in range(H):
            inv_l = pl.reciprocal(l_sc[:, h:h + 1], approx=True)
            parts.append(acc_sc[:, h * Dh:(h + 1) * Dh] * inv_l)
        # single lane-dense store of the whole (S, H*Dh) context
        o_ref[0] = jnp.concatenate(parts, axis=-1).astype(o_ref.dtype)


def _rotate_half_matrix(dh):
    # M such that (x @ M) == interleaved rotate_half(x): out[2j] = -x[2j+1],
    # out[2j+1] = x[2j].
    r = jnp.arange(dh)[:, None]
    c = jnp.arange(dh)[None, :]
    m = (jnp.where((r % 2 == 0) & (c == r + 1), 1.0, 0.0)
         + jnp.where((r % 2 == 1) & (c == r - 1), -1.0, 0.0))
    return m.astype(jnp.bfloat16)


def attention_pallas(qkv, cos, sin, kv_tile=256):
    """qkv: (B, S, 3, H, Dh) bf16 -> context (B, S, H*Dh) bf16, RoPE fused."""
    B, S, _, H, Dh = qkv.shape
    D = H * Dh
    tkv = kv_tile if S % kv_tile == 0 else S
    num_kv = S // tkv
    rot = _rotate_half_matrix(Dh)
    cos = cos.astype(jnp.float32)
    sin = sin.astype(jnp.float32)
    return pl.pallas_call(
        _attn_kernel,
        out_shape=jax.ShapeDtypeStruct((B, S, D), jnp.bfloat16),
        grid=(B, num_kv),
        in_specs=[
            pl.BlockSpec((S, Dh), lambda b, kv: (0, 0)),        # cos (queries)
            pl.BlockSpec((S, Dh), lambda b, kv: (0, 0)),        # sin (queries)
            pl.BlockSpec((tkv, Dh), lambda b, kv: (kv, 0)),     # cos (kv tile)
            pl.BlockSpec((tkv, Dh), lambda b, kv: (kv, 0)),     # sin (kv tile)
            pl.BlockSpec((Dh, Dh), lambda b, kv: (0, 0)),       # rotate-half mat
            pl.BlockSpec((1, S, 1, H, Dh), lambda b, kv: (b, 0, 0, 0, 0)),     # q
            pl.BlockSpec((1, tkv, 1, H, Dh), lambda b, kv: (b, kv, 1, 0, 0)),  # k
            pl.BlockSpec((1, tkv, 1, H, Dh), lambda b, kv: (b, kv, 2, 0, 0)),  # v
        ],
        out_specs=pl.BlockSpec((1, S, D), lambda b, kv: (b, 0, 0)),
        scratch_shapes=[
            pltpu.VMEM((S, H), jnp.float32),   # running max  (query, head)
            pltpu.VMEM((S, H), jnp.float32),   # running sum
            pltpu.VMEM((S, D), jnp.float32),   # running context accumulator
        ],
        compiler_params=pltpu.CompilerParams(
            dimension_semantics=("parallel", "arbitrary"),
            vmem_limit_bytes=32 * 1024 * 1024),
    )(cos, sin, cos, sin, rot, qkv, qkv, qkv)


# ------------------------------ module (forward) ----------------------------

def init_params(key, dim):
    k0, k1, k2, k3 = jax.random.split(key, 4)
    return {
        # stored as (in, out) so the kernels compute x @ W + b
        "wqkv_w": 0.02 * jax.random.normal(k0, (dim, 3 * dim), jnp.float32),
        "wqkv_b": 0.02 * jax.random.normal(k1, (3 * dim,), jnp.float32),
        "out_w": 0.02 * jax.random.normal(k2, (dim, dim), jnp.float32),
        "out_b": 0.02 * jax.random.normal(k3, (dim,), jnp.float32),
    }


def flash_self_mha_forward(params, x, num_heads, freqs_cis_img=None):
    """x: (B, S, D) fp32.  Returns (out,) with out: (B, S, D) fp32."""
    b, s, d = x.shape
    H = num_heads
    Dh = d // H

    xb = x.astype(jnp.bfloat16)
    wqkv = params["wqkv_w"].astype(jnp.bfloat16)
    wout = params["out_w"].astype(jnp.bfloat16)

    # Wqkv projection: bf16 tiled/pipelined matmul, emitted directly in bf16
    # (the attention consumes bf16; halves the qkv HBM writeback + re-read).
    qkv = linear_pallas(xb.reshape(b * s, d), wqkv, params["wqkv_b"],
                        out_dtype=jnp.bfloat16)
    qkv = qkv.reshape(b, s, 3, H, Dh)          # metadata-only reshape

    if freqs_cis_img is not None:
        cos, sin = freqs_cis_img
    else:
        cos = jnp.ones((s, Dh), jnp.float32)   # identity RoPE
        sin = jnp.zeros((s, Dh), jnp.float32)

    # Fused RoPE + flash attention; output comes back as (B, S, H*Dh) bf16,
    # ready for the out projection (no transposes anywhere in the wrapper).
    ctx = attention_pallas(qkv, cos, sin)

    out = linear_pallas(ctx.reshape(b * s, d), wout, params["out_b"],
                        out_dtype=jnp.float32).reshape(b, s, d)
    # proj_drop has p=0.0 -> identity
    return (out,)


# --------------------------------- reference --------------------------------

def _rotate_half_ref(x):
    xr = x.reshape(*x.shape[:-1], -1, 2)
    return jnp.stack([-xr[..., 1], xr[..., 0]], axis=-1).reshape(x.shape)


def reference_forward(params, x, num_heads, freqs_cis_img=None):
    b, s, d = x.shape
    H = num_heads
    Dh = d // H
    xb = x.astype(jnp.bfloat16).astype(jnp.float32)
    wqkv = params["wqkv_w"].astype(jnp.bfloat16).astype(jnp.float32)
    qkv = (xb.reshape(b * s, d) @ wqkv + params["wqkv_b"]).astype(jnp.bfloat16)
    qkv = qkv.reshape(b, s, 3, H, Dh)
    q, k, v = qkv[:, :, 0], qkv[:, :, 1], qkv[:, :, 2]
    if freqs_cis_img is not None:
        cos, sin = freqs_cis_img
        cos = cos.reshape(1, s, 1, Dh).astype(jnp.float32)
        sin = sin.reshape(1, s, 1, Dh).astype(jnp.float32)
        qf = q.astype(jnp.float32)
        kf = k.astype(jnp.float32)
        q = (qf * cos + _rotate_half_ref(qf) * sin).astype(jnp.bfloat16)
        k = (kf * cos + _rotate_half_ref(kf) * sin).astype(jnp.bfloat16)
    scale = 1.0 / math.sqrt(Dh)
    qf = q.astype(jnp.float32).transpose(0, 2, 1, 3) * scale
    kf = k.astype(jnp.float32).transpose(0, 2, 1, 3)
    vf = v.astype(jnp.float32).transpose(0, 2, 1, 3)
    sc = jnp.einsum("bhqd,bhkd->bhqk", qf, kf)
    p = jax.nn.softmax(sc, axis=-1)
    ctx = jnp.einsum("bhqk,bhkd->bhqd", p, vf)
    ctx = ctx.transpose(0, 2, 1, 3).reshape(b, s, d).astype(jnp.bfloat16)
    wout = params["out_w"].astype(jnp.bfloat16).astype(jnp.float32)
    out = ctx.astype(jnp.float32).reshape(b * s, d) @ wout + params["out_b"]
    return out.reshape(b, s, d)


# ----------------------------------- main ------------------------------------

if __name__ == "__main__":
    B, S, DIM, H = 2, 8, 32, 4
    Dh = DIM // H

    key = jax.random.PRNGKey(0)
    kx, kp = jax.random.split(key)
    x = jax.random.normal(kx, (B, S, DIM), jnp.float32)
    params = init_params(kp, DIM)

    # deterministic RoPE table (cos, sin), each (S, head_dim), interleaved pairs
    pos = jnp.arange(S, dtype=jnp.float32)[:, None]
    inv = 1.0 / (10000.0 ** (jnp.arange(0, Dh, 2, dtype=jnp.float32) / Dh))
    ang = jnp.repeat(pos * inv[None, :], 2, axis=-1)  # (S, Dh)
    freqs = (jnp.cos(ang), jnp.sin(ang))

    fwd = jax.jit(lambda p, xx, fc: flash_self_mha_forward(p, xx, H, fc))
    (out,) = fwd(params, x, freqs)
    out = jax.block_until_ready(out)

    ref = reference_forward(params, x, H, freqs)
    assert out.shape == (B, S, DIM) and out.dtype == jnp.float32
    err = float(jnp.max(jnp.abs(out - ref)))
    assert jnp.allclose(out, ref, rtol=3e-2, atol=3e-2), f"max abs diff {err}"

    print("KERNEL_OK")
</pallas_src>

<mosaic_0001>
module attributes {stable_mosaic.version = 11 : i64} {
  func.func @_linear_kernel(%arg0: i32, %arg1: i32, %arg2: i32, %arg3: memref<16x32xbf16, #tpu.memory_space<vmem>>, %arg4: memref<32x96xbf16, #tpu.memory_space<vmem>>, %arg5: memref<1x96xf32, #tpu.memory_space<vmem>>, %arg6: memref<16x96xbf16, #tpu.memory_space<vmem>>, %arg7: memref<16x96xf32, #tpu.memory_space<vmem>>) attributes {dimension_semantics = [#tpu.dimension_semantics<parallel>, #tpu.dimension_semantics<parallel>, #tpu.dimension_semantics<arbitrary>], iteration_bounds = array<i64: 1, 1, 1>, scalar_prefetch = 0 : i64, scratch_operands = 1 : i64, tpu.core_type = #tpu.core_type<tc>, window_params = [{transform_indices = @transform_0, window_bounds = array<i64: 16, 32>}, {transform_indices = @transform_1, window_bounds = array<i64: 32, 96>}, {transform_indices = @transform_2, window_bounds = array<i64: 1, 96>}, {transform_indices = @transform_3, window_bounds = array<i64: 16, 96>}]} {
    %c0_i32 = arith.constant 0 : i32
    %0 = arith.cmpi eq, %arg2, %c0_i32 : i32
    %1 = arith.extui %0 : i1 to i32
    %c0_i32_0 = arith.constant 0 : i32
    %2 = arith.cmpi ne, %1, %c0_i32_0 : i32
    scf.if %2 {
      %cst_10 = arith.constant 0.000000e+00 : f32
      %12 = vector.broadcast %cst_10 : f32 to vector<16x96xf32>
      %c0_11 = arith.constant 0 : index
      %c0_12 = arith.constant 0 : index
      %13 = vector.load %arg7[%c0_11, %c0_12] : memref<16x96xf32, #tpu.memory_space<vmem>>, vector<16x96xf32>
      tpu.vector_store %arg7[%c0_11, %c0_12], %12 {strides = array<i32>} : memref<16x96xf32, #tpu.memory_space<vmem>>, vector<16x96xf32>,
    } else {
    }
    %c0 = arith.constant 0 : index
    %c0_1 = arith.constant 0 : index
    %3 = vector.load %arg7[%c0, %c0_1] : memref<16x96xf32, #tpu.memory_space<vmem>>, vector<16x96xf32>
    %c0_2 = arith.constant 0 : index
    %c0_3 = arith.constant 0 : index
    %4 = vector.load %arg3[%c0_2, %c0_3] : memref<16x32xbf16, #tpu.memory_space<vmem>>, vector<16x32xbf16>
    %c0_4 = arith.constant 0 : index
    %c0_5 = arith.constant 0 : index
    %5 = vector.load %arg4[%c0_4, %c0_5] : memref<32x96xbf16, #tpu.memory_space<vmem>>, vector<32x96xbf16>
    %cst = arith.constant dense<0.000000e+00> : vector<16x96xf32>
    %6 = tpu.matmul %4, %5, %cst {dimension_numbers = #tpu.dot_dimension_numbers<[1], [0], [0], [1], [0, 0, 1, 1], [], []>} : vector<16x32xbf16>, vector<32x96xbf16>, vector<16x96xf32> -> vector<16x96xf32>
    %7 = arith.addf %3, %6 : vector<16x96xf32>
    %c0_6 = arith.constant 0 : index
    %c0_7 = arith.constant 0 : index
    %8 = vector.load %arg7[%c0_6, %c0_7] : memref<16x96xf32, #tpu.memory_space<vmem>>, vector<16x96xf32>
    tpu.vector_store %arg7[%c0_6, %c0_7], %7 {strides = array<i32>} : memref<16x96xf32, #tpu.memory_space<vmem>>, vector<16x96xf32>,
    %c0_i32_8 = arith.constant 0 : i32
    %9 = arith.cmpi eq, %arg2, %c0_i32_8 : i32
    %10 = arith.extui %9 : i1 to i32
    %c0_i32_9 = arith.constant 0 : i32
    %11 = arith.cmpi ne, %10, %c0_i32_9 : i32
    scf.if %11 {
      %c0_10 = arith.constant 0 : index
      %c0_11 = arith.constant 0 : index
      %12 = vector.load %arg7[%c0_10, %c0_11] : memref<16x96xf32, #tpu.memory_space<vmem>>, vector<16x96xf32>
      %c0_12 = arith.constant 0 : index
      %c0_13 = arith.constant 0 : index
      %13 = vector.load %arg5[%c0_12, %c0_13] : memref<1x96xf32, #tpu.memory_space<vmem>>, vector<1x96xf32>
      %14 = vector.broadcast %13 : vector<1x96xf32> to vector<16x96xf32>
      %15 = arith.addf %12, %14 : vector<16x96xf32>
      %16 = arith.truncf %15 : vector<16x96xf32> to vector<16x96xbf16>
      %c0_14 = arith.constant 0 : index
      %c0_15 = arith.constant 0 : index
      %17 = vector.load %arg6[%c0_14, %c0_15] : memref<16x96xbf16, #tpu.memory_space<vmem>>, vector<16x96xbf16>
      tpu.vector_store %arg6[%c0_14, %c0_15], %16 {strides = array<i32>} : memref<16x96xbf16, #tpu.memory_space<vmem>>, vector<16x96xbf16>,
    } else {
    }
    return
  }
  func.func @transform_0(%arg0: i32, %arg1: i32, %arg2: i32) -> (i32, i32) {
    %c0_i32 = arith.constant 0 : i32
    return %arg0, %arg2 : i32, i32
  }
  func.func @transform_1(%arg0: i32, %arg1: i32, %arg2: i32) -> (i32, i32) {
    %c0_i32 = arith.constant 0 : i32
    return %arg2, %arg1 : i32, i32
  }
  func.func @transform_2(%arg0: i32, %arg1: i32, %arg2: i32) -> (i32, i32) {
    %c0_i32 = arith.constant 0 : i32
    %c0_i32_0 = arith.constant 0 : i32
    return %c0_i32, %arg1 : i32, i32
  }
  func.func @transform_3(%arg0: i32, %arg1: i32, %arg2: i32) -> (i32, i32) {
    %c0_i32 = arith.constant 0 : i32
    return %arg0, %arg1 : i32, i32
  }
}

module attributes {stable_mosaic.version = 11 : i64} {
  func.func @_linear_kernel(%arg0: i32, %arg1: i32, %arg2: i32, %arg3: memref<16x32xbf16, #tpu.memory_space<vmem>>, %arg4: memref<32x32xbf16, #tpu.memory_space<vmem>>, %arg5: memref<1x32xf32, #tpu.memory_space<vmem>>, %arg6: memref<16x32xf32, #tpu.memory_space<vmem>>, %arg7: memref<16x32xf32, #tpu.memory_space<vmem>>) attributes {dimension_semantics = [#tpu.dimension_semantics<parallel>, #tpu.dimension_semantics<parallel>, #tpu.dimension_semantics<arbitrary>], iteration_bounds = array<i64: 1, 1, 1>, scalar_prefetch = 0 : i64, scratch_operands = 1 : i64, tpu.core_type = #tpu.core_type<tc>, window_params = [{transform_indices = @transform_0, window_bounds = array<i64: 16, 32>}, {transform_indices = @transform_1, window_bounds = array<i64: 32, 32>}, {transform_indices = @transform_2, window_bounds = array<i64: 1, 32>}, {transform_indices = @transform_3, window_bounds = array<i64: 16, 32>}]} {
    %c0_i32 = arith.constant 0 : i32
    %0 = arith.cmpi eq, %arg2, %c0_i32 : i32
    %1 = arith.extui %0 : i1 to i32
    %c0_i32_0 = arith.constant 0 : i32
    %2 = arith.cmpi ne, %1, %c0_i32_0 : i32
    scf.if %2 {
      %cst_10 = arith.constant 0.000000e+00 : f32
      %12 = vector.broadcast %cst_10 : f32 to vector<16x32xf32>
      %c0_11 = arith.constant 0 : index
      %c0_12 = arith.constant 0 : index
      %13 = vector.load %arg7[%c0_11, %c0_12] : memref<16x32xf32, #tpu.memory_space<vmem>>, vector<16x32xf32>
      tpu.vector_store %arg7[%c0_11, %c0_12], %12 {strides = array<i32>} : memref<16x32xf32, #tpu.memory_space<vmem>>, vector<16x32xf32>,
    } else {
    }
    %c0 = arith.constant 0 : index
    %c0_1 = arith.constant 0 : index
    %3 = vector.load %arg7[%c0, %c0_1] : memref<16x32xf32, #tpu.memory_space<vmem>>, vector<16x32xf32>
    %c0_2 = arith.constant 0 : index
    %c0_3 = arith.constant 0 : index
    %4 = vector.load %arg3[%c0_2, %c0_3] : memref<16x32xbf16, #tpu.memory_space<vmem>>, vector<16x32xbf16>
    %c0_4 = arith.constant 0 : index
    %c0_5 = arith.constant 0 : index
    %5 = vector.load %arg4[%c0_4, %c0_5] : memref<32x32xbf16, #tpu.memory_space<vmem>>, vector<32x32xbf16>
    %cst = arith.constant dense<0.000000e+00> : vector<16x32xf32>
    %6 = tpu.matmul %4, %5, %cst {dimension_numbers = #tpu.dot_dimension_numbers<[1], [0], [0], [1], [0, 0, 1, 1], [], []>} : vector<16x32xbf16>, vector<32x32xbf16>, vector<16x32xf32> -> vector<16x32xf32>
    %7 = arith.addf %3, %6 : vector<16x32xf32>
    %c0_6 = arith.constant 0 : index
    %c0_7 = arith.constant 0 : index
    %8 = vector.load %arg7[%c0_6, %c0_7] : memref<16x32xf32, #tpu.memory_space<vmem>>, vector<16x32xf32>
    tpu.vector_store %arg7[%c0_6, %c0_7], %7 {strides = array<i32>} : memref<16x32xf32, #tpu.memory_space<vmem>>, vector<16x32xf32>,
    %c0_i32_8 = arith.constant 0 : i32
    %9 = arith.cmpi eq, %arg2, %c0_i32_8 : i32
    %10 = arith.extui %9 : i1 to i32
    %c0_i32_9 = arith.constant 0 : i32
    %11 = arith.cmpi ne, %10, %c0_i32_9 : i32
    scf.if %11 {
      %c0_10 = arith.constant 0 : index
      %c0_11 = arith.constant 0 : index
      %12 = vector.load %arg7[%c0_10, %c0_11] : memref<16x32xf32, #tpu.memory_space<vmem>>, vector<16x32xf32>
      %c0_12 = arith.constant 0 : index
      %c0_13 = arith.constant 0 : index
      %13 = vector.load %arg5[%c0_12, %c0_13] : memref<1x32xf32, #tpu.memory_space<vmem>>, vector<1x32xf32>
      %14 = vector.broadcast %13 : vector<1x32xf32> to vector<16x32xf32>
      %15 = arith.addf %12, %14 : vector<16x32xf32>
      %c0_14 = arith.constant 0 : index
      %c0_15 = arith.constant 0 : index
      %16 = vector.load %arg6[%c0_14, %c0_15] : memref<16x32xf32, #tpu.memory_space<vmem>>, vector<16x32xf32>
      tpu.vector_store %arg6[%c0_14, %c0_15], %15 {strides = array<i32>} : memref<16x32xf32, #tpu.memory_space<vmem>>, vector<16x32xf32>,
    } else {
    }
    return
  }
  func.func @transform_0(%arg0: i32, %arg1: i32, %arg2: i32) -> (i32, i32) {
    %c0_i32 = arith.constant 0 : i32
    return %arg0, %arg2 : i32, i32
  }
  func.func @transform_1(%arg0: i32, %arg1: i32, %arg2: i32) -> (i32, i32) {
    %c0_i32 = arith.constant 0 : i32
    return %arg2, %arg1 : i32, i32
  }
  func.func @transform_2(%arg0: i32, %arg1: i32, %arg2: i32) -> (i32, i32) {
    %c0_i32 = arith.constant 0 : i32
    %c0_i32_0 = arith.constant 0 : i32
    return %c0_i32, %arg1 : i32, i32
  }
  func.func @transform_3(%arg0: i32, %arg1: i32, %arg2: i32) -> (i32, i32) {
    %c0_i32 = arith.constant 0 : i32
    return %arg0, %arg1 : i32, i32
  }
}

module attributes {stable_mosaic.version = 11 : i64} {
  func.func @_attn_kernel(%arg0: i32, %arg1: i32, %arg2: memref<8x8xf32, #tpu.memory_space<vmem>>, %arg3: memref<8x8xf32, #tpu.memory_space<vmem>>, %arg4: memref<8x8xf32, #tpu.memory_space<vmem>>, %arg5: memref<8x8xf32, #tpu.memory_space<vmem>>, %arg6: memref<8x8xbf16, #tpu.memory_space<vmem>>, %arg7: memref<1x8x1x4x8xbf16, #tpu.memory_space<vmem>>, %arg8: memref<1x8x1x4x8xbf16, #tpu.memory_space<vmem>>, %arg9: memref<1x8x1x4x8xbf16, #tpu.memory_space<vmem>>, %arg10: memref<1x8x32xbf16, #tpu.memory_space<vmem>>, %arg11: memref<8x4xf32, #tpu.memory_space<vmem>>, %arg12: memref<8x4xf32, #tpu.memory_space<vmem>>, %arg13: memref<8x32xf32, #tpu.memory_space<vmem>>) attributes {dimension_semantics = [#tpu.dimension_semantics<parallel>, #tpu.dimension_semantics<arbitrary>], iteration_bounds = array<i64: 2, 1>, scalar_prefetch = 0 : i64, scratch_operands = 3 : i64, tpu.core_type = #tpu.core_type<tc>, window_params = [{pipeline_mode = #tpu.pipeline_mode<synchronous>, transform_indices = @transform_0, window_bounds = array<i64: 8, 8>}, {pipeline_mode = #tpu.pipeline_mode<synchronous>, transform_indices = @transform_1, window_bounds = array<i64: 8, 8>}, {transform_indices = @transform_2, window_bounds = array<i64: 8, 8>}, {transform_indices = @transform_3, window_bounds = array<i64: 8, 8>}, {pipeline_mode = #tpu.pipeline_mode<synchronous>, transform_indices = @transform_4, window_bounds = array<i64: 8, 8>}, {transform_indices = @transform_5, window_bounds = array<i64: 1, 8, 1, 4, 8>}, {transform_indices = @transform_6, window_bounds = array<i64: 1, 8, 1, 4, 8>}, {transform_indices = @transform_7, window_bounds = array<i64: 1, 8, 1, 4, 8>}, {transform_indices = @transform_8, window_bounds = array<i64: 1, 8, 32>}]} {
    %c0_i32 = arith.constant 0 : i32
    %0 = arith.cmpi eq, %arg1, %c0_i32 : i32
    %1 = arith.extui %0 : i1 to i32
    %c0_i32_0 = arith.constant 0 : i32
    %2 = arith.cmpi ne, %1, %c0_i32_0 : i32
    scf.if %2 {
      %cst_141 = arith.constant 0xFF800000 : f32
      %187 = vector.broadcast %cst_141 : f32 to vector<8x4xf32>
      %c0_142 = arith.constant 0 : index
      %c0_143 = arith.constant 0 : index
      %188 = vector.load %arg11[%c0_142, %c0_143] : memref<8x4xf32, #tpu.memory_space<vmem>>, vector<8x4xf32>
      tpu.vector_store %arg11[%c0_142, %c0_143], %187 {strides = array<i32>} : memref<8x4xf32, #tpu.memory_space<vmem>>, vector<8x4xf32>,
      %cst_144 = arith.constant 0.000000e+00 : f32
      %189 = vector.broadcast %cst_144 : f32 to vector<8x4xf32>
      %c0_145 = arith.constant 0 : index
      %c0_146 = arith.constant 0 : index
      %190 = vector.load %arg12[%c0_145, %c0_146] : memref<8x4xf32, #tpu.memory_space<vmem>>, vector<8x4xf32>
      tpu.vector_store %arg12[%c0_145, %c0_146], %189 {strides = array<i32>} : memref<8x4xf32, #tpu.memory_space<vmem>>, vector<8x4xf32>,
      %cst_147 = arith.constant 0.000000e+00 : f32
      %191 = vector.broadcast %cst_147 : f32 to vector<8x32xf32>
      %c0_148 = arith.constant 0 : index
      %c0_149 = arith.constant 0 : index
      %192 = vector.load %arg13[%c0_148, %c0_149] : memref<8x32xf32, #tpu.memory_space<vmem>>, vector<8x32xf32>
      tpu.vector_store %arg13[%c0_148, %c0_149], %191 {strides = array<i32>} : memref<8x32xf32, #tpu.memory_space<vmem>>, vector<8x32xf32>,
    } else {
    }
    %c0 = arith.constant 0 : index
    %c0_1 = arith.constant 0 : index
    %3 = vector.load %arg2[%c0, %c0_1] : memref<8x8xf32, #tpu.memory_space<vmem>>, vector<8x8xf32>
    %c0_2 = arith.constant 0 : index
    %c0_3 = arith.constant 0 : index
    %4 = vector.load %arg3[%c0_2, %c0_3] : memref<8x8xf32, #tpu.memory_space<vmem>>, vector<8x8xf32>
    %c0_4 = arith.constant 0 : index
    %c0_5 = arith.constant 0 : index
    %5 = vector.load %arg4[%c0_4, %c0_5] : memref<8x8xf32, #tpu.memory_space<vmem>>, vector<8x8xf32>
    %c0_6 = arith.constant 0 : index
    %c0_7 = arith.constant 0 : index
    %6 = vector.load %arg5[%c0_6, %c0_7] : memref<8x8xf32, #tpu.memory_space<vmem>>, vector<8x8xf32>
    %c0_8 = arith.constant 0 : index
    %c0_9 = arith.constant 0 : index
    %7 = vector.load %arg6[%c0_8, %c0_9] : memref<8x8xbf16, #tpu.memory_space<vmem>>, vector<8x8xbf16>
    %c0_10 = arith.constant 0 : index
    %c0_11 = arith.constant 0 : index
    %c0_12 = arith.constant 0 : index
    %c0_13 = arith.constant 0 : index
    %c0_14 = arith.constant 0 : index
    %8 = vector.load %arg7[%c0_10, %c0_11, %c0_12, %c0_13, %c0_14] : memref<1x8x1x4x8xbf16, #tpu.memory_space<vmem>>, vector<1x8x1x1x8xbf16>
    %9 = vector.shape_cast %8 : vector<1x8x1x1x8xbf16> to vector<8x8xbf16>
    %c0_15 = arith.constant 0 : index
    %c0_16 = arith.constant 0 : index
    %c0_17 = arith.constant 0 : index
    %c0_18 = arith.constant 0 : index
    %c0_19 = arith.constant 0 : index
    %10 = vector.load %arg8[%c0_15, %c0_16, %c0_17, %c0_18, %c0_19] : memref<1x8x1x4x8xbf16, #tpu.memory_space<vmem>>, vector<1x8x1x1x8xbf16>
    %11 = vector.shape_cast %10 : vector<1x8x1x1x8xbf16> to vector<8x8xbf16>
    %c0_20 = arith.constant 0 : index
    %c0_21 = arith.constant 0 : index
    %c0_22 = arith.constant 0 : index
    %c0_23 = arith.constant 0 : index
    %c0_24 = arith.constant 0 : index
    %12 = vector.load %arg9[%c0_20, %c0_21, %c0_22, %c0_23, %c0_24] : memref<1x8x1x4x8xbf16, #tpu.memory_space<vmem>>, vector<1x8x1x1x8xbf16>
    %13 = vector.shape_cast %12 : vector<1x8x1x1x8xbf16> to vector<8x8xbf16>
    %14 = arith.extf %9 : vector<8x8xbf16> to vector<8x8xf32>
    %cst = arith.constant dense<0.000000e+00> : vector<8x8xf32>
    %15 = tpu.matmul %9, %7, %cst {dimension_numbers = #tpu.dot_dimension_numbers<[1], [0], [0], [1], [0, 0, 1, 1], [], []>} : vector<8x8xbf16>, vector<8x8xbf16>, vector<8x8xf32> -> vector<8x8xf32>
    %16 = arith.mulf %14, %3 : vector<8x8xf32>
    %17 = arith.mulf %15, %4 : vector<8x8xf32>
    %18 = arith.addf %16, %17 : vector<8x8xf32>
    %cst_25 = arith.constant 0.353553385 : f32
    %19 = vector.broadcast %cst_25 : f32 to vector<8x8xf32>
    %20 = arith.mulf %18, %19 : vector<8x8xf32>
    %21 = arith.truncf %20 : vector<8x8xf32> to vector<8x8xbf16>
    %22 = arith.extf %11 : vector<8x8xbf16> to vector<8x8xf32>
    %cst_26 = arith.constant dense<0.000000e+00> : vector<8x8xf32>
    %23 = tpu.matmul %11, %7, %cst_26 {dimension_numbers = #tpu.dot_dimension_numbers<[1], [0], [0], [1], [0, 0, 1, 1], [], []>} : vector<8x8xbf16>, vector<8x8xbf16>, vector<8x8xf32> -> vector<8x8xf32>
    %24 = arith.mulf %22, %5 : vector<8x8xf32>
    %25 = arith.mulf %23, %6 : vector<8x8xf32>
    %26 = arith.addf %24, %25 : vector<8x8xf32>
    %27 = arith.truncf %26 : vector<8x8xf32> to vector<8x8xbf16>
    %cst_27 = arith.constant dense<0.000000e+00> : vector<8x8xf32>
    %28 = tpu.matmul %21, %27, %cst_27 {dimension_numbers = #tpu.dot_dimension_numbers<[1], [1], [0], [0], [0, 0, 1, 0], [], []>} : vector<8x8xbf16>, vector<8x8xbf16>, vector<8x8xf32> -> vector<8x8xf32>
    %c0_28 = arith.constant 0 : index
    %c0_29 = arith.constant 0 : index
    %29 = vector.load %arg11[%c0_28, %c0_29] : memref<8x4xf32, #tpu.memory_space<vmem>>, vector<8x1xf32>
    %c0_30 = arith.constant 0 : index
    %c0_31 = arith.constant 0 : index
    %30 = vector.load %arg12[%c0_30, %c0_31] : memref<8x4xf32, #tpu.memory_space<vmem>>, vector<8x1xf32>
    %cst_32 = arith.constant dense<0xFF800000> : vector<8xf32>
    %31 = vector.multi_reduction <maximumf>, %28, %cst_32 [1] : vector<8x8xf32> to vector<8xf32>
    %32 = vector.shape_cast %31 : vector<8xf32> to vector<8x1xf32>
    %33 = arith.maximumf %29, %32 : vector<8x1xf32>
    %34 = arith.subf %29, %33 : vector<8x1xf32>
    %35 = math.exp %34 : vector<8x1xf32>
    %36 = vector.broadcast %33 : vector<8x1xf32> to vector<8x8xf32>
    %37 = arith.subf %28, %36 : vector<8x8xf32>
    %38 = math.exp %37 : vector<8x8xf32>
    %39 = arith.mulf %35, %30 : vector<8x1xf32>
    %cst_33 = arith.constant dense<0.000000e+00> : vector<8xf32>
    %40 = vector.multi_reduction <add>, %38, %cst_33 [1] : vector<8x8xf32> to vector<8xf32>
    %41 = vector.shape_cast %40 : vector<8xf32> to vector<8x1xf32>
    %42 = arith.addf %39, %41 : vector<8x1xf32>
    %c0_34 = arith.constant 0 : index
    %c0_35 = arith.constant 0 : index
    %43 = vector.load %arg12[%c0_34, %c0_35] : memref<8x4xf32, #tpu.memory_space<vmem>>, vector<8x1xf32>
    tpu.vector_store %arg12[%c0_34, %c0_35], %42 {strides = array<i32>} : memref<8x4xf32, #tpu.memory_space<vmem>>, vector<8x1xf32>,
    %44 = arith.truncf %38 : vector<8x8xf32> to vector<8x8xbf16>
    %cst_36 = arith.constant dense<0.000000e+00> : vector<8x8xf32>
    %45 = tpu.matmul %44, %13, %cst_36 {dimension_numbers = #tpu.dot_dimension_numbers<[1], [0], [0], [1], [0, 0, 1, 1], [], []>} : vector<8x8xbf16>, vector<8x8xbf16>, vector<8x8xf32> -> vector<8x8xf32>
    %c0_37 = arith.constant 0 : index
    %c0_38 = arith.constant 0 : index
    %46 = vector.load %arg13[%c0_37, %c0_38] : memref<8x32xf32, #tpu.memory_space<vmem>>, vector<8x8xf32>
    %47 = vector.broadcast %35 : vector<8x1xf32> to vector<8x8xf32>
    %48 = arith.mulf %47, %46 : vector<8x8xf32>
    %49 = arith.addf %48, %45 : vector<8x8xf32>
    %c0_39 = arith.constant 0 : index
    %c0_40 = arith.constant 0 : index
    %50 = vector.load %arg13[%c0_39, %c0_40] : memref<8x32xf32, #tpu.memory_space<vmem>>, vector<8x8xf32>
    tpu.vector_store %arg13[%c0_39, %c0_40], %49 {strides = array<i32>} : memref<8x32xf32, #tpu.memory_space<vmem>>, vector<8x8xf32>,
    %c0_41 = arith.constant 0 : index
    %c0_42 = arith.constant 0 : index
    %51 = vector.load %arg11[%c0_41, %c0_42] : memref<8x4xf32, #tpu.memory_space<vmem>>, vector<8x1xf32>
    tpu.vector_store %arg11[%c0_41, %c0_42], %33 {strides = array<i32>} : memref<8x4xf32, #tpu.memory_space<vmem>>, vector<8x1xf32>,
    %c0_43 = arith.constant 0 : index
    %c0_44 = arith.constant 0 : index
    %c0_45 = arith.constant 0 : index
    %c1 = arith.constant 1 : index
    %c0_46 = arith.constant 0 : index
    %52 = vector.load %arg7[%c0_43, %c0_44, %c0_45, %c1, %c0_46] : memref<1x8x1x4x8xbf16, #tpu.memory_space<vmem>>, vector<1x8x1x1x8xbf16>
    %53 = vector.shape_cast %52 : vector<1x8x1x1x8xbf16> to vector<8x8xbf16>
    %c0_47 = arith.constant 0 : index
    %c0_48 = arith.constant 0 : index
    %c0_49 = arith.constant 0 : index
    %c1_50 = arith.constant 1 : index
    %c0_51 = arith.constant 0 : index
    %54 = vector.load %arg8[%c0_47, %c0_48, %c0_49, %c1_50, %c0_51] : memref<1x8x1x4x8xbf16, #tpu.memory_space<vmem>>, vector<1x8x1x1x8xbf16>
    %55 = vector.shape_cast %54 : vector<1x8x1x1x8xbf16> to vector<8x8xbf16>
    %c0_52 = arith.constant 0 : index
    %c0_53 = arith.constant 0 : index
    %c0_54 = arith.constant 0 : index
    %c1_55 = arith.constant 1 : index
    %c0_56 = arith.constant 0 : index
    %56 = vector.load %arg9[%c0_52, %c0_53, %c0_54, %c1_55, %c0_56] : memref<1x8x1x4x8xbf16, #tpu.memory_space<vmem>>, vector<1x8x1x1x8xbf16>
    %57 = vector.shape_cast %56 : vector<1x8x1x1x8xbf16> to vector<8x8xbf16>
    %58 = arith.extf %53 : vector<8x8xbf16> to vector<8x8xf32>
    %cst_57 = arith.constant dense<0.000000e+00> : vector<8x8xf32>
    %59 = tpu.matmul %53, %7, %cst_57 {dimension_numbers = #tpu.dot_dimension_numbers<[1], [0], [0], [1], [0, 0, 1, 1], [], []>} : vector<8x8xbf16>, vector<8x8xbf16>, vector<8x8xf32> -> vector<8x8xf32>
    %60 = arith.mulf %58, %3 : vector<8x8xf32>
    %61 = arith.mulf %59, %4 : vector<8x8xf32>
    %62 = arith.addf %60, %61 : vector<8x8xf32>
    %cst_58 = arith.constant 0.353553385 : f32
    %63 = vector.broadcast %cst_58 : f32 to vector<8x8xf32>
    %64 = arith.mulf %62, %63 : vector<8x8xf32>
    %65 = arith.truncf %64 : vector<8x8xf32> to vector<8x8xbf16>
    %66 = arith.extf %55 : vector<8x8xbf16> to vector<8x8xf32>
    %cst_59 = arith.constant dense<0.000000e+00> : vector<8x8xf32>
    %67 = tpu.matmul %55, %7, %cst_59 {dimension_numbers = #tpu.dot_dimension_numbers<[1], [0], [0], [1], [0, 0, 1, 1], [], []>} : vector<8x8xbf16>, vector<8x8xbf16>, vector<8x8xf32> -> vector<8x8xf32>
    %68 = arith.mulf %66, %5 : vector<8x8xf32>
    %69 = arith.mulf %67, %6 : vector<8x8xf32>
    %70 = arith.addf %68, %69 : vector<8x8xf32>
    %71 = arith.truncf %70 : vector<8x8xf32> to vector<8x8xbf16>
    %cst_60 = arith.constant dense<0.000000e+00> : vector<8x8xf32>
    %72 = tpu.matmul %65, %71, %cst_60 {dimension_numbers = #tpu.dot_dimension_numbers<[1], [1], [0], [0], [0, 0, 1, 0], [], []>} : vector<8x8xbf16>, vector<8x8xbf16>, vector<8x8xf32> -> vector<8x8xf32>
    %c0_61 = arith.constant 0 : index
    %c1_62 = arith.constant 1 : index
    %73 = vector.load %arg11[%c0_61, %c1_62] : memref<8x4xf32, #tpu.memory_space<vmem>>, vector<8x1xf32>
    %c0_63 = arith.constant 0 : index
    %c1_64 = arith.constant 1 : index
    %74 = vector.load %arg12[%c0_63, %c1_64] : memref<8x4xf32, #tpu.memory_space<vmem>>, vector<8x1xf32>
    %cst_65 = arith.constant dense<0xFF800000> : vector<8xf32>
    %75 = vector.multi_reduction <maximumf>, %72, %cst_65 [1] : vector<8x8xf32> to vector<8xf32>
    %76 = vector.shape_cast %75 : vector<8xf32> to vector<8x1xf32>
    %77 = arith.maximumf %73, %76 : vector<8x1xf32>
    %78 = arith.subf %73, %77 : vector<8x1xf32>
    %79 = math.exp %78 : vector<8x1xf32>
    %80 = vector.broadcast %77 : vector<8x1xf32> to vector<8x8xf32>
    %81 = arith.subf %72, %80 : vector<8x8xf32>
    %82 = math.exp %81 : vector<8x8xf32>
    %83 = arith.mulf %79, %74 : vector<8x1xf32>
    %cst_66 = arith.constant dense<0.000000e+00> : vector<8xf32>
    %84 = vector.multi_reduction <add>, %82, %cst_66 [1] : vector<8x8xf32> to vector<8xf32>
    %85 = vector.shape_cast %84 : vector<8xf32> to vector<8x1xf32>
    %86 = arith.addf %83, %85 : vector<8x1xf32>
    %c0_67 = arith.constant 0 : index
    %c1_68 = arith.constant 1 : index
    %87 = vector.load %arg12[%c0_67, %c1_68] : memref<8x4xf32, #tpu.memory_space<vmem>>, vector<8x1xf32>
    tpu.vector_store %arg12[%c0_67, %c1_68], %86 {strides = array<i32>} : memref<8x4xf32, #tpu.memory_space<vmem>>, vector<8x1xf32>,
    %88 = arith.truncf %82 : vector<8x8xf32> to vector<8x8xbf16>
    %cst_69 = arith.constant dense<0.000000e+00> : vector<8x8xf32>
    %89 = tpu.matmul %88, %57, %cst_69 {dimension_numbers = #tpu.dot_dimension_numbers<[1], [0], [0], [1], [0, 0, 1, 1], [], []>} : vector<8x8xbf16>, vector<8x8xbf16>, vector<8x8xf32> -> vector<8x8xf32>
    %c0_70 = arith.constant 0 : index
    %c8 = arith.constant 8 : index
    %90 = vector.load %arg13[%c0_70, %c8] : memref<8x32xf32, #tpu.memory_space<vmem>>, vector<8x8xf32>
    %91 = vector.broadcast %79 : vector<8x1xf32> to vector<8x8xf32>
    %92 = arith.mulf %91, %90 : vector<8x8xf32>
    %93 = arith.addf %92, %89 : vector<8x8xf32>
    %c0_71 = arith.constant 0 : index
    %c8_72 = arith.constant 8 : index
    %94 = vector.load %arg13[%c0_71, %c8_72] : memref<8x32xf32, #tpu.memory_space<vmem>>, vector<8x8xf32>
    tpu.vector_store %arg13[%c0_71, %c8_72], %93 {strides = array<i32>} : memref<8x32xf32, #tpu.memory_space<vmem>>, vector<8x8xf32>,
    %c0_73 = arith.constant 0 : index
    %c1_74 = arith.constant 1 : index
    %95 = vector.load %arg11[%c0_73, %c1_74] : memref<8x4xf32, #tpu.memory_space<vmem>>, vector<8x1xf32>
    tpu.vector_store %arg11[%c0_73, %c1_74], %77 {strides = array<i32>} : memref<8x4xf32, #tpu.memory_space<vmem>>, vector<8x1xf32>,
    %c0_75 = arith.constant 0 : index
    %c0_76 = arith.constant 0 : index
    %c0_77 = arith.constant 0 : index
    %c2 = arith.constant 2 : index
    %c0_78 = arith.constant 0 : index
    %96 = vector.load %arg7[%c0_75, %c0_76, %c0_77, %c2, %c0_78] : memref<1x8x1x4x8xbf16, #tpu.memory_space<vmem>>, vector<1x8x1x1x8xbf16>
    %97 = vector.shape_cast %96 : vector<1x8x1x1x8xbf16> to vector<8x8xbf16>
    %c0_79 = arith.constant 0 : index
    %c0_80 = arith.constant 0 : index
    %c0_81 = arith.constant 0 : index
    %c2_82 = arith.constant 2 : index
    %c0_83 = arith.constant 0 : index
    %98 = vector.load %arg8[%c0_79, %c0_80, %c0_81, %c2_82, %c0_83] : memref<1x8x1x4x8xbf16, #tpu.memory_space<vmem>>, vector<1x8x1x1x8xbf16>
    %99 = vector.shape_cast %98 : vector<1x8x1x1x8xbf16> to vector<8x8xbf16>
    %c0_84 = arith.constant 0 : index
    %c0_85 = arith.constant 0 : index
    %c0_86 = arith.constant 0 : index
    %c2_87 = arith.constant 2 : index
    %c0_88 = arith.constant 0 : index
    %100 = vector.load %arg9[%c0_84, %c0_85, %c0_86, %c2_87, %c0_88] : memref<1x8x1x4x8xbf16, #tpu.memory_space<vmem>>, vector<1x8x1x1x8xbf16>
    %101 = vector.shape_cast %100 : vector<1x8x1x1x8xbf16> to vector<8x8xbf16>
    %102 = arith.extf %97 : vector<8x8xbf16> to vector<8x8xf32>
    %cst_89 = arith.constant dense<0.000000e+00> : vector<8x8xf32>
    %103 = tpu.matmul %97, %7, %cst_89 {dimension_numbers = #tpu.dot_dimension_numbers<[1], [0], [0], [1], [0, 0, 1, 1], [], []>} : vector<8x8xbf16>, vector<8x8xbf16>, vector<8x8xf32> -> vector<8x8xf32>
    %104 = arith.mulf %102, %3 : vector<8x8xf32>
    %105 = arith.mulf %103, %4 : vector<8x8xf32>
    %106 = arith.addf %104, %105 : vector<8x8xf32>
    %cst_90 = arith.constant 0.353553385 : f32
    %107 = vector.broadcast %cst_90 : f32 to vector<8x8xf32>
    %108 = arith.mulf %106, %107 : vector<8x8xf32>
    %109 = arith.truncf %108 : vector<8x8xf32> to vector<8x8xbf16>
    %110 = arith.extf %99 : vector<8x8xbf16> to vector<8x8xf32>
    %cst_91 = arith.constant dense<0.000000e+00> : vector<8x8xf32>
    %111 = tpu.matmul %99, %7, %cst_91 {dimension_numbers = #tpu.dot_dimension_numbers<[1], [0], [0], [1], [0, 0, 1, 1], [], []>} : vector<8x8xbf16>, vector<8x8xbf16>, vector<8x8xf32> -> vector<8x8xf32>
    %112 = arith.mulf %110, %5 : vector<8x8xf32>
    %113 = arith.mulf %111, %6 : vector<8x8xf32>
    %114 = arith.addf %112, %113 : vector<8x8xf32>
    %115 = arith.truncf %114 : vector<8x8xf32> to vector<8x8xbf16>
    %cst_92 = arith.constant dense<0.000000e+00> : vector<8x8xf32>
    %116 = tpu.matmul %109, %115, %cst_92 {dimension_numbers = #tpu.dot_dimension_numbers<[1], [1], [0], [0], [0, 0, 1, 0], [], []>} : vector<8x8xbf16>, vector<8x8xbf16>, vector<8x8xf32> -> vector<8x8xf32>
    %c0_93 = arith.constant 0 : index
    %c2_94 = arith.constant 2 : index
    %117 = vector.load %arg11[%c0_93, %c2_94] : memref<8x4xf32, #tpu.memory_space<vmem>>, vector<8x1xf32>
    %c0_95 = arith.constant 0 : index
    %c2_96 = arith.constant 2 : index
    %118 = vector.load %arg12[%c0_95, %c2_96] : memref<8x4xf32, #tpu.memory_space<vmem>>, vector<8x1xf32>
    %cst_97 = arith.constant dense<0xFF800000> : vector<8xf32>
    %119 = vector.multi_reduction <maximumf>, %116, %cst_97 [1] : vector<8x8xf32> to vector<8xf32>
    %120 = vector.shape_cast %119 : vector<8xf32> to vector<8x1xf32>
    %121 = arith.maximumf %117, %120 : vector<8x1xf32>
    %122 = arith.subf %117, %121 : vector<8x1xf32>
    %123 = math.exp %122 : vector<8x1xf32>
    %124 = vector.broadcast %121 : vector<8x1xf32> to vector<8x8xf32>
    %125 = arith.subf %116, %124 : vector<8x8xf32>
    %126 = math.exp %125 : vector<8x8xf32>
    %127 = arith.mulf %123, %118 : vector<8x1xf32>
    %cst_98 = arith.constant dense<0.000000e+00> : vector<8xf32>
    %128 = vector.multi_reduction <add>, %126, %cst_98 [1] : vector<8x8xf32> to vector<8xf32>
    %129 = vector.shape_cast %128 : vector<8xf32> to vector<8x1xf32>
    %130 = arith.addf %127, %129 : vector<8x1xf32>
    %c0_99 = arith.constant 0 : index
    %c2_100 = arith.constant 2 : index
    %131 = vector.load %arg12[%c0_99, %c2_100] : memref<8x4xf32, #tpu.memory_space<vmem>>, vector<8x1xf32>
    tpu.vector_store %arg12[%c0_99, %c2_100], %130 {strides = array<i32>} : memref<8x4xf32, #tpu.memory_space<vmem>>, vector<8x1xf32>,
    %132 = arith.truncf %126 : vector<8x8xf32> to vector<8x8xbf16>
    %cst_101 = arith.constant dense<0.000000e+00> : vector<8x8xf32>
    %133 = tpu.matmul %132, %101, %cst_101 {dimension_numbers = #tpu.dot_dimension_numbers<[1], [0], [0], [1], [0, 0, 1, 1], [], []>} : vector<8x8xbf16>, vector<8x8xbf16>, vector<8x8xf32> -> vector<8x8xf32>
    %c0_102 = arith.constant 0 : index
    %c16 = arith.constant 16 : index
    %134 = vector.load %arg13[%c0_102, %c16] : memref<8x32xf32, #tpu.memory_space<vmem>>, vector<8x8xf32>
    %135 = vector.broadcast %123 : vector<8x1xf32> to vector<8x8xf32>
    %136 = arith.mulf %135, %134 : vector<8x8xf32>
    %137 = arith.addf %136, %133 : vector<8x8xf32>
    %c0_103 = arith.constant 0 : index
    %c16_104 = arith.constant 16 : index
    %138 = vector.load %arg13[%c0_103, %c16_104] : memref<8x32xf32, #tpu.memory_space<vmem>>, vector<8x8xf32>
    tpu.vector_store %arg13[%c0_103, %c16_104], %137 {strides = array<i32>} : memref<8x32xf32, #tpu.memory_space<vmem>>, vector<8x8xf32>,
    %c0_105 = arith.constant 0 : index
    %c2_106 = arith.constant 2 : index
    %139 = vector.load %arg11[%c0_105, %c2_106] : memref<8x4xf32, #tpu.memory_space<vmem>>, vector<8x1xf32>
    tpu.vector_store %arg11[%c0_105, %c2_106], %121 {strides = array<i32>} : memref<8x4xf32, #tpu.memory_space<vmem>>, vector<8x1xf32>,
    %c0_107 = arith.constant 0 : index
    %c0_108 = arith.constant 0 : index
    %c0_109 = arith.constant 0 : index
    %c3 = arith.constant 3 : index
    %c0_110 = arith.constant 0 : index
    %140 = vector.load %arg7[%c0_107, %c0_108, %c0_109, %c3, %c0_110] : memref<1x8x1x4x8xbf16, #tpu.memory_space<vmem>>, vector<1x8x1x1x8xbf16>
    %141 = vector.shape_cast %140 : vector<1x8x1x1x8xbf16> to vector<8x8xbf16>
    %c0_111 = arith.constant 0 : index
    %c0_112 = arith.constant 0 : index
    %c0_113 = arith.constant 0 : index
    %c3_114 = arith.constant 3 : index
    %c0_115 = arith.constant 0 : index
    %142 = vector.load %arg8[%c0_111, %c0_112, %c0_113, %c3_114, %c0_115] : memref<1x8x1x4x8xbf16, #tpu.memory_space<vmem>>, vector<1x8x1x1x8xbf16>
    %143 = vector.shape_cast %142 : vector<1x8x1x1x8xbf16> to vector<8x8xbf16>
    %c0_116 = arith.constant 0 : index
    %c0_117 = arith.constant 0 : index
    %c0_118 = arith.constant 0 : index
    %c3_119 = arith.constant 3 : index
    %c0_120 = arith.constant 0 : index
    %144 = vector.load %arg9[%c0_116, %c0_117, %c0_118, %c3_119, %c0_120] : memref<1x8x1x4x8xbf16, #tpu.memory_space<vmem>>, vector<1x8x1x1x8xbf16>
    %145 = vector.shape_cast %144 : vector<1x8x1x1x8xbf16> to vector<8x8xbf16>
    %146 = arith.extf %141 : vector<8x8xbf16> to vector<8x8xf32>
    %cst_121 = arith.constant dense<0.000000e+00> : vector<8x8xf32>
    %147 = tpu.matmul %141, %7, %cst_121 {dimension_numbers = #tpu.dot_dimension_numbers<[1], [0], [0], [1], [0, 0, 1, 1], [], []>} : vector<8x8xbf16>, vector<8x8xbf16>, vector<8x8xf32> -> vector<8x8xf32>
    %148 = arith.mulf %146, %3 : vector<8x8xf32>
    %149 = arith.mulf %147, %4 : vector<8x8xf32>
    %150 = arith.addf %148, %149 : vector<8x8xf32>
    %cst_122 = arith.constant 0.353553385 : f32
    %151 = vector.broadcast %cst_122 : f32 to vector<8x8xf32>
    %152 = arith.mulf %150, %151 : vector<8x8xf32>
    %153 = arith.truncf %152 : vector<8x8xf32> to vector<8x8xbf16>
    %154 = arith.extf %143 : vector<8x8xbf16> to vector<8x8xf32>
    %cst_123 = arith.constant dense<0.000000e+00> : vector<8x8xf32>
    %155 = tpu.matmul %143, %7, %cst_123 {dimension_numbers = #tpu.dot_dimension_numbers<[1], [0], [0], [1], [0, 0, 1, 1], [], []>} : vector<8x8xbf16>, vector<8x8xbf16>, vector<8x8xf32> -> vector<8x8xf32>
    %156 = arith.mulf %154, %5 : vector<8x8xf32>
    %157 = arith.mulf %155, %6 : vector<8x8xf32>
    %158 = arith.addf %156, %157 : vector<8x8xf32>
    %159 = arith.truncf %158 : vector<8x8xf32> to vector<8x8xbf16>
    %cst_124 = arith.constant dense<0.000000e+00> : vector<8x8xf32>
    %160 = tpu.matmul %153, %159, %cst_124 {dimension_numbers = #tpu.dot_dimension_numbers<[1], [1], [0], [0], [0, 0, 1, 0], [], []>} : vector<8x8xbf16>, vector<8x8xbf16>, vector<8x8xf32> -> vector<8x8xf32>
    %c0_125 = arith.constant 0 : index
    %c3_126 = arith.constant 3 : index
    %161 = vector.load %arg11[%c0_125, %c3_126] : memref<8x4xf32, #tpu.memory_space<vmem>>, vector<8x1xf32>
    %c0_127 = arith.constant 0 : index
    %c3_128 = arith.constant 3 : index
    %162 = vector.load %arg12[%c0_127, %c3_128] : memref<8x4xf32, #tpu.memory_space<vmem>>, vector<8x1xf32>
    %cst_129 = arith.constant dense<0xFF800000> : vector<8xf32>
    %163 = vector.multi_reduction <maximumf>, %160, %cst_129 [1] : vector<8x8xf32> to vector<8xf32>
    %164 = vector.shape_cast %163 : vector<8xf32> to vector<8x1xf32>
    %165 = arith.maximumf %161, %164 : vector<8x1xf32>
    %166 = arith.subf %161, %165 : vector<8x1xf32>
    %167 = math.exp %166 : vector<8x1xf32>
    %168 = vector.broadcast %165 : vector<8x1xf32> to vector<8x8xf32>
    %169 = arith.subf %160, %168 : vector<8x8xf32>
    %170 = math.exp %169 : vector<8x8xf32>
    %171 = arith.mulf %167, %162 : vector<8x1xf32>
    %cst_130 = arith.constant dense<0.000000e+00> : vector<8xf32>
    %172 = vector.multi_reduction <add>, %170, %cst_130 [1] : vector<8x8xf32> to vector<8xf32>
    %173 = vector.shape_cast %172 : vector<8xf32> to vector<8x1xf32>
    %174 = arith.addf %171, %173 : vector<8x1xf32>
    %c0_131 = arith.constant 0 : index
    %c3_132 = arith.constant 3 : index
    %175 = vector.load %arg12[%c0_131, %c3_132] : memref<8x4xf32, #tpu.memory_space<vmem>>, vector<8x1xf32>
    tpu.vector_store %arg12[%c0_131, %c3_132], %174 {strides = array<i32>} : memref<8x4xf32, #tpu.memory_space<vmem>>, vector<8x1xf32>,
    %176 = arith.truncf %170 : vector<8x8xf32> to vector<8x8xbf16>
    %cst_133 = arith.constant dense<0.000000e+00> : vector<8x8xf32>
    %177 = tpu.matmul %176, %145, %cst_133 {dimension_numbers = #tpu.dot_dimension_numbers<[1], [0], [0], [1], [0, 0, 1, 1], [], []>} : vector<8x8xbf16>, vector<8x8xbf16>, vector<8x8xf32> -> vector<8x8xf32>
    %c0_134 = arith.constant 0 : index
    %c24 = arith.constant 24 : index
    %178 = vector.load %arg13[%c0_134, %c24] : memref<8x32xf32, #tpu.memory_space<vmem>>, vector<8x8xf32>
    %179 = vector.broadcast %167 : vector<8x1xf32> to vector<8x8xf32>
    %180 = arith.mulf %179, %178 : vector<8x8xf32>
    %181 = arith.addf %180, %177 : vector<8x8xf32>
    %c0_135 = arith.constant 0 : index
    %c24_136 = arith.constant 24 : index
    %182 = vector.load %arg13[%c0_135, %c24_136] : memref<8x32xf32, #tpu.memory_space<vmem>>, vector<8x8xf32>
    tpu.vector_store %arg13[%c0_135, %c24_136], %181 {strides = array<i32>} : memref<8x32xf32, #tpu.memory_space<vmem>>, vector<8x8xf32>,
    %c0_137 = arith.constant 0 : index
    %c3_138 = arith.constant 3 : index
    %183 = vector.load %arg11[%c0_137, %c3_138] : memref<8x4xf32, #tpu.memory_space<vmem>>, vector<8x1xf32>
    tpu.vector_store %arg11[%c0_137, %c3_138], %165 {strides = array<i32>} : memref<8x4xf32, #tpu.memory_space<vmem>>, vector<8x1xf32>,
    %c0_i32_139 = arith.constant 0 : i32
    %184 = arith.cmpi eq, %arg1, %c0_i32_139 : i32
    %185 = arith.extui %184 : i1 to i32
    %c0_i32_140 = arith.constant 0 : i32
    %186 = arith.cmpi ne, %185, %c0_i32_140 : i32
    scf.if %186 {
      %c0_141 = arith.constant 0 : index
      %c0_142 = arith.constant 0 : index
      %187 = vector.load %arg12[%c0_141, %c0_142] : memref<8x4xf32, #tpu.memory_space<vmem>>, vector<8x1xf32>
      %188 = tpu.reciprocal %187 {approx = true} : vector<8x1xf32> -> vector<8x1xf32>
      %c0_143 = arith.constant 0 : index
      %c0_144 = arith.constant 0 : index
      %189 = vector.load %arg13[%c0_143, %c0_144] : memref<8x32xf32, #tpu.memory_space<vmem>>, vector<8x8xf32>
      %190 = vector.broadcast %188 : vector<8x1xf32> to vector<8x8xf32>
      %191 = arith.mulf %189, %190 : vector<8x8xf32>
      %c0_145 = arith.constant 0 : index
      %c1_146 = arith.constant 1 : index
      %192 = vector.load %arg12[%c0_145, %c1_146] : memref<8x4xf32, #tpu.memory_space<vmem>>, vector<8x1xf32>
      %193 = tpu.reciprocal %192 {approx = true} : vector<8x1xf32> -> vector<8x1xf32>
      %c0_147 = arith.constant 0 : index
      %c8_148 = arith.constant 8 : index
      %194 = vector.load %arg13[%c0_147, %c8_148] : memref<8x32xf32, #tpu.memory_space<vmem>>, vector<8x8xf32>
      %195 = vector.broadcast %193 : vector<8x1xf32> to vector<8x8xf32>
      %196 = arith.mulf %194, %195 : vector<8x8xf32>
      %c0_149 = arith.constant 0 : index
      %c2_150 = arith.constant 2 : index
      %197 = vector.load %arg12[%c0_149, %c2_150] : memref<8x4xf32, #tpu.memory_space<vmem>>, vector<8x1xf32>
      %198 = tpu.reciprocal %197 {approx = true} : vector<8x1xf32> -> vector<8x1xf32>
      %c0_151 = arith.constant 0 : index
      %c16_152 = arith.constant 16 : index
      %199 = vector.load %arg13[%c0_151, %c16_152] : memref<8x32xf32, #tpu.memory_space<vmem>>, vector<8x8xf32>
      %200 = vector.broadcast %198 : vector<8x1xf32> to vector<8x8xf32>
      %201 = arith.mulf %199, %200 : vector<8x8xf32>
      %c0_153 = arith.constant 0 : index
      %c3_154 = arith.constant 3 : index
      %202 = vector.load %arg12[%c0_153, %c3_154] : memref<8x4xf32, #tpu.memory_space<vmem>>, vector<8x1xf32>
      %203 = tpu.reciprocal %202 {approx = true} : vector<8x1xf32> -> vector<8x1xf32>
      %c0_155 = arith.constant 0 : index
      %c24_156 = arith.constant 24 : index
      %204 = vector.load %arg13[%c0_155, %c24_156] : memref<8x32xf32, #tpu.memory_space<vmem>>, vector<8x8xf32>
      %205 = vector.broadcast %203 : vector<8x1xf32> to vector<8x8xf32>
      %206 = arith.mulf %204, %205 : vector<8x8xf32>
      %207 = tpu.concatenate %191, %196, %201, %206 in 1 : vector<8x8xf32>, vector<8x8xf32>, vector<8x8xf32>, vector<8x8xf32> -> vector<8x32xf32>
      %208 = arith.truncf %207 : vector<8x32xf32> to vector<8x32xbf16>
      %c0_157 = arith.constant 0 : index
      %c0_158 = arith.constant 0 : index
      %c0_159 = arith.constant 0 : index
      %209 = vector.load %arg10[%c0_157, %c0_158, %c0_159] : memref<1x8x32xbf16, #tpu.memory_space<vmem>>, vector<1x8x32xbf16>
      %210 = vector.shape_cast %209 : vector<1x8x32xbf16> to vector<8x32xbf16>
      %211 = vector.shape_cast %208 : vector<8x32xbf16> to vector<1x8x32xbf16>
      tpu.vector_store %arg10[%c0_157, %c0_158, %c0_159], %211 {strides = array<i32>} : memref<1x8x32xbf16, #tpu.memory_space<vmem>>, vector<1x8x32xbf16>,
    } else {
    }
    return
  }
  func.func @transform_0(%arg0: i32, %arg1: i32) -> (i32, i32) {
    %c0_i32 = arith.constant 0 : i32
    %c0_i32_0 = arith.constant 0 : i32
    %c0_i32_1 = arith.constant 0 : i32
    return %c0_i32, %c0_i32_0 : i32, i32
  }
  func.func @transform_1(%arg0: i32, %arg1: i32) -> (i32, i32) {
    %c0_i32 = arith.constant 0 : i32
    %c0_i32_0 = arith.constant 0 : i32
    %c0_i32_1 = arith.constant 0 : i32
    return %c0_i32, %c0_i32_0 : i32, i32
  }
  func.func @transform_2(%arg0: i32, %arg1: i32) -> (i32, i32) {
    %c0_i32 = arith.constant 0 : i32
    %c0_i32_0 = arith.constant 0 : i32
    return %arg1, %c0_i32 : i32, i32
  }
  func.func @transform_3(%arg0: i32, %arg1: i32) -> (i32, i32) {
    %c0_i32 = arith.constant 0 : i32
    %c0_i32_0 = arith.constant 0 : i32
    return %arg1, %c0_i32 : i32, i32
  }
  func.func @transform_4(%arg0: i32, %arg1: i32) -> (i32, i32) {
    %c0_i32 = arith.constant 0 : i32
    %c0_i32_0 = arith.constant 0 : i32
    %c0_i32_1 = arith.constant 0 : i32
    return %c0_i32, %c0_i32_0 : i32, i32
  }
  func.func @transform_5(%arg0: i32, %arg1: i32) -> (i32, i32, i32, i32, i32) {
    %c0_i32 = arith.constant 0 : i32
    %c0_i32_0 = arith.constant 0 : i32
    %c0_i32_1 = arith.constant 0 : i32
    %c0_i32_2 = arith.constant 0 : i32
    %c0_i32_3 = arith.constant 0 : i32
    return %arg0, %c0_i32, %c0_i32_0, %c0_i32_1, %c0_i32_2 : i32, i32, i32, i32, i32
  }
  func.func @transform_6(%arg0: i32, %arg1: i32) -> (i32, i32, i32, i32, i32) {
    %c1_i32 = arith.constant 1 : i32
    %c0_i32 = arith.constant 0 : i32
    %c0_i32_0 = arith.constant 0 : i32
    %c0_i32_1 = arith.constant 0 : i32
    return %arg0, %arg1, %c1_i32, %c0_i32, %c0_i32_0 : i32, i32, i32, i32, i32
  }
  func.func @transform_7(%arg0: i32, %arg1: i32) -> (i32, i32, i32, i32, i32) {
    %c2_i32 = arith.constant 2 : i32
    %c0_i32 = arith.constant 0 : i32
    %c0_i32_0 = arith.constant 0 : i32
    %c0_i32_1 = arith.constant 0 : i32
    return %arg0, %arg1, %c2_i32, %c0_i32, %c0_i32_0 : i32, i32, i32, i32, i32
  }
  func.func @transform_8(%arg0: i32, %arg1: i32) -> (i32, i32, i32) {
    %c0_i32 = arith.constant 0 : i32
    %c0_i32_0 = arith.constant 0 : i32
    %c0_i32_1 = arith.constant 0 : i32
    return %arg0, %c0_i32, %c0_i32_0 : i32, i32, i32
  }
}

</mosaic_0001>

<llo_original>
// kernel: _lambda_.3
$region0: #{_lambda_.3}
  #allocation0 [shape = 'u32[]', space=smem, size = 0x4, offset = 0x4, fixed_abs, tag = 'smem constant byte address 0x4 - core index']
  #allocation1 [shape = 'u32[144,128]{1,0:T(1,128)}', space=vmem, size = 0x12000, scoped, tag = 'internal scratch']
  #allocation2 [shape = 'f32[16,96]{1,0:T(8,128)}', space=vmem, size = 0x2000, scoped, tag = 'scratch operand']
  %s0 = inlined_call_operand.vmem [shape: bf16[16,32], index: 0, kind: input, shape index: {}]
  %s1 = inlined_call_operand.vmem [shape: bf16[32,96], index: 1, kind: input, shape index: {}]
  %s2 = inlined_call_operand.vmem [shape: f32[1,96], index: 2, kind: input, shape index: {}]
  %s3 = inlined_call_operand.vmem [shape: bf16[16,96], index: 3, kind: output, shape index: {}]
  %s4 = sld [smem:[#allocation0]]
  $region30: #{_lambda_.3} parent=0
    _
  %s6 = ssub.s32 1, %s4
  %s7 = scalar_select 0, %s6, %s4
  // Predicated region
  $region2: #{_lambda_.3} parent=0 // pred_check
    _
  $region3: #{_lambda_.3} parent=0 // pred_check_branch
    %9 = sbr.rel (0) target = $region5
  $region4: #{_lambda_.3} parent=0 // pred_region
    _
  $region5: #{_lambda_.3} parent=0 // pred_fallthru
    _
  // Predicated region
  $region6: #{_lambda_.3} parent=0 // pred_check
    _
  $region7: #{_lambda_.3} parent=0 // pred_check_branch
    %11 = sbr.rel (0) target = $region9
  $region8: #{_lambda_.3} parent=0 // pred_region
    _
  $region9: #{_lambda_.3} parent=0 // pred_fallthru
    _
  // Predicated region
  $region10: #{_lambda_.3} parent=0 // pred_check
    _
  $region11: #{_lambda_.3} parent=0 // pred_check_branch
    %13 = sbr.rel (0) target = $region13
  $region12: #{_lambda_.3} parent=0 // pred_region
    _
  $region13: #{_lambda_.3} parent=0 // pred_fallthru
    _
  %p15 = scmp.eq.s32.totalorder 0, 0
  // Predicated region
  $region14: #{_lambda_.3} parent=0 // pred_check
    %p16 = pneg %p15
  $region15: #{_lambda_.3} parent=0 // pred_check_branch
    %18 = sbr.rel (%p16) target = $region17
  $region16: #{_lambda_.3} parent=0 // pred_region
    %vm19 = vcmask 785408
    %20 = vst.msk [vmem:[#allocation2] sm:$0xff] %vm19, 0.0
    %21 = vst.msk [vmem:[#allocation2 + $0x8] sm:$0xff] %vm19, 0.0
  $region17: #{_lambda_.3} parent=0 // pred_fallthru
    _
  %v22 = vld [vmem:[#allocation2] sm:$0xff]
  %v23 = vld [vmem:[#allocation2 + $0x8] sm:$0xff]
  %v24 = vld [vmem:[%s0] sm:$0xf]
  %v25 = vld [vmem:[%s0 + $0x4] sm:$0xf]
  %v26 = vld [vmem:[%s1] sm:$0xf]
  %v27 = vld [vmem:[%s1 + $0x4] sm:$0xf]
  %v28 = vld [vmem:[%s1 + $0x8] sm:$0xf]
  %v29 = vld [vmem:[%s1 + $0xc] sm:$0xf]
  %v32 = vunpack.c.l.b16 %v24
  %v33 = vunpack.c.l.b16 %v25
  %v34 = vpack.c.b16 %v33, %v32
  %v39 = vunpack.c.l.b16 %v26
  %v40 = vunpack.c.l.b16 %v27
  %v41 = vunpack.c.l.b16 %v28
  %v42 = vunpack.c.l.b16 %v29
  %v43 = vpack.c.b16 %v40, %v39
  %v44 = vpack.c.b16 %v42, %v41
  %vm47 = vcmask 261120
  %v49 = vsel %vm47, %v34, 0
  %51 = vmatprep.subr.bf16.mxu0 0
  %52 = vmatpush1.bf16.msra.mxu0 %v43
  %53 = vmatprep.subr.bf16.mxu0 0
  %54 = vmatpush1.bf16.msra.mxu0 %v44
  %55 = vmatprep.subr.bf16.mxu0 0
  %56 = vmatpush1.bf16.msra.mxu0 0
  %57 = vmatprep.subr.bf16.mxu0 0
  %58 = vmatpush1.bf16.msra.mxu0 0
  %59 = vmatprep.subr.bf16.mxu0 0
  %60 = vmatpush1.bf16.msra.mxu0 0
  %61 = vmatprep.subr.bf16.mxu0 0
  %62 = vmatpush1.bf16.msra.mxu0 0
  %63 = vmatprep.subr.bf16.mxu0 0
  %64 = vmatpush1.bf16.msra.mxu0 0
  %65 = vmatprep.subr.bf16.mxu0 0
  %66 = vmatpush1.bf16.msra.mxu0 0
  %67 = vmatprep.subr.bf16.mxu0 0
  %68 = vmatpush1.bf16.msra.mxu0 0
  %69 = vmatprep.subr.bf16.mxu0 0
  %70 = vmatpush1.bf16.msra.mxu0 0
  %71 = vmatprep.subr.bf16.mxu0 0
  %72 = vmatpush1.bf16.msra.mxu0 0
  %73 = vmatprep.subr.bf16.mxu0 0
  %74 = vmatpush1.bf16.msra.mxu0 0
  %75 = vmatprep.subr.bf16.mxu0 0
  %76 = vmatpush1.bf16.msra.mxu0 0
  %77 = vmatprep.subr.bf16.mxu0 0
  %78 = vmatpush1.bf16.msra.mxu0 0
  %79 = vmatprep.subr.bf16.mxu0 0
  %80 = vmatpush1.bf16.msra.mxu0 0
  %81 = vmatprep.subr.bf16.mxu0 0
  %82 = vmatpush1.bf16.msra.mxu0 0
  %83 = vmatprep.mubr.bf16.mxu0 0
  %84 = vmatmul.mubr.bf16.gmra.mrb[0].mxu0 %v49
  %v85 = vpop.f32.mrb[0].mxu0
  %v86 = vadd.f32 0.0, %v85
  %v87 = vpop.f32.mrb[0].mxu0
  %v88 = vpop.f32.mrb[0].mxu0
  %v89 = vadd.f32 0.0, %v88
  %v90 = vpop.f32.mrb[0].mxu0
  %91 = vdwg.mxu0
  %v92 = vadd.f32 %v22, %v86
  %v93 = vadd.f32 %v23, %v89
  %vm94 = vcmask 785408
  %95 = vst.msk [vmem:[#allocation2] sm:$0xff] %vm94, %v92
  %96 = vst.msk [vmem:[#allocation2 + $0x8] sm:$0xff] %vm94, %v93
  // Predicated region
  $region18: #{_lambda_.3} parent=0 // pred_check
    %p97 = pneg %p15
  $region19: #{_lambda_.3} parent=0 // pred_check_branch
    %99 = sbr.rel (%p97) target = $region21
  $region20: #{_lambda_.3} parent=0 // pred_region
    %v100 = vld [vmem:[#allocation2] sm:$0xff]
    %v101 = vld [vmem:[#allocation2 + $0x8] sm:$0xff]
    %v102 = vld [vmem:[%s2] sm:$0x1]
    %v104 = vlaneseq
    %v105 = vshrl.u32 %v104, 7
    %v106 = vsub.s32 0, %v105
    %v107 = vrot.slane %v102, %v106
    %v109 = vadd.f32 %v100, %v107
    %v110 = vadd.f32 %v101, %v107
    %v111 = vpack.c.bf16 %v110, %v109
    %v113 = vunpack.c.l.b16 %v111
    %v114 = vunpack.c.h.b16 %v111
    %v115 = vpack.c.b16 %v113, %v113
    %v116 = vpack.c.b16 %v114, %v114
    %vm119 = vcmask 781312
    %120 = vst.msk [vmem:[%s3] sm:$0xf] %vm119, %v115
    %121 = vst.msk [vmem:[%s3 + $0x4] sm:$0xf] %vm119, %v116
  $region21: #{_lambda_.3} parent=0 // pred_fallthru
    _
  // Predicated region
  $region22: #{_lambda_.3} parent=0 // pred_check
    _
  $region23: #{_lambda_.3} parent=0 // pred_check_branch
    %123 = sbr.rel (0) target = $region25
  $region24: #{_lambda_.3} parent=0 // pred_region
    _
  $region25: #{_lambda_.3} parent=0 // pred_fallthru
    _
  // Predicated region
  $region26: #{_lambda_.3} parent=0 // pred_check
    _
  $region27: #{_lambda_.3} parent=0 // pred_check_branch
    %125 = sbr.rel (0) target = $region29
  $region28: #{_lambda_.3} parent=0 // pred_region
    _
  $region29: #{_lambda_.3} parent=0 // pred_fallthru
    _

// kernel: _lambda_.5
$region0: #{_lambda_.5}
  #allocation0 [shape = 'u32[]', space=smem, size = 0x4, offset = 0x4, fixed_abs, tag = 'smem constant byte address 0x4 - core index']
  #allocation1 [shape = 'u32[144,128]{1,0:T(1,128)}', space=vmem, size = 0x12000, scoped, tag = 'internal scratch']
  #allocation2 [shape = 'f32[16,32]{1,0:T(8,128)}', space=vmem, size = 0x2000, scoped, tag = 'scratch operand']
  %s0 = inlined_call_operand.vmem [shape: bf16[16,32], index: 0, kind: input, shape index: {}]
  %s1 = inlined_call_operand.vmem [shape: bf16[32,32], index: 1, kind: input, shape index: {}]
  %s2 = inlined_call_operand.vmem [shape: f32[1,32], index: 2, kind: input, shape index: {}]
  %s3 = inlined_call_operand.hbm [shape: f32[16,32], index: 3, kind: output, shape index: {}]
  %s4 = sld [smem:[#allocation0]]
  $region30: #{_lambda_.5} parent=0
    _
  %s6 = ssub.s32 1, %s4
  %s7 = scalar_select 0, %s6, %s4
  $region1: #{_lambda_.5} parent=0
    #allocation3 [shape = 'u8[8192]{0}', space=vmem, size = 0x2000, scoped, tag = 'output window, operand 0, single buffered']
    #allocation4 [shape = 's32[1]{0}', space=sflag, size = 0x4, scoped, tag = 'scoped memory for _lambda_.5']
    %8 = vsyncpa [#allocation4], 0
    // Predicated region
    $region2: #{_lambda_.5} parent=1 // pred_check
      _
    $region3: #{_lambda_.5} parent=1 // pred_check_branch
      %10 = sbr.rel (0) target = $region5
    $region4: #{_lambda_.5} parent=1 // pred_region
      _
    $region5: #{_lambda_.5} parent=1 // pred_fallthru
      _
    // Predicated region
    $region6: #{_lambda_.5} parent=1 // pred_check
      _
    $region7: #{_lambda_.5} parent=1 // pred_check_branch
      %12 = sbr.rel (0) target = $region9
    $region8: #{_lambda_.5} parent=1 // pred_region
      _
    $region9: #{_lambda_.5} parent=1 // pred_fallthru
      _
    // Predicated region
    $region10: #{_lambda_.5} parent=1 // pred_check
      _
    $region11: #{_lambda_.5} parent=1 // pred_check_branch
      %14 = sbr.rel (0) target = $region13
    $region12: #{_lambda_.5} parent=1 // pred_region
      _
    $region13: #{_lambda_.5} parent=1 // pred_fallthru
      _
    %p16 = scmp.eq.s32.totalorder 0, 0
    // Predicated region
    $region14: #{_lambda_.5} parent=1 // pred_check
      %p17 = pneg %p16
    $region15: #{_lambda_.5} parent=1 // pred_check_branch
      %19 = sbr.rel (%p17) target = $region17
    $region16: #{_lambda_.5} parent=1 // pred_region
      %vm20 = vcmask 261120
      %21 = vst.msk [vmem:[#allocation2] sm:$0xff] %vm20, 0.0
      %22 = vst.msk [vmem:[#allocation2 + $0x8] sm:$0xff] %vm20, 0.0
    $region17: #{_lambda_.5} parent=1 // pred_fallthru
      _
    %v23 = vld [vmem:[#allocation2] sm:$0xff]
    %v24 = vld [vmem:[#allocation2 + $0x8] sm:$0xff]
    %v25 = vld [vmem:[%s0] sm:$0xf]
    %v26 = vld [vmem:[%s0 + $0x4] sm:$0xf]
    %v27 = vld [vmem:[%s1] sm:$0xf]
    %v28 = vld [vmem:[%s1 + $0x4] sm:$0xf]
    %v29 = vld [vmem:[%s1 + $0x8] sm:$0xf]
    %v30 = vld [vmem:[%s1 + $0xc] sm:$0xf]
    %v33 = vunpack.c.l.b16 %v25
    %v34 = vunpack.c.l.b16 %v26
    %v35 = vpack.c.b16 %v34, %v33
    %v40 = vunpack.c.l.b16 %v27
    %v41 = vunpack.c.l.b16 %v28
    %v42 = vunpack.c.l.b16 %v29
    %v43 = vunpack.c.l.b16 %v30
    %v44 = vpack.c.b16 %v41, %v40
    %v45 = vpack.c.b16 %v43, %v42
    %vm48 = vcmask 261120
    %v50 = vsel %vm48, %v35, 0
    %52 = vmatprep.subr.bf16.mxu0 0
    %53 = vmatpush1.bf16.msra.mxu0 %v44
    %54 = vmatprep.subr.bf16.mxu0 0
    %55 = vmatpush1.bf16.msra.mxu0 %v45
    %56 = vmatprep.subr.bf16.mxu0 0
    %57 = vmatpush1.bf16.msra.mxu0 0
    %58 = vmatprep.subr.bf16.mxu0 0
    %59 = vmatpush1.bf16.msra.mxu0 0
    %60 = vmatprep.subr.bf16.mxu0 0
    %61 = vmatpush1.bf16.msra.mxu0 0
    %62 = vmatprep.subr.bf16.mxu0 0
    %63 = vmatpush1.bf16.msra.mxu0 0
    %64 = vmatprep.subr.bf16.mxu0 0
    %65 = vmatpush1.bf16.msra.mxu0 0
    %66 = vmatprep.subr.bf16.mxu0 0
    %67 = vmatpush1.bf16.msra.mxu0 0
    %68 = vmatprep.subr.bf16.mxu0 0
    %69 = vmatpush1.bf16.msra.mxu0 0
    %70 = vmatprep.subr.bf16.mxu0 0
    %71 = vmatpush1.bf16.msra.mxu0 0
    %72 = vmatprep.subr.bf16.mxu0 0
    %73 = vmatpush1.bf16.msra.mxu0 0
    %74 = vmatprep.subr.bf16.mxu0 0
    %75 = vmatpush1.bf16.msra.mxu0 0
    %76 = vmatprep.subr.bf16.mxu0 0
    %77 = vmatpush1.bf16.msra.mxu0 0
    %78 = vmatprep.subr.bf16.mxu0 0
    %79 = vmatpush1.bf16.msra.mxu0 0
    %80 = vmatprep.subr.bf16.mxu0 0
    %81 = vmatpush1.bf16.msra.mxu0 0
    %82 = vmatprep.subr.bf16.mxu0 0
    %83 = vmatpush1.bf16.msra.mxu0 0
    %84 = vmatprep.mubr.bf16.mxu0 0
    %85 = vmatmul.mubr.bf16.gmra.mrb[0].mxu0 %v50
    %v86 = vpop.f32.mrb[0].mxu0
    %v87 = vadd.f32 0.0, %v86
    %v88 = vpop.f32.mrb[0].mxu0
    %v89 = vpop.f32.mrb[0].mxu0
    %v90 = vadd.f32 0.0, %v89
    %v91 = vpop.f32.mrb[0].mxu0
    %92 = vdwg.mxu0
    %v93 = vadd.f32 %v23, %v87
    %v94 = vadd.f32 %v24, %v90
    %95 = vst.msk [vmem:[#allocation2] sm:$0xff] %vm48, %v93
    %96 = vst.msk [vmem:[#allocation2 + $0x8] sm:$0xff] %vm48, %v94
    // Predicated region
    $region18: #{_lambda_.5} parent=1 // pred_check
      %p97 = pneg %p16
    $region19: #{_lambda_.5} parent=1 // pred_check_branch
      %99 = sbr.rel (%p97) target = $region21
    $region20: #{_lambda_.5} parent=1 // pred_region
      %v100 = vld [vmem:[#allocation2] sm:$0xff]
      %v101 = vld [vmem:[#allocation2 + $0x8] sm:$0xff]
      %v102 = vld [vmem:[%s2] sm:$0x1]
      %v104 = vlaneseq
      %v105 = vshrl.u32 %v104, 7
      %v106 = vsub.s32 0, %v105
      %v107 = vrot.slane %v102, %v106
      %v109 = vadd.f32 %v100, %v107
      %v110 = vadd.f32 %v101, %v107
      %111 = vst.msk [vmem:[#allocation3] sm:$0xff] %vm48, %v109
      %112 = vst.msk [vmem:[#allocation3 + $0x8] sm:$0xff] %vm48, %v110
    $region21: #{_lambda_.5} parent=1 // pred_fallthru
      _
    // Predicated region
    $region22: #{_lambda_.5} parent=1 // pred_check
      _
    $region23: #{_lambda_.5} parent=1 // pred_check_branch
      %114 = sbr.rel (0) target = $region25
    $region24: #{_lambda_.5} parent=1 // pred_region
      %s116 = ssub.s32 256, 256
      %117 = vsyncadd [#allocation4], %s116
      %s118 = sshll.u32 [#allocation3], 4
      %s119 = int_to_ptr.vmem [resolvable:$true] %s118
      %124 = dma.vmem_to_hbm [thread:$0]  %s119, 256, %s3, [#allocation4], 128, 128, 8
    $region25: #{_lambda_.5} parent=1 // pred_fallthru
      _
    // Predicated region
    $region26: #{_lambda_.5} parent=1 // pred_check
      _
    $region27: #{_lambda_.5} parent=1 // pred_check_branch
      %126 = sbr.rel (0) target = $region29
    $region28: #{_lambda_.5} parent=1 // pred_region
      %127 = dma.done [#allocation4], 256
    $region29: #{_lambda_.5} parent=1 // pred_fallthru
      _
    %128 = vsyncpa [#allocation4], 1

// kernel: _lambda_.4
$region0: #{_lambda_.4}
  #allocation0 [shape = 'u32[]', space=smem, size = 0x4, offset = 0x4, fixed_abs, tag = 'smem constant byte address 0x4 - core index']
  #allocation1 [shape = 'u32[144,128]{1,0:T(1,128)}', space=vmem, size = 0x12000, scoped, tag = 'internal scratch']
  #allocation2 [shape = 'f32[8,4]{1,0:T(8,128)}', space=vmem, size = 0x1000, scoped, tag = 'scratch operand']
  #allocation3 [shape = 'f32[8,4]{1,0:T(8,128)}', space=vmem, size = 0x1000, scoped, tag = 'scratch operand']
  #allocation4 [shape = 'f32[8,32]{1,0:T(8,128)}', space=vmem, size = 0x1000, scoped, tag = 'scratch operand']
  %s0 = inlined_call_operand.vmem [shape: f32[8,8], index: 0, kind: input, shape index: {}, may-alias: {0,2}]
  %s1 = inlined_call_operand.vmem [shape: f32[8,8], index: 1, kind: input, shape index: {}, may-alias: {1,3}]
  %s2 = inlined_call_operand.vmem [shape: f32[8,8], index: 2, kind: input, shape index: {}, may-alias: {0,2}]
  %s3 = inlined_call_operand.vmem [shape: f32[8,8], index: 3, kind: input, shape index: {}, may-alias: {1,3}]
  %s4 = inlined_call_operand.vmem [shape: bf16[8,8], index: 4, kind: input, shape index: {}]
  %s5 = inlined_call_operand.vmem [shape: bf16[2,8,3,4,8], index: 5, kind: input, shape index: {}, may-alias: {5,6,7}]
  %s6 = inlined_call_operand.vmem [shape: bf16[2,8,3,4,8], index: 6, kind: input, shape index: {}, may-alias: {5,6,7}]
  %s7 = inlined_call_operand.vmem [shape: bf16[2,8,3,4,8], index: 7, kind: input, shape index: {}, may-alias: {5,6,7}]
  %s8 = inlined_call_operand.vmem [shape: bf16[2,8,32], index: 8, kind: output, shape index: {}]
  %s9 = sld [smem:[#allocation0]]
  $region196: #{_lambda_.4} parent=0
    _
  %s11 = ssub.s32 1, %s9
  %s12 = scalar_select 0, %s11, %s9
  $region1: #{_lambda_.4} parent=0
    #allocation5 [shape = 'u8[16384]{0}', space=vmem, size = 0x4000, scoped, tag = 'input window, operand 5']
    #allocation6 [shape = 'u8[16384]{0}', space=vmem, size = 0x4000, scoped, tag = 'input window, operand 6']
    #allocation7 [shape = 'u8[16384]{0}', space=vmem, size = 0x4000, scoped, tag = 'input window, operand 7']
    loop: start=0, step=1, limit=4
    $region2: #{_lambda_.4} parent=1 // loop_pre_header
      _
    $region3: #{_lambda_.4} parent=1 // loop_header
      %s14 = sphi 0, %s18
      %p15 = scmp.ge.s32.totalorder %s14, 4
      %s21 = sphi 0, %s33
      %s22 = sphi 0, %s29
      %s23 = sphi 0, %s21
      %s24 = sphi 0, %s22
      %s25 = sphi 0, %s23
      %s26 = sphi 0, %s24
      %s34 = sphi 0, %s34
      %s36 = sphi 0, %s34
      %s37 = sphi 0, %s36
      %s51 = sphi 0, %s37
      %s55 = sphi 0, %s55
      %s57 = sphi 0, %s55
      %s58 = sphi 0, %s57
      %s72 = sphi 0, %s58
      %s78 = sphi 0, %s80
      %s81 = sphi 0, %s78
      %s82 = sphi 0, %s81
      %s98 = sphi 0, %s82
      %s104 = sphi 0, %s106
      %s107 = sphi 0, %s104
      %s108 = sphi 0, %s107
      %s124 = sphi 0, %s108
      %s128 = sphi 0, %s128
      %s130 = sphi 0, %s128
      %s131 = sphi 0, %s130
      %s145 = sphi 0, %s131
      %s151 = sphi 0, %s153
      %s154 = sphi 0, %s151
      %s155 = sphi 0, %s154
      %s171 = sphi 0, %s155
      %s179 = sphi 0, %s181
      %s182 = sphi 0, %s179
      %s183 = sphi 0, %s182
      %s199 = sphi 0, %s183
      %s207 = sphi 0, %s209
      %s210 = sphi 0, %s207
      %s211 = sphi 0, %s210
      %s227 = sphi 0, %s211
      %s233 = sphi 0, %s235
      %s236 = sphi 0, %s233
      %s237 = sphi 0, %s236
      %s253 = sphi 0, %s237
    $region4: #{_lambda_.4} parent=1 // loop_header_branch
      %17 = sbr.rel (%p15) target = $region8
    $region5: #{_lambda_.4} parent=1 // loop_body
      %s19 = ssub.s32 %s14, 1
      %s20 = ssub.s32 %s14, 2
      %s27 = sadd.s32 1, %s22
      %p28 = scmp.ge.s32.totalorder %s27, 1
      %s29 = scalar_select %p28, 0, %s27
      %s30 = sadd.s32 1, %s21
      %s31 = scalar_select %p28, %s30, %s21
      %p32 = scmp.ge.s32.totalorder %s31, 2
      %s33 = scalar_select %p32, 0, %s31
      %s35 = sadd.s32 %s34, 1
      %p38 = scmp.eq.s32.totalorder %s14, 1
      %p39 = scmp.ne.s32.totalorder %s34, %s36
      %p40 = scmp.eq.s32.totalorder %s14, 0
      %p41 = por %p39, %p40
      %p42 = scmp.ne.s32.totalorder %s34, %s36
      %p43 = scmp.eq.s32.totalorder %s19, 1
      %p44 = por %p42, %p43
      %p45 = scmp.ne.s32.totalorder %s36, %s37
      %p46 = scmp.eq.s32.totalorder %s19, 0
      %p47 = por %p45, %p46
      %p48 = scmp.ne.s32.totalorder %s36, %s37
      %p49 = scmp.eq.s32.totalorder %s20, 1
      %p50 = por %p48, %p49
      %p52 = scmp.ne.s32.totalorder %s37, %s51
      %p53 = scmp.eq.s32.totalorder %s20, 0
      %p54 = por %p52, %p53
      %s56 = sadd.s32 %s55, 1
      %p59 = scmp.eq.s32.totalorder %s14, 1
      %p60 = scmp.ne.s32.totalorder %s55, %s57
      %p61 = scmp.eq.s32.totalorder %s14, 0
      %p62 = por %p60, %p61
      %p63 = scmp.ne.s32.totalorder %s55, %s57
      %p64 = scmp.eq.s32.totalorder %s19, 1
      %p65 = por %p63, %p64
      %p66 = scmp.ne.s32.totalorder %s57, %s58
      %p67 = scmp.eq.s32.totalorder %s19, 0
      %p68 = por %p66, %p67
      %p69 = scmp.ne.s32.totalorder %s57, %s58
      %p70 = scmp.eq.s32.totalorder %s20, 1
      %p71 = por %p69, %p70
      %p73 = scmp.ne.s32.totalorder %s58, %s72
      %p74 = scmp.eq.s32.totalorder %s20, 0
      %p75 = por %p73, %p74
      %s76 = ssub.s32 %s22, %s29
      %p77 = scmp.eq.s32.totalorder %s76, 0
      %s79 = sadd.s32 %s78, 1
      %s80 = scalar_select %p77, %s78, %s79
      %p83 = pneg %p77
      %p84 = scmp.eq.s32.totalorder %s14, 1
      %p85 = por %p83, %p84
      %p86 = scmp.ne.s32.totalorder %s78, %s81
      %p87 = scmp.eq.s32.totalorder %s14, 0
      %p88 = por %p86, %p87
      %p89 = scmp.ne.s32.totalorder %s78, %s81
      %p90 = scmp.eq.s32.totalorder %s19, 1
      %p91 = por %p89, %p90
      %p92 = scmp.ne.s32.totalorder %s81, %s82
      %p93 = scmp.eq.s32.totalorder %s19, 0
      %p94 = por %p92, %p93
      %p95 = scmp.ne.s32.totalorder %s81, %s82
      %p96 = scmp.eq.s32.totalorder %s20, 1
      %p97 = por %p95, %p96
      %p99 = scmp.ne.s32.totalorder %s82, %s98
      %p100 = scmp.eq.s32.totalorder %s20, 0
      %p101 = por %p99, %p100
      %s102 = ssub.s32 %s22, %s29
      %p103 = scmp.eq.s32.totalorder %s102, 0
      %s105 = sadd.s32 %s104, 1
      %s106 = scalar_select %p103, %s104, %s105
      %p109 = pneg %p103
      %p110 = scmp.eq.s32.totalorder %s14, 1
      %p111 = por %p109, %p110
      %p112 = scmp.ne.s32.totalorder %s104, %s107
      %p113 = scmp.eq.s32.totalorder %s14, 0
      %p114 = por %p112, %p113
      %p115 = scmp.ne.s32.totalorder %s104, %s107
      %p116 = scmp.eq.s32.totalorder %s19, 1
      %p117 = por %p115, %p116
      %p118 = scmp.ne.s32.totalorder %s107, %s108
      %p119 = scmp.eq.s32.totalorder %s19, 0
      %p120 = por %p118, %p119
      %p121 = scmp.ne.s32.totalorder %s107, %s108
      %p122 = scmp.eq.s32.totalorder %s20, 1
      %p123 = por %p121, %p122
      %p125 = scmp.ne.s32.totalorder %s108, %s124
      %p126 = scmp.eq.s32.totalorder %s20, 0
      %p127 = por %p125, %p126
      %s129 = sadd.s32 %s128, 1
      %p132 = scmp.eq.s32.totalorder %s14, 1
      %p133 = scmp.ne.s32.totalorder %s128, %s130
      %p134 = scmp.eq.s32.totalorder %s14, 0
      %p135 = por %p133, %p134
      %p136 = scmp.ne.s32.totalorder %s128, %s130
      %p137 = scmp.eq.s32.totalorder %s19, 1
      %p138 = por %p136, %p137
      %p139 = scmp.ne.s32.totalorder %s130, %s131
      %p140 = scmp.eq.s32.totalorder %s19, 0
      %p141 = por %p139, %p140
      %p142 = scmp.ne.s32.totalorder %s130, %s131
      %p143 = scmp.eq.s32.totalorder %s20, 1
      %p144 = por %p142, %p143
      %p146 = scmp.ne.s32.totalorder %s131, %s145
      %p147 = scmp.eq.s32.totalorder %s20, 0
      %p148 = por %p146, %p147
      %s149 = ssub.s32 %s21, %s33
      %p150 = scmp.eq.s32.totalorder %s149, 0
      %s152 = sadd.s32 %s151, 1
      %s153 = scalar_select %p150, %s151, %s152
      %p156 = pneg %p150
      %p157 = scmp.eq.s32.totalorder %s14, 1
      %p158 = por %p156, %p157
      %p159 = scmp.ne.s32.totalorder %s151, %s154
      %p160 = scmp.eq.s32.totalorder %s14, 0
      %p161 = por %p159, %p160
      %p162 = scmp.ne.s32.totalorder %s151, %s154
      %p163 = scmp.eq.s32.totalorder %s19, 1
      %p164 = por %p162, %p163
      %p165 = scmp.ne.s32.totalorder %s154, %s155
      %p166 = scmp.eq.s32.totalorder %s19, 0
      %p167 = por %p165, %p166
      %p168 = scmp.ne.s32.totalorder %s154, %s155
      %p169 = scmp.eq.s32.totalorder %s20, 1
      %p170 = por %p168, %p169
      %p172 = scmp.ne.s32.totalorder %s155, %s171
      %p173 = scmp.eq.s32.totalorder %s20, 0
      %p174 = por %p172, %p173
      %s175 = ssub.s32 %s21, %s33
      %s176 = ssub.s32 %s22, %s29
      %s177 = sor.u32 %s175, %s176
      %p178 = scmp.eq.s32.totalorder %s177, 0
      %s180 = sadd.s32 %s179, 1
      %s181 = scalar_select %p178, %s179, %s180
      %p184 = pneg %p178
      %p185 = scmp.eq.s32.totalorder %s14, 1
      %p186 = por %p184, %p185
      %p187 = scmp.ne.s32.totalorder %s179, %s182
      %p188 = scmp.eq.s32.totalorder %s14, 0
      %p189 = por %p187, %p188
      %p190 = scmp.ne.s32.totalorder %s179, %s182
      %p191 = scmp.eq.s32.totalorder %s19, 1
      %p192 = por %p190, %p191
      %p193 = scmp.ne.s32.totalorder %s182, %s183
      %p194 = scmp.eq.s32.totalorder %s19, 0
      %p195 = por %p193, %p194
      %p196 = scmp.ne.s32.totalorder %s182, %s183
      %p197 = scmp.eq.s32.totalorder %s20, 1
      %p198 = por %p196, %p197
      %p200 = scmp.ne.s32.totalorder %s183, %s199
      %p201 = scmp.eq.s32.totalorder %s20, 0
      %p202 = por %p200, %p201
      %s203 = ssub.s32 %s21, %s33
      %s204 = ssub.s32 %s22, %s29
      %s205 = sor.u32 %s203, %s204
      %p206 = scmp.eq.s32.totalorder %s205, 0
      %s208 = sadd.s32 %s207, 1
      %s209 = scalar_select %p206, %s207, %s208
      %p212 = pneg %p206
      %p213 = scmp.eq.s32.totalorder %s14, 1
      %p214 = por %p212, %p213
      %p215 = scmp.ne.s32.totalorder %s207, %s210
      %p216 = scmp.eq.s32.totalorder %s14, 0
      %p217 = por %p215, %p216
      %p218 = scmp.ne.s32.totalorder %s207, %s210
      %p219 = scmp.eq.s32.totalorder %s19, 1
      %p220 = por %p218, %p219
      %p221 = scmp.ne.s32.totalorder %s210, %s211
      %p222 = scmp.eq.s32.totalorder %s19, 0
      %p223 = por %p221, %p222
      %p224 = scmp.ne.s32.totalorder %s210, %s211
      %p225 = scmp.eq.s32.totalorder %s20, 1
      %p226 = por %p224, %p225
      %p228 = scmp.ne.s32.totalorder %s211, %s227
      %p229 = scmp.eq.s32.totalorder %s20, 0
      %p230 = por %p228, %p229
      %s231 = ssub.s32 %s21, %s33
      %p232 = scmp.eq.s32.totalorder %s231, 0
      %s234 = sadd.s32 %s233, 1
      %s235 = scalar_select %p232, %s233, %s234
      %p238 = pneg %p232
      %p239 = scmp.eq.s32.totalorder %s14, 1
      %p240 = por %p238, %p239
      %p241 = scmp.ne.s32.totalorder %s233, %s236
      %p242 = scmp.eq.s32.totalorder %s14, 0
      %p243 = por %p241, %p242
      %p244 = scmp.ne.s32.totalorder %s233, %s236
      %p245 = scmp.eq.s32.totalorder %s19, 1
      %p246 = por %p244, %p245
      %p247 = scmp.ne.s32.totalorder %s236, %s237
      %p248 = scmp.eq.s32.totalorder %s19, 0
      %p249 = por %p247, %p248
      %p250 = scmp.ne.s32.totalorder %s236, %s237
      %p251 = scmp.eq.s32.totalorder %s20, 1
      %p252 = por %p250, %p251
      %p254 = scmp.ne.s32.totalorder %s237, %s253
      %p255 = scmp.eq.s32.totalorder %s20, 0
      %p256 = por %p254, %p255
      %p257 = scmp.le.s32.totalorder 1, %s14
      %p258 = scmp.lt.s32.totalorder %s14, 3
      %p259 = pnand %p257, %p258
      %p260 = pneg %p259
      // Predicated region
      $region9: #{_lambda_.4} parent=5 // pred_check
        _
      $region10: #{_lambda_.4} parent=5 // pred_check_branch
        %262 = sbr.rel (%p259) target = $region12
      $region11: #{_lambda_.4} parent=5 // pred_region
        %s263 = ssub.s32 %s14, 1
        // Predicated region
        $region13: #{_lambda_.4} parent=11 // pred_check
          %p264 = pneg %p47
        $region14: #{_lambda_.4} parent=11 // pred_check_branch
          %266 = sbr.rel (%p264) target = $region16
        $region15: #{_lambda_.4} parent=11 // pred_region
          _
        $region16: #{_lambda_.4} parent=11 // pred_fallthru
          _
        // Predicated region
        $region17: #{_lambda_.4} parent=11 // pred_check
          %p267 = pneg %p68
        $region18: #{_lambda_.4} parent=11 // pred_check_branch
          %269 = sbr.rel (%p267) target = $region20
        $region19: #{_lambda_.4} parent=11 // pred_region
          _
        $region20: #{_lambda_.4} parent=11 // pred_fallthru
          _
        // Predicated region
        $region21: #{_lambda_.4} parent=11 // pred_check
          %p270 = pneg %p94
        $region22: #{_lambda_.4} parent=11 // pred_check_branch
          %272 = sbr.rel (%p270) target = $region24
        $region23: #{_lambda_.4} parent=11 // pred_region
          %p273 = scmp.lt.s32.totalorder %s24, 0
          %s274 = scalar_select %p273, %s24, 0
          %s275 = smul.addr %s274, 8
          %s276 = scalar_lea.vmem %s2, %s275
        $region24: #{_lambda_.4} parent=11 // pred_fallthru
          _
        // Predicated region
        $region25: #{_lambda_.4} parent=11 // pred_check
          %p277 = pneg %p120
        $region26: #{_lambda_.4} parent=11 // pred_check_branch
          %279 = sbr.rel (%p277) target = $region28
        $region27: #{_lambda_.4} parent=11 // pred_region
          %p280 = scmp.lt.s32.totalorder %s24, 0
          %s281 = scalar_select %p280, %s24, 0
          %s282 = smul.addr %s281, 8
          %s283 = scalar_lea.vmem %s3, %s282
        $region28: #{_lambda_.4} parent=11 // pred_fallthru
          _
        // Predicated region
        $region29: #{_lambda_.4} parent=11 // pred_check
          %p284 = pneg %p141
        $region30: #{_lambda_.4} parent=11 // pred_check_branch
          %286 = sbr.rel (%p284) target = $region32
        $region31: #{_lambda_.4} parent=11 // pred_region
          _
        $region32: #{_lambda_.4} parent=11 // pred_fallthru
          _
      $region12: #{_lambda_.4} parent=5 // pred_fallthru
        _
      %p287 = scmp.lt.s32.totalorder %s14, 2
      // Predicated region
      $region33: #{_lambda_.4} parent=5 // pred_check
        %p288 = pneg %p287
      $region34: #{_lambda_.4} parent=5 // pred_check_branch
        %290 = sbr.rel (%p288) target = $region36
      $region35: #{_lambda_.4} parent=5 // pred_region
        // Predicated region
        $region37: #{_lambda_.4} parent=35 // pred_check
          %p291 = pneg %p161
        $region38: #{_lambda_.4} parent=35 // pred_check_branch
          %293 = sbr.rel (%p291) target = $region40
        $region39: #{_lambda_.4} parent=35 // pred_region
          %s294 = sand.u32 %s151, 1
          %s295 = sand.u32 %s151, 1
          %s296 = smul.addr %s295, 16
          %s297 = scalar_lea.vmem [#allocation5], %s296
          %s298 = smul.addr %s21, 24
          %s299 = smul.addr %s298, 2
          %s300 = scalar_lea.vmem %s5, %s299
          // Predicated region
          $region41: #{_lambda_.4} parent=39 // pred_check
            _
          $region42: #{_lambda_.4} parent=39 // pred_check_branch
            %302 = sbr.rel (0) target = $region44
          $region43: #{_lambda_.4} parent=39 // pred_region
            // Predicated region
            $region45: #{_lambda_.4} parent=43 // pred_check
              _
            $region46: #{_lambda_.4} parent=43 // pred_check_branch
              %304 = sbr.rel target = $region48
            $region47: #{_lambda_.4} parent=43 // pred_region
              // Predicated region
              $region60: #{_lambda_.4} parent=47 // pred_check
                _
              $region61: #{_lambda_.4} parent=47 // pred_check_branch
                %333 = sbr.rel (0) target = $region63
              $region62: #{_lambda_.4} parent=47 // pred_region
                loop: start=0, step=1, limit=1
                $region64: #{_lambda_.4} parent=62 // loop_pre_header
                  _
                $region65: #{_lambda_.4} parent=62 // loop_header
                  %s335 = sphi 0, %s339
                  %p336 = scmp.ge.s32.totalorder %s335, 1
                  %s340 = sphi %s300, %s300
                  %s341 = sphi %s297, %s297
                $region66: #{_lambda_.4} parent=62 // loop_header_branch
                  %338 = sbr.rel (%p336) target = $region70
                $region67: #{_lambda_.4} parent=62 // loop_body
                  _
                $region68: #{_lambda_.4} parent=62 // loop_footer
                  %s339 = sadd.s32 1, %s335
                $region69: #{_lambda_.4} parent=62 // loop_footer_branch
                  %334 = sbr.rel target = $region65
                $region70: #{_lambda_.4} parent=62 // loop_exit
                  _
                loop: start=0, step=1, limit=1
                $region71: #{_lambda_.4} parent=62 // loop_pre_header
                  _
                $region72: #{_lambda_.4} parent=62 // loop_header
                  %s344 = sphi 0, %s348
                  %p345 = scmp.ge.s32.totalorder %s344, 1
                  %s349 = sphi %s300, %s300
                  %s350 = sphi %s297, %s297
                $region73: #{_lambda_.4} parent=62 // loop_header_branch
                  %347 = sbr.rel (%p345) target = $region77
                $region74: #{_lambda_.4} parent=62 // loop_body
                  %v351 = vld [vmem:[%s349] sm:$0x3]
                  %352 = vst [vmem:[%s350] sm:$0x3] %v351
                  %v353 = vld [vmem:[%s349 + $0x6] sm:$0x3]
                  %354 = vst [vmem:[%s350 + $0x2] sm:$0x3] %v353
                  %v355 = vld [vmem:[%s349 + $0xc] sm:$0x3]
                  %356 = vst [vmem:[%s350 + $0x4] sm:$0x3] %v355
                  %v357 = vld [vmem:[%s349 + $0x12] sm:$0x3]
                  %358 = vst [vmem:[%s350 + $0x6] sm:$0x3] %v357
                  %v359 = vld [vmem:[%s349 + $0x18] sm:$0x3]
                  %360 = vst [vmem:[%s350 + $0x8] sm:$0x3] %v359
                  %v361 = vld [vmem:[%s349 + $0x1e] sm:$0x3]
                  %362 = vst [vmem:[%s350 + $0xa] sm:$0x3] %v361
                  %v363 = vld [vmem:[%s349 + $0x24] sm:$0x3]
                  %364 = vst [vmem:[%s350 + $0xc] sm:$0x3] %v363
                  %v365 = vld [vmem:[%s349 + $0x2a] sm:$0x3]
                  %366 = vst [vmem:[%s350 + $0xe] sm:$0x3] %v365
                $region75: #{_lambda_.4} parent=62 // loop_footer
                  %s348 = sadd.s32 1, %s344
                $region76: #{_lambda_.4} parent=62 // loop_footer_branch
                  %343 = sbr.rel target = $region72
                $region77: #{_lambda_.4} parent=62 // loop_exit
                  _
              $region63: #{_lambda_.4} parent=47 // pred_fallthru
                _
            $region48: #{_lambda_.4} parent=43 // pred_fallthru
              _
            // Predicated region
            $region49: #{_lambda_.4} parent=43 // pred_check
              _
            $region50: #{_lambda_.4} parent=43 // pred_check_branch
              %306 = sbr.rel (0) target = $region52
            $region51: #{_lambda_.4} parent=43 // pred_region
              loop: start=0, step=1, limit=1
              $region53: #{_lambda_.4} parent=51 // loop_pre_header
                _
              $region54: #{_lambda_.4} parent=51 // loop_header
                %s309 = sphi 0, %s313
                %p310 = scmp.ge.s32.totalorder %s309, 1
                %s314 = sphi %s300, %s300
                %s315 = sphi %s297, %s297
              $region55: #{_lambda_.4} parent=51 // loop_header_branch
                %312 = sbr.rel (%p310) target = $region59
              $region56: #{_lambda_.4} parent=51 // loop_body
                %v316 = vld [vmem:[%s314] sm:$0x3]
                %317 = vst [vmem:[%s315] sm:$0x3] %v316
                %v318 = vld [vmem:[%s314 + $0x6] sm:$0x3]
                %319 = vst [vmem:[%s315 + $0x2] sm:$0x3] %v318
                %v320 = vld [vmem:[%s314 + $0xc] sm:$0x3]
                %321 = vst [vmem:[%s315 + $0x4] sm:$0x3] %v320
                %v322 = vld [vmem:[%s314 + $0x12] sm:$0x3]
                %323 = vst [vmem:[%s315 + $0x6] sm:$0x3] %v322
                %v324 = vld [vmem:[%s314 + $0x18] sm:$0x3]
                %325 = vst [vmem:[%s315 + $0x8] sm:$0x3] %v324
                %v326 = vld [vmem:[%s314 + $0x1e] sm:$0x3]
                %327 = vst [vmem:[%s315 + $0xa] sm:$0x3] %v326
                %v328 = vld [vmem:[%s314 + $0x24] sm:$0x3]
                %329 = vst [vmem:[%s315 + $0xc] sm:$0x3] %v328
                %v330 = vld [vmem:[%s314 + $0x2a] sm:$0x3]
                %331 = vst [vmem:[%s315 + $0xe] sm:$0x3] %v330
              $region57: #{_lambda_.4} parent=51 // loop_footer
                %s313 = sadd.s32 1, %s309
              $region58: #{_lambda_.4} parent=51 // loop_footer_branch
                %308 = sbr.rel target = $region54
              $region59: #{_lambda_.4} parent=51 // loop_exit
                _
            $region52: #{_lambda_.4} parent=43 // pred_fallthru
              _
          $region44: #{_lambda_.4} parent=39 // pred_fallthru
            _
          %367 = vnop
        $region40: #{_lambda_.4} parent=35 // pred_fallthru
          _
        // Predicated region
        $region78: #{_lambda_.4} parent=35 // pred_check
          %p368 = pneg %p189
        $region79: #{_lambda_.4} parent=35 // pred_check_branch
          %370 = sbr.rel (%p368) target = $region81
        $region80: #{_lambda_.4} parent=35 // pred_region
          %s371 = sand.u32 %s179, 1
          %s372 = sand.u32 %s179, 1
          %s373 = smul.addr %s372, 16
          %s374 = scalar_lea.vmem [#allocation6], %s373
          %s375 = smul.u32 8, %s22
          %s376 = smul.addr %s375, 3
          %s377 = sadd.s32 1, %s376
          %s378 = smul.addr %s21, 24
          %s379 = sadd.s32 %s377, %s378
          %s380 = smul.addr %s379, 2
          %s381 = scalar_lea.vmem %s6, %s380
          // Predicated region
          $region82: #{_lambda_.4} parent=80 // pred_check
            _
          $region83: #{_lambda_.4} parent=80 // pred_check_branch
            %383 = sbr.rel (0) target = $region85
          $region84: #{_lambda_.4} parent=80 // pred_region
            // Predicated region
            $region86: #{_lambda_.4} parent=84 // pred_check
              _
            $region87: #{_lambda_.4} parent=84 // pred_check_branch
              %385 = sbr.rel target = $region89
            $region88: #{_lambda_.4} parent=84 // pred_region
              // Predicated region
              $region101: #{_lambda_.4} parent=88 // pred_check
                _
              $region102: #{_lambda_.4} parent=88 // pred_check_branch
                %414 = sbr.rel (0) target = $region104
              $region103: #{_lambda_.4} parent=88 // pred_region
                loop: start=0, step=1, limit=1
                $region105: #{_lambda_.4} parent=103 // loop_pre_header
                  _
                $region106: #{_lambda_.4} parent=103 // loop_header
                  %s416 = sphi 0, %s420
                  %p417 = scmp.ge.s32.totalorder %s416, 1
                  %s421 = sphi %s381, %s381
                  %s422 = sphi %s374, %s374
                $region107: #{_lambda_.4} parent=103 // loop_header_branch
                  %419 = sbr.rel (%p417) target = $region111
                $region108: #{_lambda_.4} parent=103 // loop_body
                  _
                $region109: #{_lambda_.4} parent=103 // loop_footer
                  %s420 = sadd.s32 1, %s416
                $region110: #{_lambda_.4} parent=103 // loop_footer_branch
                  %415 = sbr.rel target = $region106
                $region111: #{_lambda_.4} parent=103 // loop_exit
                  _
                loop: start=0, step=1, limit=1
                $region112: #{_lambda_.4} parent=103 // loop_pre_header
                  _
                $region113: #{_lambda_.4} parent=103 // loop_header
                  %s425 = sphi 0, %s429
                  %p426 = scmp.ge.s32.totalorder %s425, 1
                  %s430 = sphi %s381, %s381
                  %s431 = sphi %s374, %s374
                $region114: #{_lambda_.4} parent=103 // loop_header_branch
                  %428 = sbr.rel (%p426) target = $region118
                $region115: #{_lambda_.4} parent=103 // loop_body
                  %v432 = vld [vmem:[%s430] sm:$0x3]
                  %433 = vst [vmem:[%s431] sm:$0x3] %v432
                  %v434 = vld [vmem:[%s430 + $0x6] sm:$0x3]
                  %435 = vst [vmem:[%s431 + $0x2] sm:$0x3] %v434
                  %v436 = vld [vmem:[%s430 + $0xc] sm:$0x3]
                  %437 = vst [vmem:[%s431 + $0x4] sm:$0x3] %v436
                  %v438 = vld [vmem:[%s430 + $0x12] sm:$0x3]
                  %439 = vst [vmem:[%s431 + $0x6] sm:$0x3] %v438
                  %v440 = vld [vmem:[%s430 + $0x18] sm:$0x3]
                  %441 = vst [vmem:[%s431 + $0x8] sm:$0x3] %v440
                  %v442 = vld [vmem:[%s430 + $0x1e] sm:$0x3]
                  %443 = vst [vmem:[%s431 + $0xa] sm:$0x3] %v442
                  %v444 = vld [vmem:[%s430 + $0x24] sm:$0x3]
                  %445 = vst [vmem:[%s431 + $0xc] sm:$0x3] %v444
                  %v446 = vld [vmem:[%s430 + $0x2a] sm:$0x3]
                  %447 = vst [vmem:[%s431 + $0xe] sm:$0x3] %v446
                $region116: #{_lambda_.4} parent=103 // loop_footer
                  %s429 = sadd.s32 1, %s425
                $region117: #{_lambda_.4} parent=103 // loop_footer_branch
                  %424 = sbr.rel target = $region113
                $region118: #{_lambda_.4} parent=103 // loop_exit
                  _
              $region104: #{_lambda_.4} parent=88 // pred_fallthru
                _
            $region89: #{_lambda_.4} parent=84 // pred_fallthru
              _
            // Predicated region
            $region90: #{_lambda_.4} parent=84 // pred_check
              _
            $region91: #{_lambda_.4} parent=84 // pred_check_branch
              %387 = sbr.rel (0) target = $region93
            $region92: #{_lambda_.4} parent=84 // pred_region
              loop: start=0, step=1, limit=1
              $region94: #{_lambda_.4} parent=92 // loop_pre_header
                _
              $region95: #{_lambda_.4} parent=92 // loop_header
                %s390 = sphi 0, %s394
                %p391 = scmp.ge.s32.totalorder %s390, 1
                %s395 = sphi %s381, %s381
                %s396 = sphi %s374, %s374
              $region96: #{_lambda_.4} parent=92 // loop_header_branch
                %393 = sbr.rel (%p391) target = $region100
              $region97: #{_lambda_.4} parent=92 // loop_body
                %v397 = vld [vmem:[%s395] sm:$0x3]
                %398 = vst [vmem:[%s396] sm:$0x3] %v397
                %v399 = vld [vmem:[%s395 + $0x6] sm:$0x3]
                %400 = vst [vmem:[%s396 + $0x2] sm:$0x3] %v399
                %v401 = vld [vmem:[%s395 + $0xc] sm:$0x3]
                %402 = vst [vmem:[%s396 + $0x4] sm:$0x3] %v401
                %v403 = vld [vmem:[%s395 + $0x12] sm:$0x3]
                %404 = vst [vmem:[%s396 + $0x6] sm:$0x3] %v403
                %v405 = vld [vmem:[%s395 + $0x18] sm:$0x3]
                %406 = vst [vmem:[%s396 + $0x8] sm:$0x3] %v405
                %v407 = vld [vmem:[%s395 + $0x1e] sm:$0x3]
                %408 = vst [vmem:[%s396 + $0xa] sm:$0x3] %v407
                %v409 = vld [vmem:[%s395 + $0x24] sm:$0x3]
                %410 = vst [vmem:[%s396 + $0xc] sm:$0x3] %v409
                %v411 = vld [vmem:[%s395 + $0x2a] sm:$0x3]
                %412 = vst [vmem:[%s396 + $0xe] sm:$0x3] %v411
              $region98: #{_lambda_.4} parent=92 // loop_footer
                %s394 = sadd.s32 1, %s390
              $region99: #{_lambda_.4} parent=92 // loop_footer_branch
                %389 = sbr.rel target = $region95
              $region100: #{_lambda_.4} parent=92 // loop_exit
                _
            $region93: #{_lambda_.4} parent=84 // pred_fallthru
              _
          $region85: #{_lambda_.4} parent=80 // pred_fallthru
            _
          %448 = vnop
        $region81: #{_lambda_.4} parent=35 // pred_fallthru
          _
        // Predicated region
        $region119: #{_lambda_.4} parent=35 // pred_check
          %p449 = pneg %p217
        $region120: #{_lambda_.4} parent=35 // pred_check_branch
          %451 = sbr.rel (%p449) target = $region122
        $region121: #{_lambda_.4} parent=35 // pred_region
          %s452 = sand.u32 %s207, 1
          %s453 = sand.u32 %s207, 1
          %s454 = smul.addr %s453, 16
          %s455 = scalar_lea.vmem [#allocation7], %s454
          %s456 = smul.u32 8, %s22
          %s457 = smul.addr %s456, 3
          %s458 = sadd.s32 2, %s457
          %s459 = smul.addr %s21, 24
          %s460 = sadd.s32 %s458, %s459
          %s461 = smul.addr %s460, 2
          %s462 = scalar_lea.vmem %s7, %s461
          // Predicated region
          $region123: #{_lambda_.4} parent=121 // pred_check
            _
          $region124: #{_lambda_.4} parent=121 // pred_check_branch
            %464 = sbr.rel (0) target = $region126
          $region125: #{_lambda_.4} parent=121 // pred_region
            // Predicated region
            $region127: #{_lambda_.4} parent=125 // pred_check
              _
            $region128: #{_lambda_.4} parent=125 // pred_check_branch
              %466 = sbr.rel target = $region130
            $region129: #{_lambda_.4} parent=125 // pred_region
              // Predicated region
              $region142: #{_lambda_.4} parent=129 // pred_check
                _
              $region143: #{_lambda_.4} parent=129 // pred_check_branch
                %495 = sbr.rel (0) target = $region145
              $region144: #{_lambda_.4} parent=129 // pred_region
                loop: start=0, step=1, limit=1
                $region146: #{_lambda_.4} parent=144 // loop_pre_header
                  _
                $region147: #{_lambda_.4} parent=144 // loop_header
                  %s497 = sphi 0, %s501
                  %p498 = scmp.ge.s32.totalorder %s497, 1
                  %s502 = sphi %s462, %s462
                  %s503 = sphi %s455, %s455
                $region148: #{_lambda_.4} parent=144 // loop_header_branch
                  %500 = sbr.rel (%p498) target = $region152
                $region149: #{_lambda_.4} parent=144 // loop_body
                  _
                $region150: #{_lambda_.4} parent=144 // loop_footer
                  %s501 = sadd.s32 1, %s497
                $region151: #{_lambda_.4} parent=144 // loop_footer_branch
                  %496 = sbr.rel target = $region147
                $region152: #{_lambda_.4} parent=144 // loop_exit
                  _
                loop: start=0, step=1, limit=1
                $region153: #{_lambda_.4} parent=144 // loop_pre_header
                  _
                $region154: #{_lambda_.4} parent=144 // loop_header
                  %s506 = sphi 0, %s510
                  %p507 = scmp.ge.s32.totalorder %s506, 1
                  %s511 = sphi %s462, %s462
                  %s512 = sphi %s455, %s455
                $region155: #{_lambda_.4} parent=144 // loop_header_branch
                  %509 = sbr.rel (%p507) target = $region159
                $region156: #{_lambda_.4} parent=144 // loop_body
                  %v513 = vld [vmem:[%s511] sm:$0x3]
                  %514 = vst [vmem:[%s512] sm:$0x3] %v513
                  %v515 = vld [vmem:[%s511 + $0x6] sm:$0x3]
                  %516 = vst [vmem:[%s512 + $0x2] sm:$0x3] %v515
                  %v517 = vld [vmem:[%s511 + $0xc] sm:$0x3]
                  %518 = vst [vmem:[%s512 + $0x4] sm:$0x3] %v517
                  %v519 = vld [vmem:[%s511 + $0x12] sm:$0x3]
                  %520 = vst [vmem:[%s512 + $0x6] sm:$0x3] %v519
                  %v521 = vld [vmem:[%s511 + $0x18] sm:$0x3]
                  %522 = vst [vmem:[%s512 + $0x8] sm:$0x3] %v521
                  %v523 = vld [vmem:[%s511 + $0x1e] sm:$0x3]
                  %524 = vst [vmem:[%s512 + $0xa] sm:$0x3] %v523
                  %v525 = vld [vmem:[%s511 + $0x24] sm:$0x3]
                  %526 = vst [vmem:[%s512 + $0xc] sm:$0x3] %v525
                  %v527 = vld [vmem:[%s511 + $0x2a] sm:$0x3]
                  %528 = vst [vmem:[%s512 + $0xe] sm:$0x3] %v527
                $region157: #{_lambda_.4} parent=144 // loop_footer
                  %s510 = sadd.s32 1, %s506
                $region158: #{_lambda_.4} parent=144 // loop_footer_branch
                  %505 = sbr.rel target = $region154
                $region159: #{_lambda_.4} parent=144 // loop_exit
                  _
              $region145: #{_lambda_.4} parent=129 // pred_fallthru
                _
            $region130: #{_lambda_.4} parent=125 // pred_fallthru
              _
            // Predicated region
            $region131: #{_lambda_.4} parent=125 // pred_check
              _
            $region132: #{_lambda_.4} parent=125 // pred_check_branch
              %468 = sbr.rel (0) target = $region134
            $region133: #{_lambda_.4} parent=125 // pred_region
              loop: start=0, step=1, limit=1
              $region135: #{_lambda_.4} parent=133 // loop_pre_header
                _
              $region136: #{_lambda_.4} parent=133 // loop_header
                %s471 = sphi 0, %s475
                %p472 = scmp.ge.s32.totalorder %s471, 1
                %s476 = sphi %s462, %s462
                %s477 = sphi %s455, %s455
              $region137: #{_lambda_.4} parent=133 // loop_header_branch
                %474 = sbr.rel (%p472) target = $region141
              $region138: #{_lambda_.4} parent=133 // loop_body
                %v478 = vld [vmem:[%s476] sm:$0x3]
                %479 = vst [vmem:[%s477] sm:$0x3] %v478
                %v480 = vld [vmem:[%s476 + $0x6] sm:$0x3]
                %481 = vst [vmem:[%s477 + $0x2] sm:$0x3] %v480
                %v482 = vld [vmem:[%s476 + $0xc] sm:$0x3]
                %483 = vst [vmem:[%s477 + $0x4] sm:$0x3] %v482
                %v484 = vld [vmem:[%s476 + $0x12] sm:$0x3]
                %485 = vst [vmem:[%s477 + $0x6] sm:$0x3] %v484
                %v486 = vld [vmem:[%s476 + $0x18] sm:$0x3]
                %487 = vst [vmem:[%s477 + $0x8] sm:$0x3] %v486
                %v488 = vld [vmem:[%s476 + $0x1e] sm:$0x3]
                %489 = vst [vmem:[%s477 + $0xa] sm:$0x3] %v488
                %v490 = vld [vmem:[%s476 + $0x24] sm:$0x3]
                %491 = vst [vmem:[%s477 + $0xc] sm:$0x3] %v490
                %v492 = vld [vmem:[%s476 + $0x2a] sm:$0x3]
                %493 = vst [vmem:[%s477 + $0xe] sm:$0x3] %v492
              $region139: #{_lambda_.4} parent=133 // loop_footer
                %s475 = sadd.s32 1, %s471
              $region140: #{_lambda_.4} parent=133 // loop_footer_branch
                %470 = sbr.rel target = $region136
              $region141: #{_lambda_.4} parent=133 // loop_exit
                _
            $region134: #{_lambda_.4} parent=125 // pred_fallthru
              _
          $region126: #{_lambda_.4} parent=121 // pred_fallthru
            _
          %529 = vnop
        $region122: #{_lambda_.4} parent=35 // pred_fallthru
          _
      $region36: #{_lambda_.4} parent=5 // pred_fallthru
        _
      %p530 = scmp.le.s32.totalorder 1, %s14
      %p531 = scmp.lt.s32.totalorder %s14, 3
      %p532 = pnand %p530, %p531
      %p533 = pneg %p532
      // Predicated region
      $region160: #{_lambda_.4} parent=5 // pred_check
        _
      $region161: #{_lambda_.4} parent=5 // pred_check_branch
        %535 = sbr.rel (%p532) target = $region163
      $region162: #{_lambda_.4} parent=5 // pred_region
        %s536 = ssub.s32 %s14, 1
        %s537 = sand.u32 %s154, 1
        %s538 = sand.u32 %s154, 1
        %s539 = smul.addr %s538, 16
        %s540 = scalar_lea.vmem [#allocation5], %s539
        // Predicated region
        $region164: #{_lambda_.4} parent=162 // pred_check
          %p541 = pneg %p167
        $region165: #{_lambda_.4} parent=162 // pred_check_branch
          %543 = sbr.rel (%p541) target = $region167
        $region166: #{_lambda_.4} parent=162 // pred_region
          _
        $region167: #{_lambda_.4} parent=162 // pred_fallthru
          _
        %s544 = sand.u32 %s182, 1
        %s545 = sand.u32 %s182, 1
        %s546 = smul.addr %s545, 16
        %s547 = scalar_lea.vmem [#allocation6], %s546
        // Predicated region
        $region168: #{_lambda_.4} parent=162 // pred_check
          %p548 = pneg %p195
        $region169: #{_lambda_.4} parent=162 // pred_check_branch
          %550 = sbr.rel (%p548) target = $region171
        $region170: #{_lambda_.4} parent=162 // pred_region
          _
        $region171: #{_lambda_.4} parent=162 // pred_fallthru
          _
        %s551 = sand.u32 %s210, 1
        %s552 = sand.u32 %s210, 1
        %s553 = smul.addr %s552, 16
        %s554 = scalar_lea.vmem [#allocation7], %s553
        // Predicated region
        $region172: #{_lambda_.4} parent=162 // pred_check
          %p555 = pneg %p223
        $region173: #{_lambda_.4} parent=162 // pred_check_branch
          %557 = sbr.rel (%p555) target = $region175
        $region174: #{_lambda_.4} parent=162 // pred_region
          _
        $region175: #{_lambda_.4} parent=162 // pred_fallthru
          _
        %p558 = pneg %p47
        %p559 = pneg %p44
        %p560 = pneg %p68
        %p561 = pneg %p65
        %p562 = scmp.lt.s32.totalorder %s24, 0
        %s563 = scalar_select %p562, %s24, 0
        %s564 = smul.addr %s563, 8
        %s565 = scalar_lea.vmem %s2, %s564
        %p566 = pneg %p94
        %p567 = pneg %p91
        %p568 = scmp.lt.s32.totalorder %s24, 0
        %s569 = scalar_select %p568, %s24, 0
        %s570 = smul.addr %s569, 8
        %s571 = scalar_lea.vmem %s3, %s570
        %p572 = pneg %p120
        %p573 = pneg %p117
        %p574 = pneg %p141
        %p575 = pneg %p138
        %s576 = sand.u32 %s154, 1
        %s577 = sand.u32 %s154, 1
        %s578 = smul.addr %s577, 16
        %s579 = scalar_lea.vmem [#allocation5], %s578
        %p580 = pneg %p167
        %p581 = pneg %p164
        %s582 = sand.u32 %s182, 1
        %s583 = sand.u32 %s182, 1
        %s584 = smul.addr %s583, 16
        %s585 = scalar_lea.vmem [#allocation6], %s584
        %p586 = pneg %p195
        %p587 = pneg %p192
        %s588 = sand.u32 %s210, 1
        %s589 = sand.u32 %s210, 1
        %s590 = smul.addr %s589, 16
        %s591 = scalar_lea.vmem [#allocation7], %s590
        %p592 = pneg %p223
        %p593 = pneg %p220
        %p594 = pneg %p249
        %p595 = pneg %p246
        %p596 = scmp.lt.s32.totalorder %s23, 1
        %s597 = scalar_select %p596, %s23, 1
        %s598 = smul.addr %s597, 4
        %s599 = scalar_lea.vmem %s8, %s598
        %p600 = scmp.lt.s32.totalorder %s24, 0
        %s601 = scalar_select %p600, %s24, 0
        %s602 = smul.addr %s601, 8
        %s603 = scalar_lea.vmem %s2, %s602
        %p604 = scmp.lt.s32.totalorder %s24, 0
        %s605 = scalar_select %p604, %s24, 0
        %s606 = smul.addr %s605, 8
        %s607 = scalar_lea.vmem %s3, %s606
        %s608 = smul.u32 8, %s24
        %s609 = smul.u32 8, %s24
        %p610 = scmp.lt.s32.totalorder %s23, 1
        %s611 = scalar_select %p610, %s23, 1
        %s612 = smul.addr %s611, 4
        %s613 = scalar_lea.vmem %s8, %s612
        %p615 = scmp.eq.s32.totalorder %s24, 0
        // Predicated region
        $region176: #{_lambda_.4} parent=162 // pred_check
          %p616 = pneg %p615
        $region177: #{_lambda_.4} parent=162 // pred_check_branch
          %618 = sbr.rel (%p616) target = $region179
        $region178: #{_lambda_.4} parent=162 // pred_region
          %vm619 = vcmask 31744
          %620 = vst.msk [vmem:[#allocation2] sm:$0xff] %vm619, -inf
          %621 = vst.msk [vmem:[#allocation3] sm:$0xff] %vm619, 0.0
          %vm622 = vcmask 261120
          %623 = vst.msk [vmem:[#allocation4] sm:$0xff] %vm622, 0.0
        $region179: #{_lambda_.4} parent=162 // pred_fallthru
          _
        %v624 = vld [vmem:[%s0] sm:$0xff]
        %v625 = vld [vmem:[%s1] sm:$0xff]
        %v626 = vld [vmem:[%s603] sm:$0xff]
        %v627 = vld [vmem:[%s607] sm:$0xff]
        %v628 = vld [vmem:[%s4] sm:$0xf]
        %v629 = vld [vmem:[%s540] sm:$0x1]
        %v630 = vld [vmem:[%s540 + $0x2] sm:$0x1]
        %v631 = vld [vmem:[%s540 + $0x4] sm:$0x1]
        %v632 = vld [vmem:[%s540 + $0x6] sm:$0x1]
        %v633 = vld [vmem:[%s540 + $0x8] sm:$0x1]
        %v634 = vld [vmem:[%s540 + $0xa] sm:$0x1]
        %v635 = vld [vmem:[%s540 + $0xc] sm:$0x1]
        %v636 = vld [vmem:[%s540 + $0xe] sm:$0x1]
        %v637 = vld [vmem:[%s547] sm:$0x1]
        %v638 = vld [vmem:[%s547 + $0x2] sm:$0x1]
        %v639 = vld [vmem:[%s547 + $0x4] sm:$0x1]
        %v640 = vld [vmem:[%s547 + $0x6] sm:$0x1]
        %v641 = vld [vmem:[%s547 + $0x8] sm:$0x1]
        %v642 = vld [vmem:[%s547 + $0xa] sm:$0x1]
        %v643 = vld [vmem:[%s547 + $0xc] sm:$0x1]
        %v644 = vld [vmem:[%s547 + $0xe] sm:$0x1]
        %v645 = vld [vmem:[%s554] sm:$0x1]
        %v646 = vld [vmem:[%s554 + $0x2] sm:$0x1]
        %v647 = vld [vmem:[%s554 + $0x4] sm:$0x1]
        %v648 = vld [vmem:[%s554 + $0x6] sm:$0x1]
        %v649 = vld [vmem:[%s554 + $0x8] sm:$0x1]
        %v650 = vld [vmem:[%s554 + $0xa] sm:$0x1]
        %v651 = vld [vmem:[%s554 + $0xc] sm:$0x1]
        %v652 = vld [vmem:[%s554 + $0xe] sm:$0x1]
        %v653 = vunpack.c.l.bf16 %v629
        %v654 = vunpack.c.l.bf16 %v630
        %v655 = vunpack.c.l.bf16 %v631
        %v656 = vunpack.c.l.bf16 %v632
        %v657 = vunpack.c.l.bf16 %v633
        %v658 = vunpack.c.l.bf16 %v634
        %v659 = vunpack.c.l.bf16 %v635
        %v660 = vunpack.c.l.bf16 %v636
        %v670 = vunpack.c.l.s4 1983009808
        %v671 = vunpack.c.0.s8 %v670
        %v672 = vlaneseq
        %v673 = vshrl.u32 %v672, 7
        %v674 = vsub.s32 %v671, %v673
        %v675 = vrot.slane %v629, %v674
        %v677 = vunpack.c.l.s4 1983009808
        %v678 = vunpack.c.0.s8 %v677
        %v679 = vlaneseq
        %v680 = vshrl.u32 %v679, 7
        %v681 = vsub.s32 %v678, %v680
        %v682 = vrot.slane %v630, %v681
        %v684 = vunpack.c.l.s4 1983009808
        %v685 = vunpack.c.0.s8 %v684
        %v686 = vlaneseq
        %v687 = vshrl.u32 %v686, 7
        %v688 = vsub.s32 %v685, %v687
        %v689 = vrot.slane %v631, %v688
        %v691 = vunpack.c.l.s4 1983009808
        %v692 = vunpack.c.0.s8 %v691
        %v693 = vlaneseq
        %v694 = vshrl.u32 %v693, 7
        %v695 = vsub.s32 %v692, %v694
        %v696 = vrot.slane %v632, %v695
        %v698 = vunpack.c.l.s4 1983009808
        %v699 = vunpack.c.0.s8 %v698
        %v700 = vlaneseq
        %v701 = vshrl.u32 %v700, 7
        %v702 = vsub.s32 %v699, %v701
        %v703 = vrot.slane %v633, %v702
        %v705 = vunpack.c.l.s4 1983009808
        %v706 = vunpack.c.0.s8 %v705
        %v707 = vlaneseq
        %v708 = vshrl.u32 %v707, 7
        %v709 = vsub.s32 %v706, %v708
        %v710 = vrot.slane %v634, %v709
        %v712 = vunpack.c.l.s4 1983009808
        %v713 = vunpack.c.0.s8 %v712
        %v714 = vlaneseq
        %v715 = vshrl.u32 %v714, 7
        %v716 = vsub.s32 %v713, %v715
        %v717 = vrot.slane %v635, %v716
        %v719 = vunpack.c.l.s4 1983009808
        %v720 = vunpack.c.0.s8 %v719
        %v721 = vlaneseq
        %v722 = vshrl.u32 %v721, 7
        %v723 = vsub.s32 %v720, %v722
        %v724 = vrot.slane %v636, %v723
        %v725 = vunpack.c.l.b16 %v675
        %v726 = vunpack.c.l.b16 %v682
        %v727 = vunpack.c.l.b16 %v689
        %v728 = vunpack.c.l.b16 %v696
        %v729 = vunpack.c.l.b16 %v703
        %v730 = vunpack.c.l.b16 %v710
        %v731 = vunpack.c.l.b16 %v717
        %v732 = vunpack.c.l.b16 %v724
        %v733 = vrot.slane %v726, 7
        %vm734 = vcmask 1041409
        %v735 = vsel %vm734, %v733, %v725
        %v736 = vrot.slane %v727, 6
        %vm737 = vcmask 1042434
        %v738 = vsel %vm737, %v736, %v735
        %v739 = vrot.slane %v728, 5
        %vm740 = vcmask 1043459
        %v741 = vsel %vm740, %v739, %v738
        %v742 = vrot.slane %v729, 4
        %vm743 = vcmask 1044484
        %v744 = vsel %vm743, %v742, %v741
        %v745 = vrot.slane %v730, 3
        %vm746 = vcmask 1045509
        %v747 = vsel %vm746, %v745, %v744
        %v748 = vrot.slane %v731, 2
        %vm749 = vcmask 1046534
        %v750 = vsel %vm749, %v748, %v747
        %v751 = vrot.slane %v732, 1
        %vm752 = vcmask 1047559
        %v753 = vsel %vm752, %v751, %v750
        %v754 = vpack.c.b16 %v753, %v753
        %vm755 = vcmask 64512
        %v757 = vsel %vm755, %v754, 0
        %vm759 = vcmask 1043456
        %v761 = vsel %vm759, %v628, 0
        %763 = vmatprep.subr.bf16.mxu0 0
        %764 = vmatpush1.bf16.msra.mxu0 %v761
        %765 = vmatprep.subr.bf16.mxu0 0
        %766 = vmatpush1.bf16.msra.mxu0 0
        %767 = vmatprep.subr.bf16.mxu0 0
        %768 = vmatpush1.bf16.msra.mxu0 0
        %769 = vmatprep.subr.bf16.mxu0 0
        %770 = vmatpush1.bf16.msra.mxu0 0
        %771 = vmatprep.subr.bf16.mxu0 0
        %772 = vmatpush1.bf16.msra.mxu0 0
        %773 = vmatprep.subr.bf16.mxu0 0
        %774 = vmatpush1.bf16.msra.mxu0 0
        %775 = vmatprep.subr.bf16.mxu0 0
        %776 = vmatpush1.bf16.msra.mxu0 0
        %777 = vmatprep.subr.bf16.mxu0 0
        %778 = vmatpush1.bf16.msra.mxu0 0
        %779 = vmatprep.subr.bf16.mxu0 0
        %780 = vmatpush1.bf16.msra.mxu0 0
        %781 = vmatprep.subr.bf16.mxu0 0
        %782 = vmatpush1.bf16.msra.mxu0 0
        %783 = vmatprep.subr.bf16.mxu0 0
        %784 = vmatpush1.bf16.msra.mxu0 0
        %785 = vmatprep.subr.bf16.mxu0 0
        %786 = vmatpush1.bf16.msra.mxu0 0
        %787 = vmatprep.subr.bf16.mxu0 0
        %788 = vmatpush1.bf16.msra.mxu0 0
        %789 = vmatprep.subr.bf16.mxu0 0
        %790 = vmatpush1.bf16.msra.mxu0 0
        %791 = vmatprep.subr.bf16.mxu0 0
        %792 = vmatpush1.bf16.msra.mxu0 0
        %793 = vmatprep.subr.bf16.mxu0 0
        %794 = vmatpush1.bf16.msra.mxu0 0
        %795 = vmatprep.mubr.bf16.mxu0 0
        %796 = vmatmul.mubr.bf16.gmra.mrb[0].mxu0 %v757
        %v797 = vpop.f32.mrb[0].mxu0
        %v798 = vadd.f32 0.0, %v797
        %v799 = vpop.f32.mrb[0].mxu0
        %v800 = vpop.f32.mrb[0].mxu0
        %v801 = vpop.f32.mrb[0].mxu0
        %802 = vdwg.mxu0
        %v804 = vcombine.high %v624, %v624
        %v805 = vrot.slane %v624, 1
        %v806 = vrot.slane %v624, 2
        %v807 = vrot.slane %v624, 3
        %v808 = vrot.slane %v804, 1
        %v809 = vrot.slane %v804, 2
        %v810 = vrot.slane %v804, 3
        %v819 = vmul.f32 %v653, %v624
        %v820 = vmul.f32 %v654, %v805
        %v821 = vmul.f32 %v655, %v806
        %v822 = vmul.f32 %v656, %v807
        %v823 = vmul.f32 %v657, %v804
        %v824 = vmul.f32 %v658, %v808
        %v825 = vmul.f32 %v659, %v809
        %v826 = vmul.f32 %v660, %v810
        %v827 = vmul.f32 %v798, %v625
        %v829 = vcombine.high %v827, %v827
        %v830 = vrot.slane %v827, 1
        %v831 = vrot.slane %v827, 2
        %v832 = vrot.slane %v827, 3
        %v833 = vrot.slane %v829, 1
        %v834 = vrot.slane %v829, 2
        %v835 = vrot.slane %v829, 3
        %v844 = vadd.f32 %v819, %v827
        %v845 = vadd.f32 %v820, %v830
        %v846 = vadd.f32 %v821, %v831
        %v847 = vadd.f32 %v822, %v832
        %v848 = vadd.f32 %v823, %v829
        %v849 = vadd.f32 %v824, %v833
        %v850 = vadd.f32 %v825, %v834
        %v851 = vadd.f32 %v826, %v835
        %v852 = vmul.f32 %v844, 0.35355338
        %v853 = vmul.f32 %v845, 0.35355338
        %v854 = vmul.f32 %v846, 0.35355338
        %v855 = vmul.f32 %v847, 0.35355338
        %v856 = vmul.f32 %v848, 0.35355338
        %v857 = vmul.f32 %v849, 0.35355338
        %v858 = vmul.f32 %v850, 0.35355338
        %v859 = vmul.f32 %v851, 0.35355338
        %v860 = vpack.c.bf16 %v852, %v852
        %v861 = vpack.c.bf16 %v853, %v853
        %v862 = vpack.c.bf16 %v854, %v854
        %v863 = vpack.c.bf16 %v855, %v855
        %v864 = vpack.c.bf16 %v856, %v856
        %v865 = vpack.c.bf16 %v857, %v857
        %v866 = vpack.c.bf16 %v858, %v858
        %v867 = vpack.c.bf16 %v859, %v859
        %v868 = vunpack.c.l.bf16 %v637
        %v869 = vunpack.c.l.bf16 %v638
        %v870 = vunpack.c.l.bf16 %v639
        %v871 = vunpack.c.l.bf16 %v640
        %v872 = vunpack.c.l.bf16 %v641
        %v873 = vunpack.c.l.bf16 %v642
        %v874 = vunpack.c.l.bf16 %v643
        %v875 = vunpack.c.l.bf16 %v644
        %v885 = vunpack.c.l.s4 1983009808
        %v886 = vunpack.c.0.s8 %v885
        %v887 = vlaneseq
        %v888 = vshrl.u32 %v887, 7
        %v889 = vsub.s32 %v886, %v888
        %v890 = vrot.slane %v637, %v889
        %v892 = vunpack.c.l.s4 1983009808
        %v893 = vunpack.c.0.s8 %v892
        %v894 = vlaneseq
        %v895 = vshrl.u32 %v894, 7
        %v896 = vsub.s32 %v893, %v895
        %v897 = vrot.slane %v638, %v896
        %v899 = vunpack.c.l.s4 1983009808
        %v900 = vunpack.c.0.s8 %v899
        %v901 = vlaneseq
        %v902 = vshrl.u32 %v901, 7
        %v903 = vsub.s32 %v900, %v902
        %v904 = vrot.slane %v639, %v903
        %v906 = vunpack.c.l.s4 1983009808
        %v907 = vunpack.c.0.s8 %v906
        %v908 = vlaneseq
        %v909 = vshrl.u32 %v908, 7
        %v910 = vsub.s32 %v907, %v909
        %v911 = vrot.slane %v640, %v910
        %v913 = vunpack.c.l.s4 1983009808
        %v914 = vunpack.c.0.s8 %v913
        %v915 = vlaneseq
        %v916 = vshrl.u32 %v915, 7
        %v917 = vsub.s32 %v914, %v916
        %v918 = vrot.slane %v641, %v917
        %v920 = vunpack.c.l.s4 1983009808
        %v921 = vunpack.c.0.s8 %v920
        %v922 = vlaneseq
        %v923 = vshrl.u32 %v922, 7
        %v924 = vsub.s32 %v921, %v923
        %v925 = vrot.slane %v642, %v924
        %v927 = vunpack.c.l.s4 1983009808
        %v928 = vunpack.c.0.s8 %v927
        %v929 = vlaneseq
        %v930 = vshrl.u32 %v929, 7
        %v931 = vsub.s32 %v928, %v930
        %v932 = vrot.slane %v643, %v931
        %v934 = vunpack.c.l.s4 1983009808
        %v935 = vunpack.c.0.s8 %v934
        %v936 = vlaneseq
        %v937 = vshrl.u32 %v936, 7
        %v938 = vsub.s32 %v935, %v937
        %v939 = vrot.slane %v644, %v938
        %v940 = vunpack.c.l.b16 %v890
        %v941 = vunpack.c.l.b16 %v897
        %v942 = vunpack.c.l.b16 %v904
        %v943 = vunpack.c.l.b16 %v911
        %v944 = vunpack.c.l.b16 %v918
        %v945 = vunpack.c.l.b16 %v925
        %v946 = vunpack.c.l.b16 %v932
        %v947 = vunpack.c.l.b16 %v939
        %v948 = vrot.slane %v941, 7
        %v949 = vsel %vm734, %v948, %v940
        %v950 = vrot.slane %v942, 6
        %v951 = vsel %vm737, %v950, %v949
        %v952 = vrot.slane %v943, 5
        %v953 = vsel %vm740, %v952, %v951
        %v954 = vrot.slane %v944, 4
        %v955 = vsel %vm743, %v954, %v953
        %v956 = vrot.slane %v945, 3
        %v957 = vsel %vm746, %v956, %v955
        %v958 = vrot.slane %v946, 2
        %v959 = vsel %vm749, %v958, %v957
        %v960 = vrot.slane %v947, 1
        %v961 = vsel %vm752, %v960, %v959
        %v962 = vpack.c.b16 %v961, %v961
        %v964 = vsel %vm755, %v962, 0
        %966 = vmatprep.subr.bf16.mxu0 0
        %967 = vmatpush1.bf16.msra.mxu0 %v761
        %968 = vmatprep.subr.bf16.mxu0 0
        %969 = vmatpush1.bf16.msra.mxu0 0
        %970 = vmatprep.subr.bf16.mxu0 0
        %971 = vmatpush1.bf16.msra.mxu0 0
        %972 = vmatprep.subr.bf16.mxu0 0
        %973 = vmatpush1.bf16.msra.mxu0 0
        %974 = vmatprep.subr.bf16.mxu0 0
        %975 = vmatpush1.bf16.msra.mxu0 0
        %976 = vmatprep.subr.bf16.mxu0 0
        %977 = vmatpush1.bf16.msra.mxu0 0
        %978 = vmatprep.subr.bf16.mxu0 0
        %979 = vmatpush1.bf16.msra.mxu0 0
        %980 = vmatprep.subr.bf16.mxu0 0
        %981 = vmatpush1.bf16.msra.mxu0 0
        %982 = vmatprep.subr.bf16.mxu0 0
        %983 = vmatpush1.bf16.msra.mxu0 0
        %984 = vmatprep.subr.bf16.mxu0 0
        %985 = vmatpush1.bf16.msra.mxu0 0
        %986 = vmatprep.subr.bf16.mxu0 0
        %987 = vmatpush1.bf16.msra.mxu0 0
        %988 = vmatprep.subr.bf16.mxu0 0
        %989 = vmatpush1.bf16.msra.mxu0 0
        %990 = vmatprep.subr.bf16.mxu0 0
        %991 = vmatpush1.bf16.msra.mxu0 0
        %992 = vmatprep.subr.bf16.mxu0 0
        %993 = vmatpush1.bf16.msra.mxu0 0
        %994 = vmatprep.subr.bf16.mxu0 0
        %995 = vmatpush1.bf16.msra.mxu0 0
        %996 = vmatprep.subr.bf16.mxu0 0
        %997 = vmatpush1.bf16.msra.mxu0 0
        %998 = vmatprep.mubr.bf16.mxu0 0
        %999 = vmatmul.mubr.bf16.gmra.mrb[0].mxu0 %v964
        %v1000 = vpop.f32.mrb[0].mxu0
        %v1001 = vadd.f32 0.0, %v1000
        %v1002 = vpop.f32.mrb[0].mxu0
        %v1003 = vpop.f32.mrb[0].mxu0
        %v1004 = vpop.f32.mrb[0].mxu0
        %1005 = vdwg.mxu0
        %v1007 = vcombine.high %v626, %v626
        %v1008 = vrot.slane %v626, 1
        %v1009 = vrot.slane %v626, 2
        %v1010 = vrot.slane %v626, 3
        %v1011 = vrot.slane %v1007, 1
        %v1012 = vrot.slane %v1007, 2
        %v1013 = vrot.slane %v1007, 3
        %v1022 = vmul.f32 %v868, %v626
        %v1023 = vmul.f32 %v869, %v1008
        %v1024 = vmul.f32 %v870, %v1009
        %v1025 = vmul.f32 %v871, %v1010
        %v1026 = vmul.f32 %v872, %v1007
        %v1027 = vmul.f32 %v873, %v1011
        %v1028 = vmul.f32 %v874, %v1012
        %v1029 = vmul.f32 %v875, %v1013
        %v1030 = vmul.f32 %v1001, %v627
        %v1032 = vcombine.high %v1030, %v1030
        %v1033 = vrot.slane %v1030, 1
        %v1034 = vrot.slane %v1030, 2
        %v1035 = vrot.slane %v1030, 3
        %v1036 = vrot.slane %v1032, 1
        %v1037 = vrot.slane %v1032, 2
        %v1038 = vrot.slane %v1032, 3
        %v1047 = vadd.f32 %v1022, %v1030
        %v1048 = vadd.f32 %v1023, %v1033
        %v1049 = vadd.f32 %v1024, %v1034
        %v1050 = vadd.f32 %v1025, %v1035
        %v1051 = vadd.f32 %v1026, %v1032
        %v1052 = vadd.f32 %v1027, %v1036
        %v1053 = vadd.f32 %v1028, %v1037
        %v1054 = vadd.f32 %v1029, %v1038
        %v1055 = vpack.c.bf16 %v1047, %v1047
        %v1056 = vpack.c.bf16 %v1048, %v1048
        %v1057 = vpack.c.bf16 %v1049, %v1049
        %v1058 = vpack.c.bf16 %v1050, %v1050
        %v1059 = vpack.c.bf16 %v1051, %v1051
        %v1060 = vpack.c.bf16 %v1052, %v1052
        %v1061 = vpack.c.bf16 %v1053, %v1053
        %v1062 = vpack.c.bf16 %v1054, %v1054
        %v1071 = vunpack.c.l.b16 %v860
        %v1072 = vunpack.c.l.b16 %v861
        %v1073 = vunpack.c.l.b16 %v862
        %v1074 = vunpack.c.l.b16 %v863
        %v1075 = vunpack.c.l.b16 %v864
        %v1076 = vunpack.c.l.b16 %v865
        %v1077 = vunpack.c.l.b16 %v866
        %v1078 = vunpack.c.l.b16 %v867
        %v1079 = vrot.slane %v1072, 7
        %v1080 = vsel %vm734, %v1079, %v1071
        %v1081 = vrot.slane %v1073, 6
        %v1082 = vsel %vm737, %v1081, %v1080
        %v1083 = vrot.slane %v1074, 5
        %v1084 = vsel %vm740, %v1083, %v1082
        %v1085 = vrot.slane %v1075, 4
        %v1086 = vsel %vm743, %v1085, %v1084
        %v1087 = vrot.slane %v1076, 3
        %v1088 = vsel %vm746, %v1087, %v1086
        %v1089 = vrot.slane %v1077, 2
        %v1090 = vsel %vm749, %v1089, %v1088
        %v1091 = vrot.slane %v1078, 1
        %v1092 = vsel %vm752, %v1091, %v1090
        %v1093 = vpack.c.b16 %v1092, %v1092
        %v1102 = vunpack.c.l.b16 %v1055
        %v1103 = vunpack.c.l.b16 %v1056
        %v1104 = vunpack.c.l.b16 %v1057
        %v1105 = vunpack.c.l.b16 %v1058
        %v1106 = vunpack.c.l.b16 %v1059
        %v1107 = vunpack.c.l.b16 %v1060
        %v1108 = vunpack.c.l.b16 %v1061
        %v1109 = vunpack.c.l.b16 %v1062
        %v1110 = vrot.slane %v1103, 7
        %v1111 = vsel %vm734, %v1110, %v1102
        %v1112 = vrot.slane %v1104, 6
        %v1113 = vsel %vm737, %v1112, %v1111
        %v1114 = vrot.slane %v1105, 5
        %v1115 = vsel %vm740, %v1114, %v1113
        %v1116 = vrot.slane %v1106, 4
        %v1117 = vsel %vm743, %v1116, %v1115
        %v1118 = vrot.slane %v1107, 3
        %v1119 = vsel %vm746, %v1118, %v1117
        %v1120 = vrot.slane %v1108, 2
        %v1121 = vsel %vm749, %v1120, %v1119
        %v1122 = vrot.slane %v1109, 1
        %v1123 = vsel %vm752, %v1122, %v1121
        %v1124 = vpack.c.b16 %v1123, %v1123
        %v1126 = vsel %vm755, %v1093, 0
        %v1129 = vsel %vm755, %v1124, 0
        %1131 = vmatprep.subr.bf16.mxu0 0
        %1132 = vmatpush1.bf16.xpose.msra.mxu0 %v1129
        %1133 = vmatprep.subr.bf16.mxu0 0
        %1134 = vmatpush1.bf16.xpose.msra.mxu0 0
        %1135 = vmatprep.subr.bf16.mxu0 0
        %1136 = vmatpush1.bf16.xpose.msra.mxu0 0
        %1137 = vmatprep.subr.bf16.mxu0 0
        %1138 = vmatpush1.bf16.xpose.msra.mxu0 0
        %1139 = vmatprep.subr.bf16.mxu0 0
        %1140 = vmatpush1.bf16.xpose.msra.mxu0 0
        %1141 = vmatprep.subr.bf16.mxu0 0
        %1142 = vmatpush1.bf16.xpose.msra.mxu0 0
        %1143 = vmatprep.subr.bf16.mxu0 0
        %1144 = vmatpush1.bf16.xpose.msra.mxu0 0
        %1145 = vmatprep.subr.bf16.mxu0 0
        %1146 = vmatpush1.bf16.xpose.msra.mxu0 0
        %1147 = vmatprep.subr.bf16.mxu0 0
        %1148 = vmatpush1.bf16.xpose.msra.mxu0 0
        %1149 = vmatprep.subr.bf16.mxu0 0
        %1150 = vmatpush1.bf16.xpose.msra.mxu0 0
        %1151 = vmatprep.subr.bf16.mxu0 0
        %1152 = vmatpush1.bf16.xpose.msra.mxu0 0
        %1153 = vmatprep.subr.bf16.mxu0 0
        %1154 = vmatpush1.bf16.xpose.msra.mxu0 0
        %1155 = vmatprep.subr.bf16.mxu0 0
        %1156 = vmatpush1.bf16.xpose.msra.mxu0 0
        %1157 = vmatprep.subr.bf16.mxu0 0
        %1158 = vmatpush1.bf16.xpose.msra.mxu0 0
        %1159 = vmatprep.subr.bf16.mxu0 0
        %1160 = vmatpush1.bf16.xpose.msra.mxu0 0
        %1161 = vmatprep.subr.bf16.mxu0 0
        %1162 = vmatpush1.bf16.xpose.msra.mxu0 0
        %1163 = vmatprep.mubr.bf16.mxu0 0
        %1164 = vmatmul.mubr.bf16.gmra.mrb[0].mxu0 %v1126
        %v1165 = vpop.f32.mrb[0].mxu0
        %v1166 = vadd.f32 0.0, %v1165
        %v1167 = vpop.f32.mrb[0].mxu0
        %v1168 = vpop.f32.mrb[0].mxu0
        %v1169 = vpop.f32.mrb[0].mxu0
        %1170 = vdwg.mxu0
        %v1171 = vld [vmem:[#allocation2] sm:$0xff]
        %v1172 = vld [vmem:[#allocation3] sm:$0xff]
        %v1173 = vsel %vm755, %v1166, -inf
        %1174 = vmax.xlane.f32.xlu0 %v1173
        %v1175 = vpop.xlane.xlu0 %1174
        %v1176 = vmax.f32 %v1171, %v1175
        %v1177 = vsub.f32 %v1171, %v1176
        %v1178 = vmul.f32 %v1177, 1.442695
        %v1179 = vpow.pop %v1178
        %1181 = vset.pattern.permute.xlu0 0
        %1182 = vperm.xlu0 %1181, %v1176
        %v1183 = vpop.permute.xlu0 %1182
        %v1185 = vsub.f32 %v1166, %v1183
        %v1186 = vmul.f32 %v1185, 1.442695
        %v1187 = vpow.pop %v1186
        %v1188 = vmul.f32 %v1179, %v1172
        %v1189 = vsel %vm755, %v1187, 0.0
        %1190 = vadd.xlane.f32.xlu0 %v1189
        %v1191 = vpop.xlane.xlu0 %1190
        %v1192 = vadd.f32 %v1188, %v1191
        %vm1193 = vcmask 7168
        %1194 = vst.msk [vmem:[#allocation3] sm:$0xff] %vm1193, %v1192
        %v1195 = vpack.c.bf16 %v1187, %v1187
        %v1205 = vunpack.c.l.s4 1983009808
        %v1206 = vunpack.c.0.s8 %v1205
        %v1207 = vlaneseq
        %v1208 = vshrl.u32 %v1207, 7
        %v1209 = vsub.s32 %v1206, %v1208
        %v1210 = vrot.slane %v645, %v1209
        %v1212 = vunpack.c.l.s4 1983009808
        %v1213 = vunpack.c.0.s8 %v1212
        %v1214 = vlaneseq
        %v1215 = vshrl.u32 %v1214, 7
        %v1216 = vsub.s32 %v1213, %v1215
        %v1217 = vrot.slane %v646, %v1216
        %v1219 = vunpack.c.l.s4 1983009808
        %v1220 = vunpack.c.0.s8 %v1219
        %v1221 = vlaneseq
        %v1222 = vshrl.u32 %v1221, 7
        %v1223 = vsub.s32 %v1220, %v1222
        %v1224 = vrot.slane %v647, %v1223
        %v1226 = vunpack.c.l.s4 1983009808
        %v1227 = vunpack.c.0.s8 %v1226
        %v1228 = vlaneseq
        %v1229 = vshrl.u32 %v1228, 7
        %v1230 = vsub.s32 %v1227, %v1229
        %v1231 = vrot.slane %v648, %v1230
        %v1233 = vunpack.c.l.s4 1983009808
        %v1234 = vunpack.c.0.s8 %v1233
        %v1235 = vlaneseq
        %v1236 = vshrl.u32 %v1235, 7
        %v1237 = vsub.s32 %v1234, %v1236
        %v1238 = vrot.slane %v649, %v1237
        %v1240 = vunpack.c.l.s4 1983009808
        %v1241 = vunpack.c.0.s8 %v1240
        %v1242 = vlaneseq
        %v1243 = vshrl.u32 %v1242, 7
        %v1244 = vsub.s32 %v1241, %v1243
        %v1245 = vrot.slane %v650, %v1244
        %v1247 = vunpack.c.l.s4 1983009808
        %v1248 = vunpack.c.0.s8 %v1247
        %v1249 = vlaneseq
        %v1250 = vshrl.u32 %v1249, 7
        %v1251 = vsub.s32 %v1248, %v1250
        %v1252 = vrot.slane %v651, %v1251
        %v1254 = vunpack.c.l.s4 1983009808
        %v1255 = vunpack.c.0.s8 %v1254
        %v1256 = vlaneseq
        %v1257 = vshrl.u32 %v1256, 7
        %v1258 = vsub.s32 %v1255, %v1257
        %v1259 = vrot.slane %v652, %v1258
        %v1260 = vunpack.c.l.b16 %v1210
        %v1261 = vunpack.c.l.b16 %v1217
        %v1262 = vunpack.c.l.b16 %v1224
        %v1263 = vunpack.c.l.b16 %v1231
        %v1264 = vunpack.c.l.b16 %v1238
        %v1265 = vunpack.c.l.b16 %v1245
        %v1266 = vunpack.c.l.b16 %v1252
        %v1267 = vunpack.c.l.b16 %v1259
        %v1268 = vrot.slane %v1261, 7
        %v1269 = vsel %vm734, %v1268, %v1260
        %v1270 = vrot.slane %v1262, 6
        %v1271 = vsel %vm737, %v1270, %v1269
        %v1272 = vrot.slane %v1263, 5
        %v1273 = vsel %vm740, %v1272, %v1271
        %v1274 = vrot.slane %v1264, 4
        %v1275 = vsel %vm743, %v1274, %v1273
        %v1276 = vrot.slane %v1265, 3
        %v1277 = vsel %vm746, %v1276, %v1275
        %v1278 = vrot.slane %v1266, 2
        %v1279 = vsel %vm749, %v1278, %v1277
        %v1280 = vrot.slane %v1267, 1
        %v1281 = vsel %vm752, %v1280, %v1279
        %v1282 = vpack.c.b16 %v1281, %v1281
        %v1284 = vsel %vm755, %v1195, 0
        %v1287 = vsel %vm759, %v1282, 0
        %1289 = vmatprep.subr.bf16.mxu0 0
        %1290 = vmatpush1.bf16.msra.mxu0 %v1287
        %1291 = vmatprep.subr.bf16.mxu0 0
        %1292 = vmatpush1.bf16.msra.mxu0 0
        %1293 = vmatprep.subr.bf16.mxu0 0
        %1294 = vmatpush1.bf16.msra.mxu0 0
        %1295 = vmatprep.subr.bf16.mxu0 0
        %1296 = vmatpush1.bf16.msra.mxu0 0
        %1297 = vmatprep.subr.bf16.mxu0 0
        %1298 = vmatpush1.bf16.msra.mxu0 0
        %1299 = vmatprep.subr.bf16.mxu0 0
        %1300 = vmatpush1.bf16.msra.mxu0 0
        %1301 = vmatprep.subr.bf16.mxu0 0
        %1302 = vmatpush1.bf16.msra.mxu0 0
        %1303 = vmatprep.subr.bf16.mxu0 0
        %1304 = vmatpush1.bf16.msra.mxu0 0
        %1305 = vmatprep.subr.bf16.mxu0 0
        %1306 = vmatpush1.bf16.msra.mxu0 0
        %1307 = vmatprep.subr.bf16.mxu0 0
        %1308 = vmatpush1.bf16.msra.mxu0 0
        %1309 = vmatprep.subr.bf16.mxu0 0
        %1310 = vmatpush1.bf16.msra.mxu0 0
        %1311 = vmatprep.subr.bf16.mxu0 0
        %1312 = vmatpush1.bf16.msra.mxu0 0
        %1313 = vmatprep.subr.bf16.mxu0 0
        %1314 = vmatpush1.bf16.msra.mxu0 0
        %1315 = vmatprep.subr.bf16.mxu0 0
        %1316 = vmatpush1.bf16.msra.mxu0 0
        %1317 = vmatprep.subr.bf16.mxu0 0
        %1318 = vmatpush1.bf16.msra.mxu0 0
        %1319 = vmatprep.subr.bf16.mxu0 0
        %1320 = vmatpush1.bf16.msra.mxu0 0
        %1321 = vmatprep.mubr.bf16.mxu0 0
        %1322 = vmatmul.mubr.bf16.gmra.mrb[0].mxu0 %v1284
        %v1323 = vpop.f32.mrb[0].mxu0
        %v1324 = vadd.f32 0.0, %v1323
        %v1325 = vpop.f32.mrb[0].mxu0
        %v1326 = vpop.f32.mrb[0].mxu0
        %v1327 = vpop.f32.mrb[0].mxu0
        %1328 = vdwg.mxu0
        %v1329 = vld [vmem:[#allocation4] sm:$0xff]
        %1331 = vset.pattern.permute.xlu0 0
        %1332 = vperm.xlu0 %1331, %v1179
        %v1333 = vpop.permute.xlu0 %1332
        %v1335 = vmul.f32 %v1333, %v1329
        %v1336 = vadd.f32 %v1335, %v1324
        %1337 = vst.msk [vmem:[#allocation4] sm:$0xff] %vm755, %v1336
        %1338 = vst.msk [vmem:[#allocation2] sm:$0xff] %vm1193, %v1176
        %v1339 = vld [vmem:[%s540] sm:$0x1]
        %v1340 = vld [vmem:[%s540 + $0x2] sm:$0x1]
        %v1341 = vld [vmem:[%s540 + $0x4] sm:$0x1]
        %v1342 = vld [vmem:[%s540 + $0x6] sm:$0x1]
        %v1343 = vld [vmem:[%s540 + $0x8] sm:$0x1]
        %v1344 = vld [vmem:[%s540 + $0xa] sm:$0x1]
        %v1345 = vld [vmem:[%s540 + $0xc] sm:$0x1]
        %v1346 = vld [vmem:[%s540 + $0xe] sm:$0x1]
        %v1347 = vld [vmem:[%s547] sm:$0x1]
        %v1348 = vld [vmem:[%s547 + $0x2] sm:$0x1]
        %v1349 = vld [vmem:[%s547 + $0x4] sm:$0x1]
        %v1350 = vld [vmem:[%s547 + $0x6] sm:$0x1]
        %v1351 = vld [vmem:[%s547 + $0x8] sm:$0x1]
        %v1352 = vld [vmem:[%s547 + $0xa] sm:$0x1]
        %v1353 = vld [vmem:[%s547 + $0xc] sm:$0x1]
        %v1354 = vld [vmem:[%s547 + $0xe] sm:$0x1]
        %v1355 = vld [vmem:[%s554] sm:$0x1]
        %v1356 = vld [vmem:[%s554 + $0x2] sm:$0x1]
        %v1357 = vld [vmem:[%s554 + $0x4] sm:$0x1]
        %v1358 = vld [vmem:[%s554 + $0x6] sm:$0x1]
        %v1359 = vld [vmem:[%s554 + $0x8] sm:$0x1]
        %v1360 = vld [vmem:[%s554 + $0xa] sm:$0x1]
        %v1361 = vld [vmem:[%s554 + $0xc] sm:$0x1]
        %v1362 = vld [vmem:[%s554 + $0xe] sm:$0x1]
        %v1363 = vunpack.c.l.bf16 %v1339
        %v1364 = vunpack.c.l.bf16 %v1340
        %v1365 = vunpack.c.l.bf16 %v1341
        %v1366 = vunpack.c.l.bf16 %v1342
        %v1367 = vunpack.c.l.bf16 %v1343
        %v1368 = vunpack.c.l.bf16 %v1344
        %v1369 = vunpack.c.l.bf16 %v1345
        %v1370 = vunpack.c.l.bf16 %v1346
        %v1380 = vunpack.c.l.s4 1983009808
        %v1381 = vunpack.c.0.s8 %v1380
        %v1382 = vlaneseq
        %v1383 = vshrl.u32 %v1382, 7
        %v1384 = vsub.s32 %v1381, %v1383
        %v1385 = vrot.slane %v1339, %v1384
        %v1387 = vunpack.c.l.s4 1983009808
        %v1388 = vunpack.c.0.s8 %v1387
        %v1389 = vlaneseq
        %v1390 = vshrl.u32 %v1389, 7
        %v1391 = vsub.s32 %v1388, %v1390
        %v1392 = vrot.slane %v1340, %v1391
        %v1394 = vunpack.c.l.s4 1983009808
        %v1395 = vunpack.c.0.s8 %v1394
        %v1396 = vlaneseq
        %v1397 = vshrl.u32 %v1396, 7
        %v1398 = vsub.s32 %v1395, %v1397
        %v1399 = vrot.slane %v1341, %v1398
        %v1401 = vunpack.c.l.s4 1983009808
        %v1402 = vunpack.c.0.s8 %v1401
        %v1403 = vlaneseq
        %v1404 = vshrl.u32 %v1403, 7
        %v1405 = vsub.s32 %v1402, %v1404
        %v1406 = vrot.slane %v1342, %v1405
        %v1408 = vunpack.c.l.s4 1983009808
        %v1409 = vunpack.c.0.s8 %v1408
        %v1410 = vlaneseq
        %v1411 = vshrl.u32 %v1410, 7
        %v1412 = vsub.s32 %v1409, %v1411
        %v1413 = vrot.slane %v1343, %v1412
        %v1415 = vunpack.c.l.s4 1983009808
        %v1416 = vunpack.c.0.s8 %v1415
        %v1417 = vlaneseq
        %v1418 = vshrl.u32 %v1417, 7
        %v1419 = vsub.s32 %v1416, %v1418
        %v1420 = vrot.slane %v1344, %v1419
        %v1422 = vunpack.c.l.s4 1983009808
        %v1423 = vunpack.c.0.s8 %v1422
        %v1424 = vlaneseq
        %v1425 = vshrl.u32 %v1424, 7
        %v1426 = vsub.s32 %v1423, %v1425
        %v1427 = vrot.slane %v1345, %v1426
        %v1429 = vunpack.c.l.s4 1983009808
        %v1430 = vunpack.c.0.s8 %v1429
        %v1431 = vlaneseq
        %v1432 = vshrl.u32 %v1431, 7
        %v1433 = vsub.s32 %v1430, %v1432
        %v1434 = vrot.slane %v1346, %v1433
        %v1435 = vunpack.c.l.b16 %v1385
        %v1436 = vunpack.c.l.b16 %v1392
        %v1437 = vunpack.c.l.b16 %v1399
        %v1438 = vunpack.c.l.b16 %v1406
        %v1439 = vunpack.c.l.b16 %v1413
        %v1440 = vunpack.c.l.b16 %v1420
        %v1441 = vunpack.c.l.b16 %v1427
        %v1442 = vunpack.c.l.b16 %v1434
        %v1443 = vrot.slane %v1435, 1
        %v1444 = vsel %vm734, %v1436, %v1443
        %v1445 = vrot.slane %v1437, 7
        %v1446 = vsel %vm737, %v1445, %v1444
        %v1447 = vrot.slane %v1438, 6
        %v1448 = vsel %vm740, %v1447, %v1446
        %v1449 = vrot.slane %v1439, 5
        %v1450 = vsel %vm743, %v1449, %v1448
        %v1451 = vrot.slane %v1440, 4
        %v1452 = vsel %vm746, %v1451, %v1450
        %v1453 = vrot.slane %v1441, 3
        %v1454 = vsel %vm749, %v1453, %v1452
        %v1455 = vrot.slane %v1442, 2
        %v1456 = vsel %vm752, %v1455, %v1454
        %v1457 = vpack.c.b16 %v1456, %v1456
        %v1459 = vsel %vm755, %v1457, 0
        %1461 = vmatprep.subr.bf16.mxu0 0
        %1462 = vmatpush1.bf16.msra.mxu0 %v761
        %1463 = vmatprep.subr.bf16.mxu0 0
        %1464 = vmatpush1.bf16.msra.mxu0 0
        %1465 = vmatprep.subr.bf16.mxu0 0
        %1466 = vmatpush1.bf16.msra.mxu0 0
        %1467 = vmatprep.subr.bf16.mxu0 0
        %1468 = vmatpush1.bf16.msra.mxu0 0
        %1469 = vmatprep.subr.bf16.mxu0 0
        %1470 = vmatpush1.bf16.msra.mxu0 0
        %1471 = vmatprep.subr.bf16.mxu0 0
        %1472 = vmatpush1.bf16.msra.mxu0 0
        %1473 = vmatprep.subr.bf16.mxu0 0
        %1474 = vmatpush1.bf16.msra.mxu0 0
        %1475 = vmatprep.subr.bf16.mxu0 0
        %1476 = vmatpush1.bf16.msra.mxu0 0
        %1477 = vmatprep.subr.bf16.mxu0 0
        %1478 = vmatpush1.bf16.msra.mxu0 0
        %1479 = vmatprep.subr.bf16.mxu0 0
        %1480 = vmatpush1.bf16.msra.mxu0 0
        %1481 = vmatprep.subr.bf16.mxu0 0
        %1482 = vmatpush1.bf16.msra.mxu0 0
        %1483 = vmatprep.subr.bf16.mxu0 0
        %1484 = vmatpush1.bf16.msra.mxu0 0
        %1485 = vmatprep.subr.bf16.mxu0 0
        %1486 = vmatpush1.bf16.msra.mxu0 0
        %1487 = vmatprep.subr.bf16.mxu0 0
        %1488 = vmatpush1.bf16.msra.mxu0 0
        %1489 = vmatprep.subr.bf16.mxu0 0
        %1490 = vmatpush1.bf16.msra.mxu0 0
        %1491 = vmatprep.subr.bf16.mxu0 0
        %1492 = vmatpush1.bf16.msra.mxu0 0
        %1493 = vmatprep.mubr.bf16.mxu0 0
        %1494 = vmatmul.mubr.bf16.gmra.mrb[0].mxu0 %v1459
        %v1495 = vpop.f32.mrb[0].mxu0
        %v1496 = vadd.f32 0.0, %v1495
        %v1497 = vpop.f32.mrb[0].mxu0
        %v1498 = vpop.f32.mrb[0].mxu0
        %v1499 = vpop.f32.mrb[0].mxu0
        %1500 = vdwg.mxu0
        %v1501 = vrot.slane %v624, 7
        %v1502 = vrot.slane %v804, 7
        %v1505 = vmul.f32 %v1363, %v1501
        %v1506 = vmul.f32 %v1364, %v624
        %v1507 = vmul.f32 %v1365, %v805
        %v1508 = vmul.f32 %v1366, %v806
        %v1509 = vmul.f32 %v1367, %v1502
        %v1510 = vmul.f32 %v1368, %v804
        %v1511 = vmul.f32 %v1369, %v808
        %v1512 = vmul.f32 %v1370, %v809
        %v1513 = vmul.f32 %v1496, %v625
        %v1515 = vcombine.high %v1513, %v1513
        %v1516 = vrot.slane %v1513, 7
        %v1517 = vrot.slane %v1513, 1
        %v1518 = vrot.slane %v1513, 2
        %v1519 = vrot.slane %v1515, 7
        %v1520 = vrot.slane %v1515, 1
        %v1521 = vrot.slane %v1515, 2
        %v1530 = vadd.f32 %v1505, %v1516
        %v1531 = vadd.f32 %v1506, %v1513
        %v1532 = vadd.f32 %v1507, %v1517
        %v1533 = vadd.f32 %v1508, %v1518
        %v1534 = vadd.f32 %v1509, %v1519
        %v1535 = vadd.f32 %v1510, %v1515
        %v1536 = vadd.f32 %v1511, %v1520
        %v1537 = vadd.f32 %v1512, %v1521
        %v1538 = vmul.f32 %v1530, 0.35355338
        %v1539 = vmul.f32 %v1531, 0.35355338
        %v1540 = vmul.f32 %v1532, 0.35355338
        %v1541 = vmul.f32 %v1533, 0.35355338
        %v1542 = vmul.f32 %v1534, 0.35355338
        %v1543 = vmul.f32 %v1535, 0.35355338
        %v1544 = vmul.f32 %v1536, 0.35355338
        %v1545 = vmul.f32 %v1537, 0.35355338
        %v1546 = vpack.c.bf16 %v1538, %v1538
        %v1547 = vpack.c.bf16 %v1539, %v1539
        %v1548 = vpack.c.bf16 %v1540, %v1540
        %v1549 = vpack.c.bf16 %v1541, %v1541
        %v1550 = vpack.c.bf16 %v1542, %v1542
        %v1551 = vpack.c.bf16 %v1543, %v1543
        %v1552 = vpack.c.bf16 %v1544, %v1544
        %v1553 = vpack.c.bf16 %v1545, %v1545
        %v1554 = vunpack.c.l.bf16 %v1347
        %v1555 = vunpack.c.l.bf16 %v1348
        %v1556 = vunpack.c.l.bf16 %v1349
        %v1557 = vunpack.c.l.bf16 %v1350
        %v1558 = vunpack.c.l.bf16 %v1351
        %v1559 = vunpack.c.l.bf16 %v1352
        %v1560 = vunpack.c.l.bf16 %v1353
        %v1561 = vunpack.c.l.bf16 %v1354
        %v1571 = vunpack.c.l.s4 1983009808
        %v1572 = vunpack.c.0.s8 %v1571
        %v1573 = vlaneseq
        %v1574 = vshrl.u32 %v1573, 7
        %v1575 = vsub.s32 %v1572, %v1574
        %v1576 = vrot.slane %v1347, %v1575
        %v1578 = vunpack.c.l.s4 1983009808
        %v1579 = vunpack.c.0.s8 %v1578
        %v1580 = vlaneseq
        %v1581 = vshrl.u32 %v1580, 7
        %v1582 = vsub.s32 %v1579, %v1581
        %v1583 = vrot.slane %v1348, %v1582
        %v1585 = vunpack.c.l.s4 1983009808
        %v1586 = vunpack.c.0.s8 %v1585
        %v1587 = vlaneseq
        %v1588 = vshrl.u32 %v1587, 7
        %v1589 = vsub.s32 %v1586, %v1588
        %v1590 = vrot.slane %v1349, %v1589
        %v1592 = vunpack.c.l.s4 1983009808
        %v1593 = vunpack.c.0.s8 %v1592
        %v1594 = vlaneseq
        %v1595 = vshrl.u32 %v1594, 7
        %v1596 = vsub.s32 %v1593, %v1595
        %v1597 = vrot.slane %v1350, %v1596
        %v1599 = vunpack.c.l.s4 1983009808
        %v1600 = vunpack.c.0.s8 %v1599
        %v1601 = vlaneseq
        %v1602 = vshrl.u32 %v1601, 7
        %v1603 = vsub.s32 %v1600, %v1602
        %v1604 = vrot.slane %v1351, %v1603
        %v1606 = vunpack.c.l.s4 1983009808
        %v1607 = vunpack.c.0.s8 %v1606
        %v1608 = vlaneseq
        %v1609 = vshrl.u32 %v1608, 7
        %v1610 = vsub.s32 %v1607, %v1609
        %v1611 = vrot.slane %v1352, %v1610
        %v1613 = vunpack.c.l.s4 1983009808
        %v1614 = vunpack.c.0.s8 %v1613
        %v1615 = vlaneseq
        %v1616 = vshrl.u32 %v1615, 7
        %v1617 = vsub.s32 %v1614, %v1616
        %v1618 = vrot.slane %v1353, %v1617
        %v1620 = vunpack.c.l.s4 1983009808
        %v1621 = vunpack.c.0.s8 %v1620
        %v1622 = vlaneseq
        %v1623 = vshrl.u32 %v1622, 7
        %v1624 = vsub.s32 %v1621, %v1623
        %v1625 = vrot.slane %v1354, %v1624
        %v1626 = vunpack.c.l.b16 %v1576
        %v1627 = vunpack.c.l.b16 %v1583
        %v1628 = vunpack.c.l.b16 %v1590
        %v1629 = vunpack.c.l.b16 %v1597
        %v1630 = vunpack.c.l.b16 %v1604
        %v1631 = vunpack.c.l.b16 %v1611
        %v1632 = vunpack.c.l.b16 %v1618
        %v1633 = vunpack.c.l.b16 %v1625
        %v1634 = vrot.slane %v1626, 1
        %v1635 = vsel %vm734, %v1627, %v1634
        %v1636 = vrot.slane %v1628, 7
        %v1637 = vsel %vm737, %v1636, %v1635
        %v1638 = vrot.slane %v1629, 6
        %v1639 = vsel %vm740, %v1638, %v1637
        %v1640 = vrot.slane %v1630, 5
        %v1641 = vsel %vm743, %v1640, %v1639
        %v1642 = vrot.slane %v1631, 4
        %v1643 = vsel %vm746, %v1642, %v1641
        %v1644 = vrot.slane %v1632, 3
        %v1645 = vsel %vm749, %v1644, %v1643
        %v1646 = vrot.slane %v1633, 2
        %v1647 = vsel %vm752, %v1646, %v1645
        %v1648 = vpack.c.b16 %v1647, %v1647
        %v1650 = vsel %vm755, %v1648, 0
        %1652 = vmatprep.subr.bf16.mxu0 0
        %1653 = vmatpush1.bf16.msra.mxu0 %v761
        %1654 = vmatprep.subr.bf16.mxu0 0
        %1655 = vmatpush1.bf16.msra.mxu0 0
        %1656 = vmatprep.subr.bf16.mxu0 0
        %1657 = vmatpush1.bf16.msra.mxu0 0
        %1658 = vmatprep.subr.bf16.mxu0 0
        %1659 = vmatpush1.bf16.msra.mxu0 0
        %1660 = vmatprep.subr.bf16.mxu0 0
        %1661 = vmatpush1.bf16.msra.mxu0 0
        %1662 = vmatprep.subr.bf16.mxu0 0
        %1663 = vmatpush1.bf16.msra.mxu0 0
        %1664 = vmatprep.subr.bf16.mxu0 0
        %1665 = vmatpush1.bf16.msra.mxu0 0
        %1666 = vmatprep.subr.bf16.mxu0 0
        %1667 = vmatpush1.bf16.msra.mxu0 0
        %1668 = vmatprep.subr.bf16.mxu0 0
        %1669 = vmatpush1.bf16.msra.mxu0 0
        %1670 = vmatprep.subr.bf16.mxu0 0
        %1671 = vmatpush1.bf16.msra.mxu0 0
        %1672 = vmatprep.subr.bf16.mxu0 0
        %1673 = vmatpush1.bf16.msra.mxu0 0
        %1674 = vmatprep.subr.bf16.mxu0 0
        %1675 = vmatpush1.bf16.msra.mxu0 0
        %1676 = vmatprep.subr.bf16.mxu0 0
        %1677 = vmatpush1.bf16.msra.mxu0 0
        %1678 = vmatprep.subr.bf16.mxu0 0
        %1679 = vmatpush1.bf16.msra.mxu0 0
        %1680 = vmatprep.subr.bf16.mxu0 0
        %1681 = vmatpush1.bf16.msra.mxu0 0
        %1682 = vmatprep.subr.bf16.mxu0 0
        %1683 = vmatpush1.bf16.msra.mxu0 0
        %1684 = vmatprep.mubr.bf16.mxu0 0
        %1685 = vmatmul.mubr.bf16.gmra.mrb[0].mxu0 %v1650
        %v1686 = vpop.f32.mrb[0].mxu0
        %v1687 = vadd.f32 0.0, %v1686
        %v1688 = vpop.f32.mrb[0].mxu0
        %v1689 = vpop.f32.mrb[0].mxu0
        %v1690 = vpop.f32.mrb[0].mxu0
        %1691 = vdwg.mxu0
        %v1692 = vrot.slane %v626, 7
        %v1693 = vrot.slane %v1007, 7
        %v1696 = vmul.f32 %v1554, %v1692
        %v1697 = vmul.f32 %v1555, %v626
        %v1698 = vmul.f32 %v1556, %v1008
        %v1699 = vmul.f32 %v1557, %v1009
        %v1700 = vmul.f32 %v1558, %v1693
        %v1701 = vmul.f32 %v1559, %v1007
        %v1702 = vmul.f32 %v1560, %v1011
        %v1703 = vmul.f32 %v1561, %v1012
        %v1704 = vmul.f32 %v1687, %v627
        %v1706 = vcombine.high %v1704, %v1704
        %v1707 = vrot.slane %v1704, 7
        %v1708 = vrot.slane %v1704, 1
        %v1709 = vrot.slane %v1704, 2
        %v1710 = vrot.slane %v1706, 7
        %v1711 = vrot.slane %v1706, 1
        %v1712 = vrot.slane %v1706, 2
        %v1721 = vadd.f32 %v1696, %v1707
        %v1722 = vadd.f32 %v1697, %v1704
        %v1723 = vadd.f32 %v1698, %v1708
        %v1724 = vadd.f32 %v1699, %v1709
        %v1725 = vadd.f32 %v1700, %v1710
        %v1726 = vadd.f32 %v1701, %v1706
        %v1727 = vadd.f32 %v1702, %v1711
        %v1728 = vadd.f32 %v1703, %v1712
        %v1729 = vpack.c.bf16 %v1721, %v1721
        %v1730 = vpack.c.bf16 %v1722, %v1722
        %v1731 = vpack.c.bf16 %v1723, %v1723
        %v1732 = vpack.c.bf16 %v1724, %v1724
        %v1733 = vpack.c.bf16 %v1725, %v1725
        %v1734 = vpack.c.bf16 %v1726, %v1726
        %v1735 = vpack.c.bf16 %v1727, %v1727
        %v1736 = vpack.c.bf16 %v1728, %v1728
        %v1745 = vunpack.c.l.b16 %v1546
        %v1746 = vunpack.c.l.b16 %v1547
        %v1747 = vunpack.c.l.b16 %v1548
        %v1748 = vunpack.c.l.b16 %v1549
        %v1749 = vunpack.c.l.b16 %v1550
        %v1750 = vunpack.c.l.b16 %v1551
        %v1751 = vunpack.c.l.b16 %v1552
        %v1752 = vunpack.c.l.b16 %v1553
        %v1753 = vrot.slane %v1745, 1
        %v1754 = vsel %vm734, %v1746, %v1753
        %v1755 = vrot.slane %v1747, 7
        %v1756 = vsel %vm737, %v1755, %v1754
        %v1757 = vrot.slane %v1748, 6
        %v1758 = vsel %vm740, %v1757, %v1756
        %v1759 = vrot.slane %v1749, 5
        %v1760 = vsel %vm743, %v1759, %v1758
        %v1761 = vrot.slane %v1750, 4
        %v1762 = vsel %vm746, %v1761, %v1760
        %v1763 = vrot.slane %v1751, 3
        %v1764 = vsel %vm749, %v1763, %v1762
        %v1765 = vrot.slane %v1752, 2
        %v1766 = vsel %vm752, %v1765, %v1764
        %v1767 = vpack.c.b16 %v1766, %v1766
        %v1776 = vunpack.c.l.b16 %v1729
        %v1777 = vunpack.c.l.b16 %v1730
        %v1778 = vunpack.c.l.b16 %v1731
        %v1779 = vunpack.c.l.b16 %v1732
        %v1780 = vunpack.c.l.b16 %v1733
        %v1781 = vunpack.c.l.b16 %v1734
        %v1782 = vunpack.c.l.b16 %v1735
        %v1783 = vunpack.c.l.b16 %v1736
        %v1784 = vrot.slane %v1776, 1
        %v1785 = vsel %vm734, %v1777, %v1784
        %v1786 = vrot.slane %v1778, 7
        %v1787 = vsel %vm737, %v1786, %v1785
        %v1788 = vrot.slane %v1779, 6
        %v1789 = vsel %vm740, %v1788, %v1787
        %v1790 = vrot.slane %v1780, 5
        %v1791 = vsel %vm743, %v1790, %v1789
        %v1792 = vrot.slane %v1781, 4
        %v1793 = vsel %vm746, %v1792, %v1791
        %v1794 = vrot.slane %v1782, 3
        %v1795 = vsel %vm749, %v1794, %v1793
        %v1796 = vrot.slane %v1783, 2
        %v1797 = vsel %vm752, %v1796, %v1795
        %v1798 = vpack.c.b16 %v1797, %v1797
        %v1800 = vsel %vm755, %v1767, 0
        %v1803 = vsel %vm755, %v1798, 0
        %1805 = vmatprep.subr.bf16.mxu0 0
        %1806 = vmatpush1.bf16.xpose.msra.mxu0 %v1803
        %1807 = vmatprep.subr.bf16.mxu0 0
        %1808 = vmatpush1.bf16.xpose.msra.mxu0 0
        %1809 = vmatprep.subr.bf16.mxu0 0
        %1810 = vmatpush1.bf16.xpose.msra.mxu0 0
        %1811 = vmatprep.subr.bf16.mxu0 0
        %1812 = vmatpush1.bf16.xpose.msra.mxu0 0
        %1813 = vmatprep.subr.bf16.mxu0 0
        %1814 = vmatpush1.bf16.xpose.msra.mxu0 0
        %1815 = vmatprep.subr.bf16.mxu0 0
        %1816 = vmatpush1.bf16.xpose.msra.mxu0 0
        %1817 = vmatprep.subr.bf16.mxu0 0
        %1818 = vmatpush1.bf16.xpose.msra.mxu0 0
        %1819 = vmatprep.subr.bf16.mxu0 0
        %1820 = vmatpush1.bf16.xpose.msra.mxu0 0
        %1821 = vmatprep.subr.bf16.mxu0 0
        %1822 = vmatpush1.bf16.xpose.msra.mxu0 0
        %1823 = vmatprep.subr.bf16.mxu0 0
        %1824 = vmatpush1.bf16.xpose.msra.mxu0 0
        %1825 = vmatprep.subr.bf16.mxu0 0
        %1826 = vmatpush1.bf16.xpose.msra.mxu0 0
        %1827 = vmatprep.subr.bf16.mxu0 0
        %1828 = vmatpush1.bf16.xpose.msra.mxu0 0
        %1829 = vmatprep.subr.bf16.mxu0 0
        %1830 = vmatpush1.bf16.xpose.msra.mxu0 0
        %1831 = vmatprep.subr.bf16.mxu0 0
        %1832 = vmatpush1.bf16.xpose.msra.mxu0 0
        %1833 = vmatprep.subr.bf16.mxu0 0
        %1834 = vmatpush1.bf16.xpose.msra.mxu0 0
        %1835 = vmatprep.subr.bf16.mxu0 0
        %1836 = vmatpush1.bf16.xpose.msra.mxu0 0
        %1837 = vmatprep.mubr.bf16.mxu0 0
        %1838 = vmatmul.mubr.bf16.gmra.mrb[0].mxu0 %v1800
        %v1839 = vpop.f32.mrb[0].mxu0
        %v1840 = vadd.f32 0.0, %v1839
        %v1841 = vpop.f32.mrb[0].mxu0
        %v1842 = vpop.f32.mrb[0].mxu0
        %v1843 = vpop.f32.mrb[0].mxu0
        %1844 = vdwg.mxu0
        %v1845 = vld [vmem:[#allocation2] sm:$0xff]
        %v1846 = vld [vmem:[#allocation3] sm:$0xff]
        %v1847 = vsel %vm755, %v1840, -inf
        %1848 = vmax.xlane.f32.xlu0 %v1847
        %v1849 = vpop.xlane.xlu0 %1848
        %v1850 = vmax.f32 %v1845, %v1849
        %v1851 = vsub.f32 %v1845, %v1850
        %v1852 = vmul.f32 %v1851, 1.442695
        %v1853 = vpow.pop %v1852
        %1855 = vset.pattern.permute.xlu0 1
        %1856 = vperm.xlu0 %1855, %v1850
        %v1857 = vpop.permute.xlu0 %1856
        %v1859 = vsub.f32 %v1840, %v1857
        %v1860 = vmul.f32 %v1859, 1.442695
        %v1861 = vpow.pop %v1860
        %v1862 = vmul.f32 %v1853, %v1846
        %v1863 = vsel %vm755, %v1861, 0.0
        %1864 = vadd.xlane.f32.xlu0 %v1863
        %v1865 = vpop.xlane.xlu0 %1864
        %v1866 = vadd.f32 %v1862, %v1865
        %vm1867 = vcmask 15368
        %1868 = vst.msk [vmem:[#allocation3] sm:$0xff] %vm1867, %v1866
        %v1869 = vpack.c.bf16 %v1861, %v1861
        %v1879 = vunpack.c.l.s4 1983009808
        %v1880 = vunpack.c.0.s8 %v1879
        %v1881 = vlaneseq
        %v1882 = vshrl.u32 %v1881, 7
        %v1883 = vsub.s32 %v1880, %v1882
        %v1884 = vrot.slane %v1355, %v1883
        %v1886 = vunpack.c.l.s4 1983009808
        %v1887 = vunpack.c.0.s8 %v1886
        %v1888 = vlaneseq
        %v1889 = vshrl.u32 %v1888, 7
        %v1890 = vsub.s32 %v1887, %v1889
        %v1891 = vrot.slane %v1356, %v1890
        %v1893 = vunpack.c.l.s4 1983009808
        %v1894 = vunpack.c.0.s8 %v1893
        %v1895 = vlaneseq
        %v1896 = vshrl.u32 %v1895, 7
        %v1897 = vsub.s32 %v1894, %v1896
        %v1898 = vrot.slane %v1357, %v1897
        %v1900 = vunpack.c.l.s4 1983009808
        %v1901 = vunpack.c.0.s8 %v1900
        %v1902 = vlaneseq
        %v1903 = vshrl.u32 %v1902, 7
        %v1904 = vsub.s32 %v1901, %v1903
        %v1905 = vrot.slane %v1358, %v1904
        %v1907 = vunpack.c.l.s4 1983009808
        %v1908 = vunpack.c.0.s8 %v1907
        %v1909 = vlaneseq
        %v1910 = vshrl.u32 %v1909, 7
        %v1911 = vsub.s32 %v1908, %v1910
        %v1912 = vrot.slane %v1359, %v1911
        %v1914 = vunpack.c.l.s4 1983009808
        %v1915 = vunpack.c.0.s8 %v1914
        %v1916 = vlaneseq
        %v1917 = vshrl.u32 %v1916, 7
        %v1918 = vsub.s32 %v1915, %v1917
        %v1919 = vrot.slane %v1360, %v1918
        %v1921 = vunpack.c.l.s4 1983009808
        %v1922 = vunpack.c.0.s8 %v1921
        %v1923 = vlaneseq
        %v1924 = vshrl.u32 %v1923, 7
        %v1925 = vsub.s32 %v1922, %v1924
        %v1926 = vrot.slane %v1361, %v1925
        %v1928 = vunpack.c.l.s4 1983009808
        %v1929 = vunpack.c.0.s8 %v1928
        %v1930 = vlaneseq
        %v1931 = vshrl.u32 %v1930, 7
        %v1932 = vsub.s32 %v1929, %v1931
        %v1933 = vrot.slane %v1362, %v1932
        %v1934 = vunpack.c.l.b16 %v1884
        %v1935 = vunpack.c.l.b16 %v1891
        %v1936 = vunpack.c.l.b16 %v1898
        %v1937 = vunpack.c.l.b16 %v1905
        %v1938 = vunpack.c.l.b16 %v1912
        %v1939 = vunpack.c.l.b16 %v1919
        %v1940 = vunpack.c.l.b16 %v1926
        %v1941 = vunpack.c.l.b16 %v1933
        %v1942 = vrot.slane %v1934, 1
        %v1943 = vsel %vm734, %v1935, %v1942
        %v1944 = vrot.slane %v1936, 7
        %v1945 = vsel %vm737, %v1944, %v1943
        %v1946 = vrot.slane %v1937, 6
        %v1947 = vsel %vm740, %v1946, %v1945
        %v1948 = vrot.slane %v1938, 5
        %v1949 = vsel %vm743, %v1948, %v1947
        %v1950 = vrot.slane %v1939, 4
        %v1951 = vsel %vm746, %v1950, %v1949
        %v1952 = vrot.slane %v1940, 3
        %v1953 = vsel %vm749, %v1952, %v1951
        %v1954 = vrot.slane %v1941, 2
        %v1955 = vsel %vm752, %v1954, %v1953
        %v1956 = vpack.c.b16 %v1955, %v1955
        %v1958 = vsel %vm755, %v1869, 0
        %v1961 = vsel %vm759, %v1956, 0
        %1963 = vmatprep.subr.bf16.mxu0 0
        %1964 = vmatpush1.bf16.msra.mxu0 %v1961
        %1965 = vmatprep.subr.bf16.mxu0 0
        %1966 = vmatpush1.bf16.msra.mxu0 0
        %1967 = vmatprep.subr.bf16.mxu0 0
        %1968 = vmatpush1.bf16.msra.mxu0 0
        %1969 = vmatprep.subr.bf16.mxu0 0
        %1970 = vmatpush1.bf16.msra.mxu0 0
        %1971 = vmatprep.subr.bf16.mxu0 0
        %1972 = vmatpush1.bf16.msra.mxu0 0
        %1973 = vmatprep.subr.bf16.mxu0 0
        %1974 = vmatpush1.bf16.msra.mxu0 0
        %1975 = vmatprep.subr.bf16.mxu0 0
        %1976 = vmatpush1.bf16.msra.mxu0 0
        %1977 = vmatprep.subr.bf16.mxu0 0
        %1978 = vmatpush1.bf16.msra.mxu0 0
        %1979 = vmatprep.subr.bf16.mxu0 0
        %1980 = vmatpush1.bf16.msra.mxu0 0
        %1981 = vmatprep.subr.bf16.mxu0 0
        %1982 = vmatpush1.bf16.msra.mxu0 0
        %1983 = vmatprep.subr.bf16.mxu0 0
        %1984 = vmatpush1.bf16.msra.mxu0 0
        %1985 = vmatprep.subr.bf16.mxu0 0
        %1986 = vmatpush1.bf16.msra.mxu0 0
        %1987 = vmatprep.subr.bf16.mxu0 0
        %1988 = vmatpush1.bf16.msra.mxu0 0
        %1989 = vmatprep.subr.bf16.mxu0 0
        %1990 = vmatpush1.bf16.msra.mxu0 0
        %1991 = vmatprep.subr.bf16.mxu0 0
        %1992 = vmatpush1.bf16.msra.mxu0 0
        %1993 = vmatprep.subr.bf16.mxu0 0
        %1994 = vmatpush1.bf16.msra.mxu0 0
        %1995 = vmatprep.mubr.bf16.mxu0 0
        %1996 = vmatmul.mubr.bf16.gmra.mrb[0].mxu0 %v1958
        %v1997 = vpop.f32.mrb[0].mxu0
        %v1998 = vadd.f32 0.0, %v1997
        %v1999 = vpop.f32.mrb[0].mxu0
        %v2000 = vpop.f32.mrb[0].mxu0
        %v2001 = vpop.f32.mrb[0].mxu0
        %2002 = vdwg.mxu0
        %v2003 = vld [vmem:[#allocation4] sm:$0xff]
        %2005 = vset.pattern.permute.xlu0 1
        %2006 = vperm.xlu0 %2005, %v1853
        %v2007 = vpop.permute.xlu0 %2006
        %v2009 = vmul.f32 %v2007, %v2003
        %2011 = vrot.lane.b32.xlu0 %v1998, 8
        %v2012 = vpop.permute.xlu0 %2011
        %v2014 = vadd.f32 %v2009, %v2012
        %vm2015 = vcmask 130112
        %2016 = vst.msk [vmem:[#allocation4] sm:$0xff] %vm2015, %v2014
        %2017 = vst.msk [vmem:[#allocation2] sm:$0xff] %vm1867, %v1850
        %v2018 = vld [vmem:[%s540] sm:$0x2]
        %v2019 = vld [vmem:[%s540 + $0x2] sm:$0x2]
        %v2020 = vld [vmem:[%s540 + $0x4] sm:$0x2]
        %v2021 = vld [vmem:[%s540 + $0x6] sm:$0x2]
        %v2022 = vld [vmem:[%s540 + $0x8] sm:$0x2]
        %v2023 = vld [vmem:[%s540 + $0xa] sm:$0x2]
        %v2024 = vld [vmem:[%s540 + $0xc] sm:$0x2]
        %v2025 = vld [vmem:[%s540 + $0xe] sm:$0x2]
        %v2026 = vld [vmem:[%s547] sm:$0x2]
        %v2027 = vld [vmem:[%s547 + $0x2] sm:$0x2]
        %v2028 = vld [vmem:[%s547 + $0x4] sm:$0x2]
        %v2029 = vld [vmem:[%s547 + $0x6] sm:$0x2]
        %v2030 = vld [vmem:[%s547 + $0x8] sm:$0x2]
        %v2031 = vld [vmem:[%s547 + $0xa] sm:$0x2]
        %v2032 = vld [vmem:[%s547 + $0xc] sm:$0x2]
        %v2033 = vld [vmem:[%s547 + $0xe] sm:$0x2]
        %v2034 = vld [vmem:[%s554] sm:$0x2]
        %v2035 = vld [vmem:[%s554 + $0x2] sm:$0x2]
        %v2036 = vld [vmem:[%s554 + $0x4] sm:$0x2]
        %v2037 = vld [vmem:[%s554 + $0x6] sm:$0x2]
        %v2038 = vld [vmem:[%s554 + $0x8] sm:$0x2]
        %v2039 = vld [vmem:[%s554 + $0xa] sm:$0x2]
        %v2040 = vld [vmem:[%s554 + $0xc] sm:$0x2]
        %v2041 = vld [vmem:[%s554 + $0xe] sm:$0x2]
        %v2042 = vunpack.c.l.bf16 %v2018
        %v2043 = vunpack.c.l.bf16 %v2019
        %v2044 = vunpack.c.l.bf16 %v2020
        %v2045 = vunpack.c.l.bf16 %v2021
        %v2046 = vunpack.c.l.bf16 %v2022
        %v2047 = vunpack.c.l.bf16 %v2023
        %v2048 = vunpack.c.l.bf16 %v2024
        %v2049 = vunpack.c.l.bf16 %v2025
        %v2059 = vunpack.c.l.s4 1983009808
        %v2060 = vunpack.c.0.s8 %v2059
        %v2061 = vlaneseq
        %v2062 = vshrl.u32 %v2061, 7
        %v2063 = vsub.s32 %v2060, %v2062
        %v2064 = vrot.slane %v2018, %v2063
        %v2066 = vunpack.c.l.s4 1983009808
        %v2067 = vunpack.c.0.s8 %v2066
        %v2068 = vlaneseq
        %v2069 = vshrl.u32 %v2068, 7
        %v2070 = vsub.s32 %v2067, %v2069
        %v2071 = vrot.slane %v2019, %v2070
        %v2073 = vunpack.c.l.s4 1983009808
        %v2074 = vunpack.c.0.s8 %v2073
        %v2075 = vlaneseq
        %v2076 = vshrl.u32 %v2075, 7
        %v2077 = vsub.s32 %v2074, %v2076
        %v2078 = vrot.slane %v2020, %v2077
        %v2080 = vunpack.c.l.s4 1983009808
        %v2081 = vunpack.c.0.s8 %v2080
        %v2082 = vlaneseq
        %v2083 = vshrl.u32 %v2082, 7
        %v2084 = vsub.s32 %v2081, %v2083
        %v2085 = vrot.slane %v2021, %v2084
        %v2087 = vunpack.c.l.s4 1983009808
        %v2088 = vunpack.c.0.s8 %v2087
        %v2089 = vlaneseq
        %v2090 = vshrl.u32 %v2089, 7
        %v2091 = vsub.s32 %v2088, %v2090
        %v2092 = vrot.slane %v2022, %v2091
        %v2094 = vunpack.c.l.s4 1983009808
        %v2095 = vunpack.c.0.s8 %v2094
        %v2096 = vlaneseq
        %v2097 = vshrl.u32 %v2096, 7
        %v2098 = vsub.s32 %v2095, %v2097
        %v2099 = vrot.slane %v2023, %v2098
        %v2101 = vunpack.c.l.s4 1983009808
        %v2102 = vunpack.c.0.s8 %v2101
        %v2103 = vlaneseq
        %v2104 = vshrl.u32 %v2103, 7
        %v2105 = vsub.s32 %v2102, %v2104
        %v2106 = vrot.slane %v2024, %v2105
        %v2108 = vunpack.c.l.s4 1983009808
        %v2109 = vunpack.c.0.s8 %v2108
        %v2110 = vlaneseq
        %v2111 = vshrl.u32 %v2110, 7
        %v2112 = vsub.s32 %v2109, %v2111
        %v2113 = vrot.slane %v2025, %v2112
        %v2114 = vunpack.c.l.b16 %v2064
        %v2115 = vunpack.c.l.b16 %v2071
        %v2116 = vunpack.c.l.b16 %v2078
        %v2117 = vunpack.c.l.b16 %v2085
        %v2118 = vunpack.c.l.b16 %v2092
        %v2119 = vunpack.c.l.b16 %v2099
        %v2120 = vunpack.c.l.b16 %v2106
        %v2121 = vunpack.c.l.b16 %v2113
        %v2122 = vrot.slane %v2114, 2
        %v2123 = vrot.slane %v2115, 1
        %v2124 = vsel %vm734, %v2123, %v2122
        %v2125 = vsel %vm737, %v2116, %v2124
        %v2126 = vrot.slane %v2117, 7
        %v2127 = vsel %vm740, %v2126, %v2125
        %v2128 = vrot.slane %v2118, 6
        %v2129 = vsel %vm743, %v2128, %v2127
        %v2130 = vrot.slane %v2119, 5
        %v2131 = vsel %vm746, %v2130, %v2129
        %v2132 = vrot.slane %v2120, 4
        %v2133 = vsel %vm749, %v2132, %v2131
        %v2134 = vrot.slane %v2121, 3
        %v2135 = vsel %vm752, %v2134, %v2133
        %v2136 = vpack.c.b16 %v2135, %v2135
        %v2138 = vsel %vm755, %v2136, 0
        %2140 = vmatprep.subr.bf16.mxu0 0
        %2141 = vmatpush1.bf16.msra.mxu0 %v761
        %2142 = vmatprep.subr.bf16.mxu0 0
        %2143 = vmatpush1.bf16.msra.mxu0 0
        %2144 = vmatprep.subr.bf16.mxu0 0
        %2145 = vmatpush1.bf16.msra.mxu0 0
        %2146 = vmatprep.subr.bf16.mxu0 0
        %2147 = vmatpush1.bf16.msra.mxu0 0
        %2148 = vmatprep.subr.bf16.mxu0 0
        %2149 = vmatpush1.bf16.msra.mxu0 0
        %2150 = vmatprep.subr.bf16.mxu0 0
        %2151 = vmatpush1.bf16.msra.mxu0 0
        %2152 = vmatprep.subr.bf16.mxu0 0
        %2153 = vmatpush1.bf16.msra.mxu0 0
        %2154 = vmatprep.subr.bf16.mxu0 0
        %2155 = vmatpush1.bf16.msra.mxu0 0
        %2156 = vmatprep.subr.bf16.mxu0 0
        %2157 = vmatpush1.bf16.msra.mxu0 0
        %2158 = vmatprep.subr.bf16.mxu0 0
        %2159 = vmatpush1.bf16.msra.mxu0 0
        %2160 = vmatprep.subr.bf16.mxu0 0
        %2161 = vmatpush1.bf16.msra.mxu0 0
        %2162 = vmatprep.subr.bf16.mxu0 0
        %2163 = vmatpush1.bf16.msra.mxu0 0
        %2164 = vmatprep.subr.bf16.mxu0 0
        %2165 = vmatpush1.bf16.msra.mxu0 0
        %2166 = vmatprep.subr.bf16.mxu0 0
        %2167 = vmatpush1.bf16.msra.mxu0 0
        %2168 = vmatprep.subr.bf16.mxu0 0
        %2169 = vmatpush1.bf16.msra.mxu0 0
        %2170 = vmatprep.subr.bf16.mxu0 0
        %2171 = vmatpush1.bf16.msra.mxu0 0
        %2172 = vmatprep.mubr.bf16.mxu0 0
        %2173 = vmatmul.mubr.bf16.gmra.mrb[0].mxu0 %v2138
        %v2174 = vpop.f32.mrb[0].mxu0
        %v2175 = vadd.f32 0.0, %v2174
        %v2176 = vpop.f32.mrb[0].mxu0
        %v2177 = vpop.f32.mrb[0].mxu0
        %v2178 = vpop.f32.mrb[0].mxu0
        %2179 = vdwg.mxu0
        %v2180 = vrot.slane %v624, 6
        %v2181 = vrot.slane %v804, 6
        %v2184 = vmul.f32 %v2042, %v2180
        %v2185 = vmul.f32 %v2043, %v1501
        %v2186 = vmul.f32 %v2044, %v624
        %v2187 = vmul.f32 %v2045, %v805
        %v2188 = vmul.f32 %v2046, %v2181
        %v2189 = vmul.f32 %v2047, %v1502
        %v2190 = vmul.f32 %v2048, %v804
        %v2191 = vmul.f32 %v2049, %v808
        %v2192 = vmul.f32 %v2175, %v625
        %v2194 = vcombine.high %v2192, %v2192
        %v2195 = vrot.slane %v2192, 6
        %v2196 = vrot.slane %v2192, 7
        %v2197 = vrot.slane %v2192, 1
        %v2198 = vrot.slane %v2194, 6
        %v2199 = vrot.slane %v2194, 7
        %v2200 = vrot.slane %v2194, 1
        %v2209 = vadd.f32 %v2184, %v2195
        %v2210 = vadd.f32 %v2185, %v2196
        %v2211 = vadd.f32 %v2186, %v2192
        %v2212 = vadd.f32 %v2187, %v2197
        %v2213 = vadd.f32 %v2188, %v2198
        %v2214 = vadd.f32 %v2189, %v2199
        %v2215 = vadd.f32 %v2190, %v2194
        %v2216 = vadd.f32 %v2191, %v2200
        %v2217 = vmul.f32 %v2209, 0.35355338
        %v2218 = vmul.f32 %v2210, 0.35355338
        %v2219 = vmul.f32 %v2211, 0.35355338
        %v2220 = vmul.f32 %v2212, 0.35355338
        %v2221 = vmul.f32 %v2213, 0.35355338
        %v2222 = vmul.f32 %v2214, 0.35355338
        %v2223 = vmul.f32 %v2215, 0.35355338
        %v2224 = vmul.f32 %v2216, 0.35355338
        %v2225 = vpack.c.bf16 %v2217, %v2217
        %v2226 = vpack.c.bf16 %v2218, %v2218
        %v2227 = vpack.c.bf16 %v2219, %v2219
        %v2228 = vpack.c.bf16 %v2220, %v2220
        %v2229 = vpack.c.bf16 %v2221, %v2221
        %v2230 = vpack.c.bf16 %v2222, %v2222
        %v2231 = vpack.c.bf16 %v2223, %v2223
        %v2232 = vpack.c.bf16 %v2224, %v2224
        %v2233 = vunpack.c.l.bf16 %v2026
        %v2234 = vunpack.c.l.bf16 %v2027
        %v2235 = vunpack.c.l.bf16 %v2028
        %v2236 = vunpack.c.l.bf16 %v2029
        %v2237 = vunpack.c.l.bf16 %v2030
        %v2238 = vunpack.c.l.bf16 %v2031
        %v2239 = vunpack.c.l.bf16 %v2032
        %v2240 = vunpack.c.l.bf16 %v2033
        %v2250 = vunpack.c.l.s4 1983009808
        %v2251 = vunpack.c.0.s8 %v2250
        %v2252 = vlaneseq
        %v2253 = vshrl.u32 %v2252, 7
        %v2254 = vsub.s32 %v2251, %v2253
        %v2255 = vrot.slane %v2026, %v2254
        %v2257 = vunpack.c.l.s4 1983009808
        %v2258 = vunpack.c.0.s8 %v2257
        %v2259 = vlaneseq
        %v2260 = vshrl.u32 %v2259, 7
        %v2261 = vsub.s32 %v2258, %v2260
        %v2262 = vrot.slane %v2027, %v2261
        %v2264 = vunpack.c.l.s4 1983009808
        %v2265 = vunpack.c.0.s8 %v2264
        %v2266 = vlaneseq
        %v2267 = vshrl.u32 %v2266, 7
        %v2268 = vsub.s32 %v2265, %v2267
        %v2269 = vrot.slane %v2028, %v2268
        %v2271 = vunpack.c.l.s4 1983009808
        %v2272 = vunpack.c.0.s8 %v2271
        %v2273 = vlaneseq
        %v2274 = vshrl.u32 %v2273, 7
        %v2275 = vsub.s32 %v2272, %v2274
        %v2276 = vrot.slane %v2029, %v2275
        %v2278 = vunpack.c.l.s4 1983009808
        %v2279 = vunpack.c.0.s8 %v2278
        %v2280 = vlaneseq
        %v2281 = vshrl.u32 %v2280, 7
        %v2282 = vsub.s32 %v2279, %v2281
        %v2283 = vrot.slane %v2030, %v2282
        %v2285 = vunpack.c.l.s4 1983009808
        %v2286 = vunpack.c.0.s8 %v2285
        %v2287 = vlaneseq
        %v2288 = vshrl.u32 %v2287, 7
        %v2289 = vsub.s32 %v2286, %v2288
        %v2290 = vrot.slane %v2031, %v2289
        %v2292 = vunpack.c.l.s4 1983009808
        %v2293 = vunpack.c.0.s8 %v2292
        %v2294 = vlaneseq
        %v2295 = vshrl.u32 %v2294, 7
        %v2296 = vsub.s32 %v2293, %v2295
        %v2297 = vrot.slane %v2032, %v2296
        %v2299 = vunpack.c.l.s4 1983009808
        %v2300 = vunpack.c.0.s8 %v2299
        %v2301 = vlaneseq
        %v2302 = vshrl.u32 %v2301, 7
        %v2303 = vsub.s32 %v2300, %v2302
        %v2304 = vrot.slane %v2033, %v2303
        %v2305 = vunpack.c.l.b16 %v2255
        %v2306 = vunpack.c.l.b16 %v2262
        %v2307 = vunpack.c.l.b16 %v2269
        %v2308 = vunpack.c.l.b16 %v2276
        %v2309 = vunpack.c.l.b16 %v2283
        %v2310 = vunpack.c.l.b16 %v2290
        %v2311 = vunpack.c.l.b16 %v2297
        %v2312 = vunpack.c.l.b16 %v2304
        %v2313 = vrot.slane %v2305, 2
        %v2314 = vrot.slane %v2306, 1
        %v2315 = vsel %vm734, %v2314, %v2313
        %v2316 = vsel %vm737, %v2307, %v2315
        %v2317 = vrot.slane %v2308, 7
        %v2318 = vsel %vm740, %v2317, %v2316
        %v2319 = vrot.slane %v2309, 6
        %v2320 = vsel %vm743, %v2319, %v2318
        %v2321 = vrot.slane %v2310, 5
        %v2322 = vsel %vm746, %v2321, %v2320
        %v2323 = vrot.slane %v2311, 4
        %v2324 = vsel %vm749, %v2323, %v2322
        %v2325 = vrot.slane %v2312, 3
        %v2326 = vsel %vm752, %v2325, %v2324
        %v2327 = vpack.c.b16 %v2326, %v2326
        %v2329 = vsel %vm755, %v2327, 0
        %2331 = vmatprep.subr.bf16.mxu0 0
        %2332 = vmatpush1.bf16.msra.mxu0 %v761
        %2333 = vmatprep.subr.bf16.mxu0 0
        %2334 = vmatpush1.bf16.msra.mxu0 0
        %2335 = vmatprep.subr.bf16.mxu0 0
        %2336 = vmatpush1.bf16.msra.mxu0 0
        %2337 = vmatprep.subr.bf16.mxu0 0
        %2338 = vmatpush1.bf16.msra.mxu0 0
        %2339 = vmatprep.subr.bf16.mxu0 0
        %2340 = vmatpush1.bf16.msra.mxu0 0
        %2341 = vmatprep.subr.bf16.mxu0 0
        %2342 = vmatpush1.bf16.msra.mxu0 0
        %2343 = vmatprep.subr.bf16.mxu0 0
        %2344 = vmatpush1.bf16.msra.mxu0 0
        %2345 = vmatprep.subr.bf16.mxu0 0
        %2346 = vmatpush1.bf16.msra.mxu0 0
        %2347 = vmatprep.subr.bf16.mxu0 0
        %2348 = vmatpush1.bf16.msra.mxu0 0
        %2349 = vmatprep.subr.bf16.mxu0 0
        %2350 = vmatpush1.bf16.msra.mxu0 0
        %2351 = vmatprep.subr.bf16.mxu0 0
        %2352 = vmatpush1.bf16.msra.mxu0 0
        %2353 = vmatprep.subr.bf16.mxu0 0
        %2354 = vmatpush1.bf16.msra.mxu0 0
        %2355 = vmatprep.subr.bf16.mxu0 0
        %2356 = vmatpush1.bf16.msra.mxu0 0
        %2357 = vmatprep.subr.bf16.mxu0 0
        %2358 = vmatpush1.bf16.msra.mxu0 0
        %2359 = vmatprep.subr.bf16.mxu0 0
        %2360 = vmatpush1.bf16.msra.mxu0 0
        %2361 = vmatprep.subr.bf16.mxu0 0
        %2362 = vmatpush1.bf16.msra.mxu0 0
        %2363 = vmatprep.mubr.bf16.mxu0 0
        %2364 = vmatmul.mubr.bf16.gmra.mrb[0].mxu0 %v2329
        %v2365 = vpop.f32.mrb[0].mxu0
        %v2366 = vadd.f32 0.0, %v2365
        %v2367 = vpop.f32.mrb[0].mxu0
        %v2368 = vpop.f32.mrb[0].mxu0
        %v2369 = vpop.f32.mrb[0].mxu0
        %2370 = vdwg.mxu0
        %v2371 = vrot.slane %v626, 6
        %v2372 = vrot.slane %v1007, 6
        %v2375 = vmul.f32 %v2233, %v2371
        %v2376 = vmul.f32 %v2234, %v1692
        %v2377 = vmul.f32 %v2235, %v626
        %v2378 = vmul.f32 %v2236, %v1008
        %v2379 = vmul.f32 %v2237, %v2372
        %v2380 = vmul.f32 %v2238, %v1693
        %v2381 = vmul.f32 %v2239, %v1007
        %v2382 = vmul.f32 %v2240, %v1011
        %v2383 = vmul.f32 %v2366, %v627
        %v2385 = vcombine.high %v2383, %v2383
        %v2386 = vrot.slane %v2383, 6
        %v2387 = vrot.slane %v2383, 7
        %v2388 = vrot.slane %v2383, 1
        %v2389 = vrot.slane %v2385, 6
        %v2390 = vrot.slane %v2385, 7
        %v2391 = vrot.slane %v2385, 1
        %v2400 = vadd.f32 %v2375, %v2386
        %v2401 = vadd.f32 %v2376, %v2387
        %v2402 = vadd.f32 %v2377, %v2383
        %v2403 = vadd.f32 %v2378, %v2388
        %v2404 = vadd.f32 %v2379, %v2389
        %v2405 = vadd.f32 %v2380, %v2390
        %v2406 = vadd.f32 %v2381, %v2385
        %v2407 = vadd.f32 %v2382, %v2391
        %v2408 = vpack.c.bf16 %v2400, %v2400
        %v2409 = vpack.c.bf16 %v2401, %v2401
        %v2410 = vpack.c.bf16 %v2402, %v2402
        %v2411 = vpack.c.bf16 %v2403, %v2403
        %v2412 = vpack.c.bf16 %v2404, %v2404
        %v2413 = vpack.c.bf16 %v2405, %v2405
        %v2414 = vpack.c.bf16 %v2406, %v2406
        %v2415 = vpack.c.bf16 %v2407, %v2407
        %v2424 = vunpack.c.l.b16 %v2225
        %v2425 = vunpack.c.l.b16 %v2226
        %v2426 = vunpack.c.l.b16 %v2227
        %v2427 = vunpack.c.l.b16 %v2228
        %v2428 = vunpack.c.l.b16 %v2229
        %v2429 = vunpack.c.l.b16 %v2230
        %v2430 = vunpack.c.l.b16 %v2231
        %v2431 = vunpack.c.l.b16 %v2232
        %v2432 = vrot.slane %v2424, 2
        %v2433 = vrot.slane %v2425, 1
        %v2434 = vsel %vm734, %v2433, %v2432
        %v2435 = vsel %vm737, %v2426, %v2434
        %v2436 = vrot.slane %v2427, 7
        %v2437 = vsel %vm740, %v2436, %v2435
        %v2438 = vrot.slane %v2428, 6
        %v2439 = vsel %vm743, %v2438, %v2437
        %v2440 = vrot.slane %v2429, 5
        %v2441 = vsel %vm746, %v2440, %v2439
        %v2442 = vrot.slane %v2430, 4
        %v2443 = vsel %vm749, %v2442, %v2441
        %v2444 = vrot.slane %v2431, 3
        %v2445 = vsel %vm752, %v2444, %v2443
        %v2446 = vpack.c.b16 %v2445, %v2445
        %v2455 = vunpack.c.l.b16 %v2408
        %v2456 = vunpack.c.l.b16 %v2409
        %v2457 = vunpack.c.l.b16 %v2410
        %v2458 = vunpack.c.l.b16 %v2411
        %v2459 = vunpack.c.l.b16 %v2412
        %v2460 = vunpack.c.l.b16 %v2413
        %v2461 = vunpack.c.l.b16 %v2414
        %v2462 = vunpack.c.l.b16 %v2415
        %v2463 = vrot.slane %v2455, 2
        %v2464 = vrot.slane %v2456, 1
        %v2465 = vsel %vm734, %v2464, %v2463
        %v2466 = vsel %vm737, %v2457, %v2465
        %v2467 = vrot.slane %v2458, 7
        %v2468 = vsel %vm740, %v2467, %v2466
        %v2469 = vrot.slane %v2459, 6
        %v2470 = vsel %vm743, %v2469, %v2468
        %v2471 = vrot.slane %v2460, 5
        %v2472 = vsel %vm746, %v2471, %v2470
        %v2473 = vrot.slane %v2461, 4
        %v2474 = vsel %vm749, %v2473, %v2472
        %v2475 = vrot.slane %v2462, 3
        %v2476 = vsel %vm752, %v2475, %v2474
        %v2477 = vpack.c.b16 %v2476, %v2476
        %v2479 = vsel %vm755, %v2446, 0
        %v2482 = vsel %vm755, %v2477, 0
        %2484 = vmatprep.subr.bf16.mxu0 0
        %2485 = vmatpush1.bf16.xpose.msra.mxu0 %v2482
        %2486 = vmatprep.subr.bf16.mxu0 0
        %2487 = vmatpush1.bf16.xpose.msra.mxu0 0
        %2488 = vmatprep.subr.bf16.mxu0 0
        %2489 = vmatpush1.bf16.xpose.msra.mxu0 0
        %2490 = vmatprep.subr.bf16.mxu0 0
        %2491 = vmatpush1.bf16.xpose.msra.mxu0 0
        %2492 = vmatprep.subr.bf16.mxu0 0
        %2493 = vmatpush1.bf16.xpose.msra.mxu0 0
        %2494 = vmatprep.subr.bf16.mxu0 0
        %2495 = vmatpush1.bf16.xpose.msra.mxu0 0
        %2496 = vmatprep.subr.bf16.mxu0 0
        %2497 = vmatpush1.bf16.xpose.msra.mxu0 0
        %2498 = vmatprep.subr.bf16.mxu0 0
        %2499 = vmatpush1.bf16.xpose.msra.mxu0 0
        %2500 = vmatprep.subr.bf16.mxu0 0
        %2501 = vmatpush1.bf16.xpose.msra.mxu0 0
        %2502 = vmatprep.subr.bf16.mxu0 0
        %2503 = vmatpush1.bf16.xpose.msra.mxu0 0
        %2504 = vmatprep.subr.bf16.mxu0 0
        %2505 = vmatpush1.bf16.xpose.msra.mxu0 0
        %2506 = vmatprep.subr.bf16.mxu0 0
        %2507 = vmatpush1.bf16.xpose.msra.mxu0 0
        %2508 = vmatprep.subr.bf16.mxu0 0
        %2509 = vmatpush1.bf16.xpose.msra.mxu0 0
        %2510 = vmatprep.subr.bf16.mxu0 0
        %2511 = vmatpush1.bf16.xpose.msra.mxu0 0
        %2512 = vmatprep.subr.bf16.mxu0 0
        %2513 = vmatpush1.bf16.xpose.msra.mxu0 0
        %2514 = vmatprep.subr.bf16.mxu0 0
        %2515 = vmatpush1.bf16.xpose.msra.mxu0 0
        %2516 = vmatprep.mubr.bf16.mxu0 0
        %2517 = vmatmul.mubr.bf16.gmra.mrb[0].mxu0 %v2479
        %v2518 = vpop.f32.mrb[0].mxu0
        %v2519 = vadd.f32 0.0, %v2518
        %v2520 = vpop.f32.mrb[0].mxu0
        %v2521 = vpop.f32.mrb[0].mxu0
        %v2522 = vpop.f32.mrb[0].mxu0
        %2523 = vdwg.mxu0
        %v2524 = vld [vmem:[#allocation2] sm:$0xff]
        %v2525 = vld [vmem:[#allocation3] sm:$0xff]
        %v2526 = vsel %vm755, %v2519, -inf
        %2527 = vmax.xlane.f32.xlu0 %v2526
        %v2528 = vpop.xlane.xlu0 %2527
        %v2529 = vmax.f32 %v2524, %v2528
        %v2530 = vsub.f32 %v2524, %v2529
        %v2531 = vmul.f32 %v2530, 1.442695
        %v2532 = vpow.pop %v2531
        %2534 = vset.pattern.permute.xlu0 2
        %2535 = vperm.xlu0 %2534, %v2529
        %v2536 = vpop.permute.xlu0 %2535
        %v2538 = vsub.f32 %v2519, %v2536
        %v2539 = vmul.f32 %v2538, 1.442695
        %v2540 = vpow.pop %v2539
        %v2541 = vmul.f32 %v2532, %v2525
        %v2542 = vsel %vm755, %v2540, 0.0
        %2543 = vadd.xlane.f32.xlu0 %v2542
        %v2544 = vpop.xlane.xlu0 %2543
        %v2545 = vadd.f32 %v2541, %v2544
        %vm2546 = vcmask 23568
        %2547 = vst.msk [vmem:[#allocation3] sm:$0xff] %vm2546, %v2545
        %v2548 = vpack.c.bf16 %v2540, %v2540
        %v2558 = vunpack.c.l.s4 1983009808
        %v2559 = vunpack.c.0.s8 %v2558
        %v2560 = vlaneseq
        %v2561 = vshrl.u32 %v2560, 7
        %v2562 = vsub.s32 %v2559, %v2561
        %v2563 = vrot.slane %v2034, %v2562
        %v2565 = vunpack.c.l.s4 1983009808
        %v2566 = vunpack.c.0.s8 %v2565
        %v2567 = vlaneseq
        %v2568 = vshrl.u32 %v2567, 7
        %v2569 = vsub.s32 %v2566, %v2568
        %v2570 = vrot.slane %v2035, %v2569
        %v2572 = vunpack.c.l.s4 1983009808
        %v2573 = vunpack.c.0.s8 %v2572
        %v2574 = vlaneseq
        %v2575 = vshrl.u32 %v2574, 7
        %v2576 = vsub.s32 %v2573, %v2575
        %v2577 = vrot.slane %v2036, %v2576
        %v2579 = vunpack.c.l.s4 1983009808
        %v2580 = vunpack.c.0.s8 %v2579
        %v2581 = vlaneseq
        %v2582 = vshrl.u32 %v2581, 7
        %v2583 = vsub.s32 %v2580, %v2582
        %v2584 = vrot.slane %v2037, %v2583
        %v2586 = vunpack.c.l.s4 1983009808
        %v2587 = vunpack.c.0.s8 %v2586
        %v2588 = vlaneseq
        %v2589 = vshrl.u32 %v2588, 7
        %v2590 = vsub.s32 %v2587, %v2589
        %v2591 = vrot.slane %v2038, %v2590
        %v2593 = vunpack.c.l.s4 1983009808
        %v2594 = vunpack.c.0.s8 %v2593
        %v2595 = vlaneseq
        %v2596 = vshrl.u32 %v2595, 7
        %v2597 = vsub.s32 %v2594, %v2596
        %v2598 = vrot.slane %v2039, %v2597
        %v2600 = vunpack.c.l.s4 1983009808
        %v2601 = vunpack.c.0.s8 %v2600
        %v2602 = vlaneseq
        %v2603 = vshrl.u32 %v2602, 7
        %v2604 = vsub.s32 %v2601, %v2603
        %v2605 = vrot.slane %v2040, %v2604
        %v2607 = vunpack.c.l.s4 1983009808
        %v2608 = vunpack.c.0.s8 %v2607
        %v2609 = vlaneseq
        %v2610 = vshrl.u32 %v2609, 7
        %v2611 = vsub.s32 %v2608, %v2610
        %v2612 = vrot.slane %v2041, %v2611
        %v2613 = vunpack.c.l.b16 %v2563
        %v2614 = vunpack.c.l.b16 %v2570
        %v2615 = vunpack.c.l.b16 %v2577
        %v2616 = vunpack.c.l.b16 %v2584
        %v2617 = vunpack.c.l.b16 %v2591
        %v2618 = vunpack.c.l.b16 %v2598
        %v2619 = vunpack.c.l.b16 %v2605
        %v2620 = vunpack.c.l.b16 %v2612
        %v2621 = vrot.slane %v2613, 2
        %v2622 = vrot.slane %v2614, 1
        %v2623 = vsel %vm734, %v2622, %v2621
        %v2624 = vsel %vm737, %v2615, %v2623
        %v2625 = vrot.slane %v2616, 7
        %v2626 = vsel %vm740, %v2625, %v2624
        %v2627 = vrot.slane %v2617, 6
        %v2628 = vsel %vm743, %v2627, %v2626
        %v2629 = vrot.slane %v2618, 5
        %v2630 = vsel %vm746, %v2629, %v2628
        %v2631 = vrot.slane %v2619, 4
        %v2632 = vsel %vm749, %v2631, %v2630
        %v2633 = vrot.slane %v2620, 3
        %v2634 = vsel %vm752, %v2633, %v2632
        %v2635 = vpack.c.b16 %v2634, %v2634
        %v2637 = vsel %vm755, %v2548, 0
        %v2640 = vsel %vm759, %v2635, 0
        %2642 = vmatprep.subr.bf16.mxu0 0
        %2643 = vmatpush1.bf16.msra.mxu0 %v2640
        %2644 = vmatprep.subr.bf16.mxu0 0
        %2645 = vmatpush1.bf16.msra.mxu0 0
        %2646 = vmatprep.subr.bf16.mxu0 0
        %2647 = vmatpush1.bf16.msra.mxu0 0
        %2648 = vmatprep.subr.bf16.mxu0 0
        %2649 = vmatpush1.bf16.msra.mxu0 0
        %2650 = vmatprep.subr.bf16.mxu0 0
        %2651 = vmatpush1.bf16.msra.mxu0 0
        %2652 = vmatprep.subr.bf16.mxu0 0
        %2653 = vmatpush1.bf16.msra.mxu0 0
        %2654 = vmatprep.subr.bf16.mxu0 0
        %2655 = vmatpush1.bf16.msra.mxu0 0
        %2656 = vmatprep.subr.bf16.mxu0 0
        %2657 = vmatpush1.bf16.msra.mxu0 0
        %2658 = vmatprep.subr.bf16.mxu0 0
        %2659 = vmatpush1.bf16.msra.mxu0 0
        %2660 = vmatprep.subr.bf16.mxu0 0
        %2661 = vmatpush1.bf16.msra.mxu0 0
        %2662 = vmatprep.subr.bf16.mxu0 0
        %2663 = vmatpush1.bf16.msra.mxu0 0
        %2664 = vmatprep.subr.bf16.mxu0 0
        %2665 = vmatpush1.bf16.msra.mxu0 0
        %2666 = vmatprep.subr.bf16.mxu0 0
        %2667 = vmatpush1.bf16.msra.mxu0 0
        %2668 = vmatprep.subr.bf16.mxu0 0
        %2669 = vmatpush1.bf16.msra.mxu0 0
        %2670 = vmatprep.subr.bf16.mxu0 0
        %2671 = vmatpush1.bf16.msra.mxu0 0
        %2672 = vmatprep.subr.bf16.mxu0 0
        %2673 = vmatpush1.bf16.msra.mxu0 0
        %2674 = vmatprep.mubr.bf16.mxu0 0
        %2675 = vmatmul.mubr.bf16.gmra.mrb[0].mxu0 %v2637
        %v2676 = vpop.f32.mrb[0].mxu0
        %v2677 = vadd.f32 0.0, %v2676
        %v2678 = vpop.f32.mrb[0].mxu0
        %v2679 = vpop.f32.mrb[0].mxu0
        %v2680 = vpop.f32.mrb[0].mxu0
        %2681 = vdwg.mxu0
        %v2682 = vld [vmem:[#allocation4] sm:$0xff]
        %2684 = vset.pattern.permute.xlu0 2
        %2685 = vperm.xlu0 %2684, %v2532
        %v2686 = vpop.permute.xlu0 %2685
        %v2688 = vmul.f32 %v2686, %v2682
        %2690 = vrot.lane.b32.xlu0 %v2677, 16
        %v2691 = vpop.permute.xlu0 %2690
        %v2693 = vadd.f32 %v2688, %v2691
        %vm2694 = vcmask 195712
        %2695 = vst.msk [vmem:[#allocation4] sm:$0xff] %vm2694, %v2693
        %2696 = vst.msk [vmem:[#allocation2] sm:$0xff] %vm2546, %v2529
        %v2697 = vld [vmem:[%s540] sm:$0x2]
        %v2698 = vld [vmem:[%s540 + $0x2] sm:$0x2]
        %v2699 = vld [vmem:[%s540 + $0x4] sm:$0x2]
        %v2700 = vld [vmem:[%s540 + $0x6] sm:$0x2]
        %v2701 = vld [vmem:[%s540 + $0x8] sm:$0x2]
        %v2702 = vld [vmem:[%s540 + $0xa] sm:$0x2]
        %v2703 = vld [vmem:[%s540 + $0xc] sm:$0x2]
        %v2704 = vld [vmem:[%s540 + $0xe] sm:$0x2]
        %v2705 = vld [vmem:[%s547] sm:$0x2]
        %v2706 = vld [vmem:[%s547 + $0x2] sm:$0x2]
        %v2707 = vld [vmem:[%s547 + $0x4] sm:$0x2]
        %v2708 = vld [vmem:[%s547 + $0x6] sm:$0x2]
        %v2709 = vld [vmem:[%s547 + $0x8] sm:$0x2]
        %v2710 = vld [vmem:[%s547 + $0xa] sm:$0x2]
        %v2711 = vld [vmem:[%s547 + $0xc] sm:$0x2]
        %v2712 = vld [vmem:[%s547 + $0xe] sm:$0x2]
        %v2713 = vld [vmem:[%s554] sm:$0x2]
        %v2714 = vld [vmem:[%s554 + $0x2] sm:$0x2]
        %v2715 = vld [vmem:[%s554 + $0x4] sm:$0x2]
        %v2716 = vld [vmem:[%s554 + $0x6] sm:$0x2]
        %v2717 = vld [vmem:[%s554 + $0x8] sm:$0x2]
        %v2718 = vld [vmem:[%s554 + $0xa] sm:$0x2]
        %v2719 = vld [vmem:[%s554 + $0xc] sm:$0x2]
        %v2720 = vld [vmem:[%s554 + $0xe] sm:$0x2]
        %v2721 = vunpack.c.l.bf16 %v2697
        %v2722 = vunpack.c.l.bf16 %v2698
        %v2723 = vunpack.c.l.bf16 %v2699
        %v2724 = vunpack.c.l.bf16 %v2700
        %v2725 = vunpack.c.l.bf16 %v2701
        %v2726 = vunpack.c.l.bf16 %v2702
        %v2727 = vunpack.c.l.bf16 %v2703
        %v2728 = vunpack.c.l.bf16 %v2704
        %v2738 = vunpack.c.l.s4 1983009808
        %v2739 = vunpack.c.0.s8 %v2738
        %v2740 = vlaneseq
        %v2741 = vshrl.u32 %v2740, 7
        %v2742 = vsub.s32 %v2739, %v2741
        %v2743 = vrot.slane %v2697, %v2742
        %v2745 = vunpack.c.l.s4 1983009808
        %v2746 = vunpack.c.0.s8 %v2745
        %v2747 = vlaneseq
        %v2748 = vshrl.u32 %v2747, 7
        %v2749 = vsub.s32 %v2746, %v2748
        %v2750 = vrot.slane %v2698, %v2749
        %v2752 = vunpack.c.l.s4 1983009808
        %v2753 = vunpack.c.0.s8 %v2752
        %v2754 = vlaneseq
        %v2755 = vshrl.u32 %v2754, 7
        %v2756 = vsub.s32 %v2753, %v2755
        %v2757 = vrot.slane %v2699, %v2756
        %v2759 = vunpack.c.l.s4 1983009808
        %v2760 = vunpack.c.0.s8 %v2759
        %v2761 = vlaneseq
        %v2762 = vshrl.u32 %v2761, 7
        %v2763 = vsub.s32 %v2760, %v2762
        %v2764 = vrot.slane %v2700, %v2763
        %v2766 = vunpack.c.l.s4 1983009808
        %v2767 = vunpack.c.0.s8 %v2766
        %v2768 = vlaneseq
        %v2769 = vshrl.u32 %v2768, 7
        %v2770 = vsub.s32 %v2767, %v2769
        %v2771 = vrot.slane %v2701, %v2770
        %v2773 = vunpack.c.l.s4 1983009808
        %v2774 = vunpack.c.0.s8 %v2773
        %v2775 = vlaneseq
        %v2776 = vshrl.u32 %v2775, 7
        %v2777 = vsub.s32 %v2774, %v2776
        %v2778 = vrot.slane %v2702, %v2777
        %v2780 = vunpack.c.l.s4 1983009808
        %v2781 = vunpack.c.0.s8 %v2780
        %v2782 = vlaneseq
        %v2783 = vshrl.u32 %v2782, 7
        %v2784 = vsub.s32 %v2781, %v2783
        %v2785 = vrot.slane %v2703, %v2784
        %v2787 = vunpack.c.l.s4 1983009808
        %v2788 = vunpack.c.0.s8 %v2787
        %v2789 = vlaneseq
        %v2790 = vshrl.u32 %v2789, 7
        %v2791 = vsub.s32 %v2788, %v2790
        %v2792 = vrot.slane %v2704, %v2791
        %v2793 = vunpack.c.l.b16 %v2743
        %v2794 = vunpack.c.l.b16 %v2750
        %v2795 = vunpack.c.l.b16 %v2757
        %v2796 = vunpack.c.l.b16 %v2764
        %v2797 = vunpack.c.l.b16 %v2771
        %v2798 = vunpack.c.l.b16 %v2778
        %v2799 = vunpack.c.l.b16 %v2785
        %v2800 = vunpack.c.l.b16 %v2792
        %v2801 = vrot.slane %v2793, 3
        %v2802 = vrot.slane %v2794, 2
        %v2803 = vsel %vm734, %v2802, %v2801
        %v2804 = vrot.slane %v2795, 1
        %v2805 = vsel %vm737, %v2804, %v2803
        %v2806 = vsel %vm740, %v2796, %v2805
        %v2807 = vrot.slane %v2797, 7
        %v2808 = vsel %vm743, %v2807, %v2806
        %v2809 = vrot.slane %v2798, 6
        %v2810 = vsel %vm746, %v2809, %v2808
        %v2811 = vrot.slane %v2799, 5
        %v2812 = vsel %vm749, %v2811, %v2810
        %v2813 = vrot.slane %v2800, 4
        %v2814 = vsel %vm752, %v2813, %v2812
        %v2815 = vpack.c.b16 %v2814, %v2814
        %v2817 = vsel %vm755, %v2815, 0
        %2819 = vmatprep.subr.bf16.mxu0 0
        %2820 = vmatpush1.bf16.msra.mxu0 %v761
        %2821 = vmatprep.subr.bf16.mxu0 0
        %2822 = vmatpush1.bf16.msra.mxu0 0
        %2823 = vmatprep.subr.bf16.mxu0 0
        %2824 = vmatpush1.bf16.msra.mxu0 0
        %2825 = vmatprep.subr.bf16.mxu0 0
        %2826 = vmatpush1.bf16.msra.mxu0 0
        %2827 = vmatprep.subr.bf16.mxu0 0
        %2828 = vmatpush1.bf16.msra.mxu0 0
        %2829 = vmatprep.subr.bf16.mxu0 0
        %2830 = vmatpush1.bf16.msra.mxu0 0
        %2831 = vmatprep.subr.bf16.mxu0 0
        %2832 = vmatpush1.bf16.msra.mxu0 0
        %2833 = vmatprep.subr.bf16.mxu0 0
        %2834 = vmatpush1.bf16.msra.mxu0 0
        %2835 = vmatprep.subr.bf16.mxu0 0
        %2836 = vmatpush1.bf16.msra.mxu0 0
        %2837 = vmatprep.subr.bf16.mxu0 0
        %2838 = vmatpush1.bf16.msra.mxu0 0
        %2839 = vmatprep.subr.bf16.mxu0 0
        %2840 = vmatpush1.bf16.msra.mxu0 0
        %2841 = vmatprep.subr.bf16.mxu0 0
        %2842 = vmatpush1.bf16.msra.mxu0 0
        %2843 = vmatprep.subr.bf16.mxu0 0
        %2844 = vmatpush1.bf16.msra.mxu0 0
        %2845 = vmatprep.subr.bf16.mxu0 0
        %2846 = vmatpush1.bf16.msra.mxu0 0
        %2847 = vmatprep.subr.bf16.mxu0 0
        %2848 = vmatpush1.bf16.msra.mxu0 0
        %2849 = vmatprep.subr.bf16.mxu0 0
        %2850 = vmatpush1.bf16.msra.mxu0 0
        %2851 = vmatprep.mubr.bf16.mxu0 0
        %2852 = vmatmul.mubr.bf16.gmra.mrb[0].mxu0 %v2817
        %v2853 = vpop.f32.mrb[0].mxu0
        %v2854 = vadd.f32 0.0, %v2853
        %v2855 = vpop.f32.mrb[0].mxu0
        %v2856 = vpop.f32.mrb[0].mxu0
        %v2857 = vpop.f32.mrb[0].mxu0
        %2858 = vdwg.mxu0
        %v2859 = vrot.slane %v624, 5
        %v2860 = vrot.slane %v804, 5
        %v2863 = vmul.f32 %v2721, %v2859
        %v2864 = vmul.f32 %v2722, %v2180
        %v2865 = vmul.f32 %v2723, %v1501
        %v2866 = vmul.f32 %v2724, %v624
        %v2867 = vmul.f32 %v2725, %v2860
        %v2868 = vmul.f32 %v2726, %v2181
        %v2869 = vmul.f32 %v2727, %v1502
        %v2870 = vmul.f32 %v2728, %v804
        %v2871 = vmul.f32 %v2854, %v625
        %v2873 = vcombine.high %v2871, %v2871
        %v2874 = vrot.slane %v2871, 5
        %v2875 = vrot.slane %v2871, 6
        %v2876 = vrot.slane %v2871, 7
        %v2877 = vrot.slane %v2873, 5
        %v2878 = vrot.slane %v2873, 6
        %v2879 = vrot.slane %v2873, 7
        %v2888 = vadd.f32 %v2863, %v2874
        %v2889 = vadd.f32 %v2864, %v2875
        %v2890 = vadd.f32 %v2865, %v2876
        %v2891 = vadd.f32 %v2866, %v2871
        %v2892 = vadd.f32 %v2867, %v2877
        %v2893 = vadd.f32 %v2868, %v2878
        %v2894 = vadd.f32 %v2869, %v2879
        %v2895 = vadd.f32 %v2870, %v2873
        %v2896 = vmul.f32 %v2888, 0.35355338
        %v2897 = vmul.f32 %v2889, 0.35355338
        %v2898 = vmul.f32 %v2890, 0.35355338
        %v2899 = vmul.f32 %v2891, 0.35355338
        %v2900 = vmul.f32 %v2892, 0.35355338
        %v2901 = vmul.f32 %v2893, 0.35355338
        %v2902 = vmul.f32 %v2894, 0.35355338
        %v2903 = vmul.f32 %v2895, 0.35355338
        %v2904 = vpack.c.bf16 %v2896, %v2896
        %v2905 = vpack.c.bf16 %v2897, %v2897
        %v2906 = vpack.c.bf16 %v2898, %v2898
        %v2907 = vpack.c.bf16 %v2899, %v2899
        %v2908 = vpack.c.bf16 %v2900, %v2900
        %v2909 = vpack.c.bf16 %v2901, %v2901
        %v2910 = vpack.c.bf16 %v2902, %v2902
        %v2911 = vpack.c.bf16 %v2903, %v2903
        %v2912 = vunpack.c.l.bf16 %v2705
        %v2913 = vunpack.c.l.bf16 %v2706
        %v2914 = vunpack.c.l.bf16 %v2707
        %v2915 = vunpack.c.l.bf16 %v2708
        %v2916 = vunpack.c.l.bf16 %v2709
        %v2917 = vunpack.c.l.bf16 %v2710
        %v2918 = vunpack.c.l.bf16 %v2711
        %v2919 = vunpack.c.l.bf16 %v2712
        %v2929 = vunpack.c.l.s4 1983009808
        %v2930 = vunpack.c.0.s8 %v2929
        %v2931 = vlaneseq
        %v2932 = vshrl.u32 %v2931, 7
        %v2933 = vsub.s32 %v2930, %v2932
        %v2934 = vrot.slane %v2705, %v2933
        %v2936 = vunpack.c.l.s4 1983009808
        %v2937 = vunpack.c.0.s8 %v2936
        %v2938 = vlaneseq
        %v2939 = vshrl.u32 %v2938, 7
        %v2940 = vsub.s32 %v2937, %v2939
        %v2941 = vrot.slane %v2706, %v2940
        %v2943 = vunpack.c.l.s4 1983009808
        %v2944 = vunpack.c.0.s8 %v2943
        %v2945 = vlaneseq
        %v2946 = vshrl.u32 %v2945, 7
        %v2947 = vsub.s32 %v2944, %v2946
        %v2948 = vrot.slane %v2707, %v2947
        %v2950 = vunpack.c.l.s4 1983009808
        %v2951 = vunpack.c.0.s8 %v2950
        %v2952 = vlaneseq
        %v2953 = vshrl.u32 %v2952, 7
        %v2954 = vsub.s32 %v2951, %v2953
        %v2955 = vrot.slane %v2708, %v2954
        %v2957 = vunpack.c.l.s4 1983009808
        %v2958 = vunpack.c.0.s8 %v2957
        %v2959 = vlaneseq
        %v2960 = vshrl.u32 %v2959, 7
        %v2961 = vsub.s32 %v2958, %v2960
        %v2962 = vrot.slane %v2709, %v2961
        %v2964 = vunpack.c.l.s4 1983009808
        %v2965 = vunpack.c.0.s8 %v2964
        %v2966 = vlaneseq
        %v2967 = vshrl.u32 %v2966, 7
        %v2968 = vsub.s32 %v2965, %v2967
        %v2969 = vrot.slane %v2710, %v2968
        %v2971 = vunpack.c.l.s4 1983009808
        %v2972 = vunpack.c.0.s8 %v2971
        %v2973 = vlaneseq
        %v2974 = vshrl.u32 %v2973, 7
        %v2975 = vsub.s32 %v2972, %v2974
        %v2976 = vrot.slane %v2711, %v2975
        %v2978 = vunpack.c.l.s4 1983009808
        %v2979 = vunpack.c.0.s8 %v2978
        %v2980 = vlaneseq
        %v2981 = vshrl.u32 %v2980, 7
        %v2982 = vsub.s32 %v2979, %v2981
        %v2983 = vrot.slane %v2712, %v2982
        %v2984 = vunpack.c.l.b16 %v2934
        %v2985 = vunpack.c.l.b16 %v2941
        %v2986 = vunpack.c.l.b16 %v2948
        %v2987 = vunpack.c.l.b16 %v2955
        %v2988 = vunpack.c.l.b16 %v2962
        %v2989 = vunpack.c.l.b16 %v2969
        %v2990 = vunpack.c.l.b16 %v2976
        %v2991 = vunpack.c.l.b16 %v2983
        %v2992 = vrot.slane %v2984, 3
        %v2993 = vrot.slane %v2985, 2
        %v2994 = vsel %vm734, %v2993, %v2992
        %v2995 = vrot.slane %v2986, 1
        %v2996 = vsel %vm737, %v2995, %v2994
        %v2997 = vsel %vm740, %v2987, %v2996
        %v2998 = vrot.slane %v2988, 7
        %v2999 = vsel %vm743, %v2998, %v2997
        %v3000 = vrot.slane %v2989, 6
        %v3001 = vsel %vm746, %v3000, %v2999
        %v3002 = vrot.slane %v2990, 5
        %v3003 = vsel %vm749, %v3002, %v3001
        %v3004 = vrot.slane %v2991, 4
        %v3005 = vsel %vm752, %v3004, %v3003
        %v3006 = vpack.c.b16 %v3005, %v3005
        %v3008 = vsel %vm755, %v3006, 0
        %3010 = vmatprep.subr.bf16.mxu0 0
        %3011 = vmatpush1.bf16.msra.mxu0 %v761
        %3012 = vmatprep.subr.bf16.mxu0 0
        %3013 = vmatpush1.bf16.msra.mxu0 0
        %3014 = vmatprep.subr.bf16.mxu0 0
        %3015 = vmatpush1.bf16.msra.mxu0 0
        %3016 = vmatprep.subr.bf16.mxu0 0
        %3017 = vmatpush1.bf16.msra.mxu0 0
        %3018 = vmatprep.subr.bf16.mxu0 0
        %3019 = vmatpush1.bf16.msra.mxu0 0
        %3020 = vmatprep.subr.bf16.mxu0 0
        %3021 = vmatpush1.bf16.msra.mxu0 0
        %3022 = vmatprep.subr.bf16.mxu0 0
        %3023 = vmatpush1.bf16.msra.mxu0 0
        %3024 = vmatprep.subr.bf16.mxu0 0
        %3025 = vmatpush1.bf16.msra.mxu0 0
        %3026 = vmatprep.subr.bf16.mxu0 0
        %3027 = vmatpush1.bf16.msra.mxu0 0
        %3028 = vmatprep.subr.bf16.mxu0 0
        %3029 = vmatpush1.bf16.msra.mxu0 0
        %3030 = vmatprep.subr.bf16.mxu0 0
        %3031 = vmatpush1.bf16.msra.mxu0 0
        %3032 = vmatprep.subr.bf16.mxu0 0
        %3033 = vmatpush1.bf16.msra.mxu0 0
        %3034 = vmatprep.subr.bf16.mxu0 0
        %3035 = vmatpush1.bf16.msra.mxu0 0
        %3036 = vmatprep.subr.bf16.mxu0 0
        %3037 = vmatpush1.bf16.msra.mxu0 0
        %3038 = vmatprep.subr.bf16.mxu0 0
        %3039 = vmatpush1.bf16.msra.mxu0 0
        %3040 = vmatprep.subr.bf16.mxu0 0
        %3041 = vmatpush1.bf16.msra.mxu0 0
        %3042 = vmatprep.mubr.bf16.mxu0 0
        %3043 = vmatmul.mubr.bf16.gmra.mrb[0].mxu0 %v3008
        %v3044 = vpop.f32.mrb[0].mxu0
        %v3045 = vadd.f32 0.0, %v3044
        %v3046 = vpop.f32.mrb[0].mxu0
        %v3047 = vpop.f32.mrb[0].mxu0
        %v3048 = vpop.f32.mrb[0].mxu0
        %3049 = vdwg.mxu0
        %v3050 = vrot.slane %v626, 5
        %v3051 = vrot.slane %v1007, 5
        %v3054 = vmul.f32 %v2912, %v3050
        %v3055 = vmul.f32 %v2913, %v2371
        %v3056 = vmul.f32 %v2914, %v1692
        %v3057 = vmul.f32 %v2915, %v626
        %v3058 = vmul.f32 %v2916, %v3051
        %v3059 = vmul.f32 %v2917, %v2372
        %v3060 = vmul.f32 %v2918, %v1693
        %v3061 = vmul.f32 %v2919, %v1007
        %v3062 = vmul.f32 %v3045, %v627
        %v3064 = vcombine.high %v3062, %v3062
        %v3065 = vrot.slane %v3062, 5
        %v3066 = vrot.slane %v3062, 6
        %v3067 = vrot.slane %v3062, 7
        %v3068 = vrot.slane %v3064, 5
        %v3069 = vrot.slane %v3064, 6
        %v3070 = vrot.slane %v3064, 7
        %v3079 = vadd.f32 %v3054, %v3065
        %v3080 = vadd.f32 %v3055, %v3066
        %v3081 = vadd.f32 %v3056, %v3067
        %v3082 = vadd.f32 %v3057, %v3062
        %v3083 = vadd.f32 %v3058, %v3068
        %v3084 = vadd.f32 %v3059, %v3069
        %v3085 = vadd.f32 %v3060, %v3070
        %v3086 = vadd.f32 %v3061, %v3064
        %v3087 = vpack.c.bf16 %v3079, %v3079
        %v3088 = vpack.c.bf16 %v3080, %v3080
        %v3089 = vpack.c.bf16 %v3081, %v3081
        %v3090 = vpack.c.bf16 %v3082, %v3082
        %v3091 = vpack.c.bf16 %v3083, %v3083
        %v3092 = vpack.c.bf16 %v3084, %v3084
        %v3093 = vpack.c.bf16 %v3085, %v3085
        %v3094 = vpack.c.bf16 %v3086, %v3086
        %v3103 = vunpack.c.l.b16 %v2904
        %v3104 = vunpack.c.l.b16 %v2905
        %v3105 = vunpack.c.l.b16 %v2906
        %v3106 = vunpack.c.l.b16 %v2907
        %v3107 = vunpack.c.l.b16 %v2908
        %v3108 = vunpack.c.l.b16 %v2909
        %v3109 = vunpack.c.l.b16 %v2910
        %v3110 = vunpack.c.l.b16 %v2911
        %v3111 = vrot.slane %v3103, 3
        %v3112 = vrot.slane %v3104, 2
        %v3113 = vsel %vm734, %v3112, %v3111
        %v3114 = vrot.slane %v3105, 1
        %v3115 = vsel %vm737, %v3114, %v3113
        %v3116 = vsel %vm740, %v3106, %v3115
        %v3117 = vrot.slane %v3107, 7
        %v3118 = vsel %vm743, %v3117, %v3116
        %v3119 = vrot.slane %v3108, 6
        %v3120 = vsel %vm746, %v3119, %v3118
        %v3121 = vrot.slane %v3109, 5
        %v3122 = vsel %vm749, %v3121, %v3120
        %v3123 = vrot.slane %v3110, 4
        %v3124 = vsel %vm752, %v3123, %v3122
        %v3125 = vpack.c.b16 %v3124, %v3124
        %v3134 = vunpack.c.l.b16 %v3087
        %v3135 = vunpack.c.l.b16 %v3088
        %v3136 = vunpack.c.l.b16 %v3089
        %v3137 = vunpack.c.l.b16 %v3090
        %v3138 = vunpack.c.l.b16 %v3091
        %v3139 = vunpack.c.l.b16 %v3092
        %v3140 = vunpack.c.l.b16 %v3093
        %v3141 = vunpack.c.l.b16 %v3094
        %v3142 = vrot.slane %v3134, 3
        %v3143 = vrot.slane %v3135, 2
        %v3144 = vsel %vm734, %v3143, %v3142
        %v3145 = vrot.slane %v3136, 1
        %v3146 = vsel %vm737, %v3145, %v3144
        %v3147 = vsel %vm740, %v3137, %v3146
        %v3148 = vrot.slane %v3138, 7
        %v3149 = vsel %vm743, %v3148, %v3147
        %v3150 = vrot.slane %v3139, 6
        %v3151 = vsel %vm746, %v3150, %v3149
        %v3152 = vrot.slane %v3140, 5
        %v3153 = vsel %vm749, %v3152, %v3151
        %v3154 = vrot.slane %v3141, 4
        %v3155 = vsel %vm752, %v3154, %v3153
        %v3156 = vpack.c.b16 %v3155, %v3155
        %v3158 = vsel %vm755, %v3125, 0
        %v3161 = vsel %vm755, %v3156, 0
        %3163 = vmatprep.subr.bf16.mxu0 0
        %3164 = vmatpush1.bf16.xpose.msra.mxu0 %v3161
        %3165 = vmatprep.subr.bf16.mxu0 0
        %3166 = vmatpush1.bf16.xpose.msra.mxu0 0
        %3167 = vmatprep.subr.bf16.mxu0 0
        %3168 = vmatpush1.bf16.xpose.msra.mxu0 0
        %3169 = vmatprep.subr.bf16.mxu0 0
        %3170 = vmatpush1.bf16.xpose.msra.mxu0 0
        %3171 = vmatprep.subr.bf16.mxu0 0
        %3172 = vmatpush1.bf16.xpose.msra.mxu0 0
        %3173 = vmatprep.subr.bf16.mxu0 0
        %3174 = vmatpush1.bf16.xpose.msra.mxu0 0
        %3175 = vmatprep.subr.bf16.mxu0 0
        %3176 = vmatpush1.bf16.xpose.msra.mxu0 0
        %3177 = vmatprep.subr.bf16.mxu0 0
        %3178 = vmatpush1.bf16.xpose.msra.mxu0 0
        %3179 = vmatprep.subr.bf16.mxu0 0
        %3180 = vmatpush1.bf16.xpose.msra.mxu0 0
        %3181 = vmatprep.subr.bf16.mxu0 0
        %3182 = vmatpush1.bf16.xpose.msra.mxu0 0
        %3183 = vmatprep.subr.bf16.mxu0 0
        %3184 = vmatpush1.bf16.xpose.msra.mxu0 0
        %3185 = vmatprep.subr.bf16.mxu0 0
        %3186 = vmatpush1.bf16.xpose.msra.mxu0 0
        %3187 = vmatprep.subr.bf16.mxu0 0
        %3188 = vmatpush1.bf16.xpose.msra.mxu0 0
        %3189 = vmatprep.subr.bf16.mxu0 0
        %3190 = vmatpush1.bf16.xpose.msra.mxu0 0
        %3191 = vmatprep.subr.bf16.mxu0 0
        %3192 = vmatpush1.bf16.xpose.msra.mxu0 0
        %3193 = vmatprep.subr.bf16.mxu0 0
        %3194 = vmatpush1.bf16.xpose.msra.mxu0 0
        %3195 = vmatprep.mubr.bf16.mxu0 0
        %3196 = vmatmul.mubr.bf16.gmra.mrb[0].mxu0 %v3158
        %v3197 = vpop.f32.mrb[0].mxu0
        %v3198 = vadd.f32 0.0, %v3197
        %v3199 = vpop.f32.mrb[0].mxu0
        %v3200 = vpop.f32.mrb[0].mxu0
        %v3201 = vpop.f32.mrb[0].mxu0
        %3202 = vdwg.mxu0
        %v3203 = vld [vmem:[#allocation2] sm:$0xff]
        %v3204 = vld [vmem:[#allocation3] sm:$0xff]
        %v3205 = vsel %vm755, %v3198, -inf
        %3206 = vmax.xlane.f32.xlu0 %v3205
        %v3207 = vpop.xlane.xlu0 %3206
        %v3208 = vmax.f32 %v3203, %v3207
        %v3209 = vsub.f32 %v3203, %v3208
        %v3210 = vmul.f32 %v3209, 1.442695
        %v3211 = vpow.pop %v3210
        %3213 = vset.pattern.permute.xlu0 3
        %3214 = vperm.xlu0 %3213, %v3208
        %v3215 = vpop.permute.xlu0 %3214
        %v3217 = vsub.f32 %v3198, %v3215
        %v3218 = vmul.f32 %v3217, 1.442695
        %v3219 = vpow.pop %v3218
        %v3220 = vmul.f32 %v3211, %v3204
        %v3221 = vsel %vm755, %v3219, 0.0
        %3222 = vadd.xlane.f32.xlu0 %v3221
        %v3223 = vpop.xlane.xlu0 %3222
        %v3224 = vadd.f32 %v3220, %v3223
        %vm3225 = vcmask 31768
        %3226 = vst.msk [vmem:[#allocation3] sm:$0xff] %vm3225, %v3224
        %v3227 = vpack.c.bf16 %v3219, %v3219
        %v3237 = vunpack.c.l.s4 1983009808
        %v3238 = vunpack.c.0.s8 %v3237
        %v3239 = vlaneseq
        %v3240 = vshrl.u32 %v3239, 7
        %v3241 = vsub.s32 %v3238, %v3240
        %v3242 = vrot.slane %v2713, %v3241
        %v3244 = vunpack.c.l.s4 1983009808
        %v3245 = vunpack.c.0.s8 %v3244
        %v3246 = vlaneseq
        %v3247 = vshrl.u32 %v3246, 7
        %v3248 = vsub.s32 %v3245, %v3247
        %v3249 = vrot.slane %v2714, %v3248
        %v3251 = vunpack.c.l.s4 1983009808
        %v3252 = vunpack.c.0.s8 %v3251
        %v3253 = vlaneseq
        %v3254 = vshrl.u32 %v3253, 7
        %v3255 = vsub.s32 %v3252, %v3254
        %v3256 = vrot.slane %v2715, %v3255
        %v3258 = vunpack.c.l.s4 1983009808
        %v3259 = vunpack.c.0.s8 %v3258
        %v3260 = vlaneseq
        %v3261 = vshrl.u32 %v3260, 7
        %v3262 = vsub.s32 %v3259, %v3261
        %v3263 = vrot.slane %v2716, %v3262
        %v3265 = vunpack.c.l.s4 1983009808
        %v3266 = vunpack.c.0.s8 %v3265
        %v3267 = vlaneseq
        %v3268 = vshrl.u32 %v3267, 7
        %v3269 = vsub.s32 %v3266, %v3268
        %v3270 = vrot.slane %v2717, %v3269
        %v3272 = vunpack.c.l.s4 1983009808
        %v3273 = vunpack.c.0.s8 %v3272
        %v3274 = vlaneseq
        %v3275 = vshrl.u32 %v3274, 7
        %v3276 = vsub.s32 %v3273, %v3275
        %v3277 = vrot.slane %v2718, %v3276
        %v3279 = vunpack.c.l.s4 1983009808
        %v3280 = vunpack.c.0.s8 %v3279
        %v3281 = vlaneseq
        %v3282 = vshrl.u32 %v3281, 7
        %v3283 = vsub.s32 %v3280, %v3282
        %v3284 = vrot.slane %v2719, %v3283
        %v3286 = vunpack.c.l.s4 1983009808
        %v3287 = vunpack.c.0.s8 %v3286
        %v3288 = vlaneseq
        %v3289 = vshrl.u32 %v3288, 7
        %v3290 = vsub.s32 %v3287, %v3289
        %v3291 = vrot.slane %v2720, %v3290
        %v3292 = vunpack.c.l.b16 %v3242
        %v3293 = vunpack.c.l.b16 %v3249
        %v3294 = vunpack.c.l.b16 %v3256
        %v3295 = vunpack.c.l.b16 %v3263
        %v3296 = vunpack.c.l.b16 %v3270
        %v3297 = vunpack.c.l.b16 %v3277
        %v3298 = vunpack.c.l.b16 %v3284
        %v3299 = vunpack.c.l.b16 %v3291
        %v3300 = vrot.slane %v3292, 3
        %v3301 = vrot.slane %v3293, 2
        %v3302 = vsel %vm734, %v3301, %v3300
        %v3303 = vrot.slane %v3294, 1
        %v3304 = vsel %vm737, %v3303, %v3302
        %v3305 = vsel %vm740, %v3295, %v3304
        %v3306 = vrot.slane %v3296, 7
        %v3307 = vsel %vm743, %v3306, %v3305
        %v3308 = vrot.slane %v3297, 6
        %v3309 = vsel %vm746, %v3308, %v3307
        %v3310 = vrot.slane %v3298, 5
        %v3311 = vsel %vm749, %v3310, %v3309
        %v3312 = vrot.slane %v3299, 4
        %v3313 = vsel %vm752, %v3312, %v3311
        %v3314 = vpack.c.b16 %v3313, %v3313
        %v3316 = vsel %vm755, %v3227, 0
        %v3319 = vsel %vm759, %v3314, 0
        %3321 = vmatprep.subr.bf16.mxu0 0
        %3322 = vmatpush1.bf16.msra.mxu0 %v3319
        %3323 = vmatprep.subr.bf16.mxu0 0
        %3324 = vmatpush1.bf16.msra.mxu0 0
        %3325 = vmatprep.subr.bf16.mxu0 0
        %3326 = vmatpush1.bf16.msra.mxu0 0
        %3327 = vmatprep.subr.bf16.mxu0 0
        %3328 = vmatpush1.bf16.msra.mxu0 0
        %3329 = vmatprep.subr.bf16.mxu0 0
        %3330 = vmatpush1.bf16.msra.mxu0 0
        %3331 = vmatprep.subr.bf16.mxu0 0
        %3332 = vmatpush1.bf16.msra.mxu0 0
        %3333 = vmatprep.subr.bf16.mxu0 0
        %3334 = vmatpush1.bf16.msra.mxu0 0
        %3335 = vmatprep.subr.bf16.mxu0 0
        %3336 = vmatpush1.bf16.msra.mxu0 0
        %3337 = vmatprep.subr.bf16.mxu0 0
        %3338 = vmatpush1.bf16.msra.mxu0 0
        %3339 = vmatprep.subr.bf16.mxu0 0
        %3340 = vmatpush1.bf16.msra.mxu0 0
        %3341 = vmatprep.subr.bf16.mxu0 0
        %3342 = vmatpush1.bf16.msra.mxu0 0
        %3343 = vmatprep.subr.bf16.mxu0 0
        %3344 = vmatpush1.bf16.msra.mxu0 0
        %3345 = vmatprep.subr.bf16.mxu0 0
        %3346 = vmatpush1.bf16.msra.mxu0 0
        %3347 = vmatprep.subr.bf16.mxu0 0
        %3348 = vmatpush1.bf16.msra.mxu0 0
        %3349 = vmatprep.subr.bf16.mxu0 0
        %3350 = vmatpush1.bf16.msra.mxu0 0
        %3351 = vmatprep.subr.bf16.mxu0 0
        %3352 = vmatpush1.bf16.msra.mxu0 0
        %3353 = vmatprep.mubr.bf16.mxu0 0
        %3354 = vmatmul.mubr.bf16.gmra.mrb[0].mxu0 %v3316
        %v3355 = vpop.f32.mrb[0].mxu0
        %v3356 = vadd.f32 0.0, %v3355
        %v3357 = vpop.f32.mrb[0].mxu0
        %v3358 = vpop.f32.mrb[0].mxu0
        %v3359 = vpop.f32.mrb[0].mxu0
        %3360 = vdwg.mxu0
        %v3361 = vld [vmem:[#allocation4] sm:$0xff]
        %3363 = vset.pattern.permute.xlu0 3
        %3364 = vperm.xlu0 %3363, %v3211
        %v3365 = vpop.permute.xlu0 %3364
        %v3367 = vmul.f32 %v3365, %v3361
        %3369 = vrot.lane.b32.xlu0 %v3356, 24
        %v3370 = vpop.permute.xlu0 %3369
        %v3372 = vadd.f32 %v3367, %v3370
        %vm3373 = vcmask 261312
        %3374 = vst.msk [vmem:[#allocation4] sm:$0xff] %vm3373, %v3372
        %3375 = vst.msk [vmem:[#allocation2] sm:$0xff] %vm3225, %v3208
        // Predicated region
        $region180: #{_lambda_.4} parent=162 // pred_check
          %p3376 = pneg %p615
        $region181: #{_lambda_.4} parent=162 // pred_check_branch
          %3378 = sbr.rel (%p3376) target = $region183
        $region182: #{_lambda_.4} parent=162 // pred_region
          %v3379 = vld [vmem:[#allocation3] sm:$0xff]
          %v3380 = vrcp.pop %v3379
          %v3381 = vld [vmem:[#allocation4] sm:$0xff]
          %3383 = vset.pattern.permute.xlu0 0
          %3384 = vperm.xlu0 %3383, %v3380
          %v3385 = vpop.permute.xlu0 %3384
          %v3387 = vmul.f32 %v3381, %v3385
          %3388 = vset.pattern.permute.xlu0 1
          %3389 = vperm.xlu0 %3388, %v3380
          %v3390 = vpop.permute.xlu0 %3389
          %v3392 = vmul.f32 %v3381, %v3390
          %3393 = vset.pattern.permute.xlu0 2
          %3394 = vperm.xlu0 %3393, %v3380
          %v3395 = vpop.permute.xlu0 %3394
          %v3397 = vmul.f32 %v3381, %v3395
          %3398 = vset.pattern.permute.xlu0 3
          %3399 = vperm.xlu0 %3398, %v3380
          %v3400 = vpop.permute.xlu0 %3399
          %v3402 = vmul.f32 %v3381, %v3400
          %v3403 = vsel %vm755, %v3387, %v3392
          %vm3404 = vcmask 130048
          %v3405 = vsel %vm3404, %v3403, %v3397
          %vm3406 = vcmask 195584
          %v3407 = vsel %vm3406, %v3405, %v3402
          %v3408 = vpack.c.bf16 %v3407, %v3407
          %vm3409 = vcmask 257024
          %3410 = vst.msk [vmem:[%s613] sm:$0xf] %vm3409, %v3408
        $region183: #{_lambda_.4} parent=162 // pred_fallthru
          _
        %p3411 = scmp.lt.s32.totalorder %s23, 1
        %s3412 = scalar_select %p3411, %s23, 1
        %s3413 = smul.addr %s3412, 4
        %s3414 = scalar_lea.vmem %s8, %s3413
        // Predicated region
        $region184: #{_lambda_.4} parent=162 // pred_check
          %p3415 = pneg %p246
        $region185: #{_lambda_.4} parent=162 // pred_check_branch
          %3417 = sbr.rel (%p3415) target = $region187
        $region186: #{_lambda_.4} parent=162 // pred_region
          _
        $region187: #{_lambda_.4} parent=162 // pred_fallthru
          _
      $region163: #{_lambda_.4} parent=5 // pred_fallthru
        _
      %p3418 = scmp.le.s32.totalorder 2, %s14
      // Predicated region
      $region188: #{_lambda_.4} parent=5 // pred_check
        %p3419 = pneg %p3418
      $region189: #{_lambda_.4} parent=5 // pred_check_branch
        %3421 = sbr.rel (%p3419) target = $region191
      $region190: #{_lambda_.4} parent=5 // pred_region
        %s3422 = ssub.s32 %s14, 2
        // Predicated region
        $region192: #{_lambda_.4} parent=190 // pred_check
          %p3423 = pneg %p252
        $region193: #{_lambda_.4} parent=190 // pred_check_branch
          %3425 = sbr.rel (%p3423) target = $region195
        $region194: #{_lambda_.4} parent=190 // pred_region
          %p3426 = scmp.lt.s32.totalorder %s25, 1
          %s3427 = scalar_select %p3426, %s25, 1
          %s3428 = smul.addr %s3427, 4
          %s3429 = scalar_lea.vmem %s8, %s3428
        $region195: #{_lambda_.4} parent=190 // pred_fallthru
          _
      $region191: #{_lambda_.4} parent=5 // pred_fallthru
        _
    $region6: #{_lambda_.4} parent=1 // loop_footer
      %s18 = sadd.s32 1, %s14
    $region7: #{_lambda_.4} parent=1 // loop_footer_branch
      %13 = sbr.rel target = $region3
    $region8: #{_lambda_.4} parent=1 // loop_exit
      _

</llo_original>
